<compile_context>
chip_gen: v5e
topology: v5e:2x2
jax: 0.10.0
libtpu: 0.0.40
codegen_flags: <defaults>
</compile_context>

<pallas_src>
import math
import functools

import numpy as np
import jax
import jax.numpy as jnp
from jax.experimental import pallas as pl
from jax.experimental.pallas import tpu as pltpu


# Slab orders shared by host weight prep and the kernel.
# ('e', m) -> even phase shifted by m (value at position l is x_phase[(l+m)]),
# ('o', m) -> odd phase.  conv1 shifts are circular; deconv/mix shifts zero-fill.
CONV1_SLABS = (('e', -3), ('e', -2), ('e', -1), ('e', 0), ('e', 1), ('e', 2), ('e', 3),
               ('o', -2), ('o', -1), ('o', 0), ('o', 1))
DECONV_SHIFTS = (2, 1, 0, -1, -2)                      # tap t uses h1[l + 2 - t]
MIX_SLABS = (('e', 0), ('e', 1), ('o', -1), ('o', 0))
PARAMS_PER_BLOCK = 10                                  # W1 b1 g1 be1 Wd bd g4 be4 Wm bm


def _round_up(n, m):
    return ((n + m - 1) // m) * m


# ----------------------------------------------------------------------------
# The single fused kernel: whole network, activations resident in VMEM.
# ----------------------------------------------------------------------------
def _net_kernel(*refs, n_blocks, residuals, B, Lh):
    f32 = jnp.float32
    BL = B * Lh
    n_in = 2 + PARAMS_PER_BLOCK * n_blocks
    x_e_ref, x_o_ref = refs[0], refs[1]
    out_e_ref, out_o_ref = refs[n_in], refs[n_in + 1]

    def cshift(x, m):
        # per-batch circular shift along the folded lane axis: y[:, b, l] = x[:, b, (l+m) % Lh]
        mm = m % Lh
        if mm == 0:
            return x
        parts = []
        for b in range(B):
            seg = x[:, b * Lh:(b + 1) * Lh]
            parts.append(jnp.concatenate([seg[:, mm:], seg[:, :mm]], axis=1))
        return jnp.concatenate(parts, axis=1)

    def zshift(x, m):
        # per-batch zero-fill shift: y[:, b, l] = x[:, b, l+m] if 0 <= l+m < Lh else 0
        if m == 0:
            return x
        c = x.shape[0]
        parts = []
        for b in range(B):
            seg = x[:, b * Lh:(b + 1) * Lh]
            if m > 0:
                parts.append(jnp.concatenate(
                    [seg[:, m:], jnp.zeros((c, m), f32)], axis=1))
            else:
                parts.append(jnp.concatenate(
                    [jnp.zeros((c, -m), f32), seg[:, :Lh + m]], axis=1))
        return jnp.concatenate(parts, axis=1)

    def bn(parts, inv_n, g_ref, be_ref):
        # Training-mode BatchNorm1d over batch*length (both phases when len(parts)==2),
        # two-pass (mean, then centered variance) for numerical fidelity.
        m = sum(jnp.sum(p, axis=1, keepdims=True) for p in parts) * inv_n
        v = sum(jnp.sum((p - m) * (p - m), axis=1, keepdims=True) for p in parts) * inv_n
        inv = jax.lax.rsqrt(v + 1e-5)
        return tuple((p - m) * inv * g_ref[...] + be_ref[...] for p in parts)

    h_e = x_e_ref[...]
    h_o = x_o_ref[...]

    for blk in range(n_blocks):
        base = 2 + PARAMS_PER_BLOCK * blk
        (w1_ref, b1_ref, g1_ref, be1_ref, wd_ref, bd_ref, g4_ref, be4_ref,
         wm_ref, bm_ref) = refs[base:base + PARAMS_PER_BLOCK]

        # ---- conv1_1 + conv1_2 (stride 2, circular pad, groups) + concat + bias, one matmul
        slab = jnp.concatenate(
            [cshift(h_e if ph == 'e' else h_o, m) for ph, m in CONV1_SLABS], axis=0)
        h1 = jnp.dot(w1_ref[...], slab, preferred_element_type=f32) + b1_ref[...]
        h1 = jnp.maximum(h1, 0.0)
        (h1,) = bn((h1,), 1.0 / BL, g1_ref, be1_ref)

        # ---- ConvTranspose1d (k=10, stride 2, pad 4): even+odd output phases, one matmul
        dslab = jnp.concatenate([zshift(h1, s) for s in DECONV_SHIFTS], axis=0)
        y = jnp.dot(wd_ref[...], dslab, preferred_element_type=f32)
        cd = wd_ref.shape[0] // 2
        y_e = jnp.maximum(y[:cd] + bd_ref[...], 0.0)
        y_o = jnp.maximum(y[cd:] + bd_ref[...], 0.0)
        y_e, y_o = bn((y_e, y_o), 1.0 / (2 * BL), g4_ref, be4_ref)

        # ---- mix conv (k=3, stride 1, zero pad): even+odd output phases, one matmul
        mslab = jnp.concatenate(
            [zshift(y_e if ph == 'e' else y_o, m) for ph, m in MIX_SLABS], axis=0)
        z = jnp.dot(wm_ref[...], mslab, preferred_element_type=f32)
        co = wm_ref.shape[0] // 2
        z_e = z[:co] + bm_ref[...]
        z_o = z[co:] + bm_ref[...]
        if residuals[blk]:
            z_e = z_e + h_e
            z_o = z_o + h_o
        h_e, h_o = z_e, z_o

    out_e_ref[...] = h_e
    out_o_ref[...] = h_o


# ----------------------------------------------------------------------------
# Host-side one-time weight preparation (numpy): dense, group-block-diagonal,
# tap-stacked weights matching the kernel slab orders; channels padded to 8.
# ----------------------------------------------------------------------------
def prepare_block(p, rep, cin, cout):
    f = lambda a: np.asarray(a, np.float32)
    w11, b11 = f(p["w11"]), f(p["b11"])
    w12, b12 = f(p["w12"]), f(p["b12"])
    g1, be1 = f(p["g1"]), f(p["be1"])
    wd, bd = f(p["wd"]), f(p["bd"])
    g4, be4 = f(p["g4"]), f(p["be4"])
    wm, bm = f(p["wm"]), f(p["bm"])

    c1 = w11.shape[0]                 # conv1_out_ch * rep
    cin_g = cin // rep
    c1_g = c1 // rep
    cd = 2 * c1                       # deconv_ch
    cd_g = cd // rep
    cout_g = cout // rep

    cin_p = _round_up(cin, 8)
    cd_p = _round_up(cd, 8)
    cout_p = _round_up(cout, 8)

    # conv1_1 + conv1_2 fused tap weight; rows already in PyTorch concat order.
    sidx = {s: i for i, s in enumerate(CONV1_SLABS)}
    W1 = np.zeros((cd_p, len(CONV1_SLABS) * cin_p), np.float32)
    b1 = np.zeros((cd_p,), np.float32)
    for co in range(c1):
        g, j = divmod(co, c1_g)
        r1 = g * 2 * c1_g + j          # conv1_1 row after group-wise concat
        r2 = r1 + c1_g                 # conv1_2 row
        b1[r1], b1[r2] = b11[co], b12[co]
        for k in range(7):
            off = k - 3                                        # conv1_1: dilation 1
            key = ('e', off // 2) if off % 2 == 0 else ('o', (off - 1) // 2)
            c0 = sidx[key] * cin_p + g * cin_g
            W1[r1, c0:c0 + cin_g] += w11[co, :, k]
            c0 = sidx[('e', k - 3)] * cin_p + g * cin_g        # conv1_2: dilation 2 -> even
            W1[r2, c0:c0 + cin_g] += w12[co, :, k]

    # ConvTranspose1d: even phase uses taps k=2t, odd phase k=2t+1, input shift 2-t.
    Wd = np.zeros((2 * cd_p, len(DECONV_SHIFTS) * cd_p), np.float32)
    for g in range(rep):
        for jo in range(cd_g):
            co = g * cd_g + jo
            for cig in range(cd_g):
                ci = g * cd_g + cig
                for t in range(len(DECONV_SHIFTS)):
                    Wd[co, t * cd_p + ci] = wd[ci, jo, 2 * t]
                    Wd[cd_p + co, t * cd_p + ci] = wd[ci, jo, 2 * t + 1]

    # mix conv: even outputs use (h_o[-1], h_e[0], h_o[0]); odd use (h_e[0], h_o[0], h_e[+1]).
    midx = {s: i for i, s in enumerate(MIX_SLABS)}
    Wm = np.zeros((2 * cout_p, len(MIX_SLABS) * cd_p), np.float32)
    for co in range(cout):
        g = co // cout_g
        cbase = g * cd_g
        for k, sl in ((0, ('o', -1)), (1, ('e', 0)), (2, ('o', 0))):
            c0 = midx[sl] * cd_p + cbase
            Wm[co, c0:c0 + cd_g] += wm[co, :, k]
        for k, sl in ((0, ('e', 0)), (1, ('o', 0)), (2, ('e', 1))):
            c0 = midx[sl] * cd_p + cbase
            Wm[cout_p + co, c0:c0 + cd_g] += wm[co, :, k]

    def col(v, n):
        out = np.zeros((n, 1), np.float32)
        out[:len(v), 0] = v
        return jnp.asarray(out)

    return [jnp.asarray(W1), col(b1, cd_p), col(g1, cd_p), col(be1, cd_p),
            jnp.asarray(Wd), col(bd, cd_p), col(g4, cd_p), col(be4, cd_p),
            jnp.asarray(Wm), col(bm, cout_p)]


def prepare_net(params, rep, ch):
    blocks = [prepare_block(params["starter"], rep, 2 * rep, ch * rep)]
    for p in params["evo"]:
        blocks.append(prepare_block(p, rep, ch * rep, ch * rep))
    blocks.append(prepare_block(params["end"], rep, ch * rep, 2 * rep))
    residuals = (False,) + (True,) * len(params["evo"]) + (False,)
    return blocks, residuals, 2 * rep


# ----------------------------------------------------------------------------
# Network forward: one pallas_call for the whole net.
# ----------------------------------------------------------------------------
def net_forward(flat_params, x, *, n_blocks, residuals, cout):
    B, c_in, L = x.shape
    assert L % 2 == 0, "even sequence length required (as the PyTorch Evo residual implies)"
    Lh = L // 2
    cin_p = flat_params[0].shape[1] // len(CONV1_SLABS)
    cout_p = flat_params[-2].shape[0] // 2          # last block's Wm rows / 2

    # Host-side phase split + channel padding (the only host relayouts in the net).
    xt = jnp.transpose(x, (1, 0, 2))                # (C, B, L)
    x_e = xt[:, :, 0::2].reshape(c_in, B * Lh)
    x_o = xt[:, :, 1::2].reshape(c_in, B * Lh)
    pad = ((0, cin_p - c_in), (0, 0))
    x_e = jnp.pad(x_e, pad)
    x_o = jnp.pad(x_o, pad)

    kern = functools.partial(_net_kernel, n_blocks=n_blocks,
                             residuals=residuals, B=B, Lh=Lh)
    out_e, out_o = pl.pallas_call(
        kern,
        out_shape=(jax.ShapeDtypeStruct((cout_p, B * Lh), jnp.float32),
                   jax.ShapeDtypeStruct((cout_p, B * Lh), jnp.float32)),
        compiler_params=pltpu.CompilerParams(vmem_limit_bytes=32 * 1024 * 1024),
    )(x_e, x_o, *flat_params)

    # Trim channel padding and re-interleave the even/odd phases.
    oe = out_e[:cout].reshape(cout, B, Lh)
    oo = out_o[:cout].reshape(cout, B, Lh)
    y = jnp.stack([oe, oo], axis=-1).reshape(cout, B, L)
    return jnp.transpose(y, (1, 0, 2))


# ----------------------------------------------------------------------------
# Deterministic parameter init (shapes follow the nn.Module __init__).
# ----------------------------------------------------------------------------
def _init_block(key, in_g, c1out, rep, out_g):
    ks = jax.random.split(key, 8)
    deconv_ch = 2 * c1out * rep
    d_g = deconv_ch // rep

    def rn(k, shape):
        return 0.1 * jax.random.normal(k, shape, jnp.float32)

    return dict(
        w11=rn(ks[0], (c1out * rep, in_g, 7)),  b11=rn(ks[1], (c1out * rep,)),
        w12=rn(ks[2], (c1out * rep, in_g, 7)),  b12=rn(ks[3], (c1out * rep,)),
        g1=jnp.ones((deconv_ch,), jnp.float32), be1=jnp.zeros((deconv_ch,), jnp.float32),
        wd=rn(ks[4], (deconv_ch, d_g, 10)),     bd=rn(ks[5], (deconv_ch,)),
        g4=jnp.ones((deconv_ch,), jnp.float32), be4=jnp.zeros((deconv_ch,), jnp.float32),
        wm=rn(ks[6], (out_g * rep, d_g, 3)),    bm=rn(ks[7], (out_g * rep,)),
    )


def init_net_params(key, num_blocks, factor, ch, rep):
    ks = jax.random.split(key, num_blocks + 1)
    starter = _init_block(ks[0], 2, int(math.floor(9 * factor)), rep, ch)
    evo = [_init_block(ks[i + 1], ch, int(math.floor(8 * factor)), rep, ch)
           for i in range(num_blocks - 1)]
    end = _init_block(ks[num_blocks], ch, int(math.floor(8 * factor)), rep, 2)
    return dict(starter=starter, evo=evo, end=end)


# ----------------------------------------------------------------------------
if __name__ == "__main__":
    num_blocks, factor, ch, rep = 2, 1.0, 6, 2     # small but faithful configuration
    B, N = 2, 16                                   # input: (B, 2*rep, N), N even

    key = jax.random.PRNGKey(0)
    pkey, xkey = jax.random.split(key)
    params = init_net_params(pkey, num_blocks, factor, ch, rep)
    blocks, residuals, cout = prepare_net(params, rep, ch)
    flat_params = [a for blk in blocks for a in blk]

    x = jax.random.normal(xkey, (B, 2 * rep, N), jnp.float32)

    fwd = jax.jit(functools.partial(net_forward, n_blocks=len(blocks),
                                    residuals=residuals, cout=cout))
    y = fwd(flat_params, x)
    jax.block_until_ready(y)
    assert y.shape == (B, 2 * rep, N), y.shape
    print("KERNEL_OK")
</pallas_src>

<mosaic_0001>
module attributes {stable_mosaic.version = 11 : i64} {
  func.func @_net_kernel(%arg0: memref<8x16xf32, #tpu.memory_space<vmem>>, %arg1: memref<8x16xf32, #tpu.memory_space<vmem>>, %arg2: memref<40x88xf32, #tpu.memory_space<vmem>>, %arg3: memref<40x1xf32, #tpu.memory_space<vmem>>, %arg4: memref<40x1xf32, #tpu.memory_space<vmem>>, %arg5: memref<40x1xf32, #tpu.memory_space<vmem>>, %arg6: memref<80x200xf32, #tpu.memory_space<vmem>>, %arg7: memref<40x1xf32, #tpu.memory_space<vmem>>, %arg8: memref<40x1xf32, #tpu.memory_space<vmem>>, %arg9: memref<40x1xf32, #tpu.memory_space<vmem>>, %arg10: memref<32x160xf32, #tpu.memory_space<vmem>>, %arg11: memref<16x1xf32, #tpu.memory_space<vmem>>, %arg12: memref<32x176xf32, #tpu.memory_space<vmem>>, %arg13: memref<32x1xf32, #tpu.memory_space<vmem>>, %arg14: memref<32x1xf32, #tpu.memory_space<vmem>>, %arg15: memref<32x1xf32, #tpu.memory_space<vmem>>, %arg16: memref<64x160xf32, #tpu.memory_space<vmem>>, %arg17: memref<32x1xf32, #tpu.memory_space<vmem>>, %arg18: memref<32x1xf32, #tpu.memory_space<vmem>>, %arg19: memref<32x1xf32, #tpu.memory_space<vmem>>, %arg20: memref<32x128xf32, #tpu.memory_space<vmem>>, %arg21: memref<16x1xf32, #tpu.memory_space<vmem>>, %arg22: memref<32x176xf32, #tpu.memory_space<vmem>>, %arg23: memref<32x1xf32, #tpu.memory_space<vmem>>, %arg24: memref<32x1xf32, #tpu.memory_space<vmem>>, %arg25: memref<32x1xf32, #tpu.memory_space<vmem>>, %arg26: memref<64x160xf32, #tpu.memory_space<vmem>>, %arg27: memref<32x1xf32, #tpu.memory_space<vmem>>, %arg28: memref<32x1xf32, #tpu.memory_space<vmem>>, %arg29: memref<32x1xf32, #tpu.memory_space<vmem>>, %arg30: memref<16x128xf32, #tpu.memory_space<vmem>>, %arg31: memref<8x1xf32, #tpu.memory_space<vmem>>, %arg32: memref<8x16xf32, #tpu.memory_space<vmem>>, %arg33: memref<8x16xf32, #tpu.memory_space<vmem>>) attributes {dimension_semantics = [], scalar_prefetch = 0 : i64, scratch_operands = 0 : i64, tpu.core_type = #tpu.core_type<tc>} {
    %c0 = arith.constant 0 : index
    %c0_0 = arith.constant 0 : index
    %0 = vector.load %arg0[%c0, %c0_0] : memref<8x16xf32, #tpu.memory_space<vmem>>, vector<8x16xf32>
    %c0_1 = arith.constant 0 : index
    %c0_2 = arith.constant 0 : index
    %1 = vector.load %arg1[%c0_1, %c0_2] : memref<8x16xf32, #tpu.memory_space<vmem>>, vector<8x16xf32>
    %2 = vector.extract_strided_slice %0 {offsets = [0, 0], sizes = [8, 8], strides = [1, 1]} : vector<8x16xf32> to vector<8x8xf32>
    %3 = vector.extract_strided_slice %2 {offsets = [0, 5], sizes = [8, 3], strides = [1, 1]} : vector<8x8xf32> to vector<8x3xf32>
    %4 = vector.extract_strided_slice %2 {offsets = [0, 0], sizes = [8, 5], strides = [1, 1]} : vector<8x8xf32> to vector<8x5xf32>
    %5 = tpu.concatenate %3, %4 in 1 : vector<8x3xf32>, vector<8x5xf32> -> vector<8x8xf32>
    %6 = vector.extract_strided_slice %0 {offsets = [0, 8], sizes = [8, 8], strides = [1, 1]} : vector<8x16xf32> to vector<8x8xf32>
    %7 = vector.extract_strided_slice %6 {offsets = [0, 5], sizes = [8, 3], strides = [1, 1]} : vector<8x8xf32> to vector<8x3xf32>
    %8 = vector.extract_strided_slice %6 {offsets = [0, 0], sizes = [8, 5], strides = [1, 1]} : vector<8x8xf32> to vector<8x5xf32>
    %9 = tpu.concatenate %7, %8 in 1 : vector<8x3xf32>, vector<8x5xf32> -> vector<8x8xf32>
    %10 = tpu.concatenate %5, %9 in 1 : vector<8x8xf32>, vector<8x8xf32> -> vector<8x16xf32>
    %11 = vector.extract_strided_slice %0 {offsets = [0, 0], sizes = [8, 8], strides = [1, 1]} : vector<8x16xf32> to vector<8x8xf32>
    %12 = vector.extract_strided_slice %11 {offsets = [0, 6], sizes = [8, 2], strides = [1, 1]} : vector<8x8xf32> to vector<8x2xf32>
    %13 = vector.extract_strided_slice %11 {offsets = [0, 0], sizes = [8, 6], strides = [1, 1]} : vector<8x8xf32> to vector<8x6xf32>
    %14 = tpu.concatenate %12, %13 in 1 : vector<8x2xf32>, vector<8x6xf32> -> vector<8x8xf32>
    %15 = vector.extract_strided_slice %0 {offsets = [0, 8], sizes = [8, 8], strides = [1, 1]} : vector<8x16xf32> to vector<8x8xf32>
    %16 = vector.extract_strided_slice %15 {offsets = [0, 6], sizes = [8, 2], strides = [1, 1]} : vector<8x8xf32> to vector<8x2xf32>
    %17 = vector.extract_strided_slice %15 {offsets = [0, 0], sizes = [8, 6], strides = [1, 1]} : vector<8x8xf32> to vector<8x6xf32>
    %18 = tpu.concatenate %16, %17 in 1 : vector<8x2xf32>, vector<8x6xf32> -> vector<8x8xf32>
    %19 = tpu.concatenate %14, %18 in 1 : vector<8x8xf32>, vector<8x8xf32> -> vector<8x16xf32>
    %20 = vector.extract_strided_slice %0 {offsets = [0, 0], sizes = [8, 8], strides = [1, 1]} : vector<8x16xf32> to vector<8x8xf32>
    %21 = vector.extract_strided_slice %20 {offsets = [0, 7], sizes = [8, 1], strides = [1, 1]} : vector<8x8xf32> to vector<8x1xf32>
    %22 = vector.extract_strided_slice %20 {offsets = [0, 0], sizes = [8, 7], strides = [1, 1]} : vector<8x8xf32> to vector<8x7xf32>
    %23 = tpu.concatenate %21, %22 in 1 : vector<8x1xf32>, vector<8x7xf32> -> vector<8x8xf32>
    %24 = vector.extract_strided_slice %0 {offsets = [0, 8], sizes = [8, 8], strides = [1, 1]} : vector<8x16xf32> to vector<8x8xf32>
    %25 = vector.extract_strided_slice %24 {offsets = [0, 7], sizes = [8, 1], strides = [1, 1]} : vector<8x8xf32> to vector<8x1xf32>
    %26 = vector.extract_strided_slice %24 {offsets = [0, 0], sizes = [8, 7], strides = [1, 1]} : vector<8x8xf32> to vector<8x7xf32>
    %27 = tpu.concatenate %25, %26 in 1 : vector<8x1xf32>, vector<8x7xf32> -> vector<8x8xf32>
    %28 = tpu.concatenate %23, %27 in 1 : vector<8x8xf32>, vector<8x8xf32> -> vector<8x16xf32>
    %29 = vector.extract_strided_slice %0 {offsets = [0, 0], sizes = [8, 8], strides = [1, 1]} : vector<8x16xf32> to vector<8x8xf32>
    %30 = vector.extract_strided_slice %29 {offsets = [0, 1], sizes = [8, 7], strides = [1, 1]} : vector<8x8xf32> to vector<8x7xf32>
    %31 = vector.extract_strided_slice %29 {offsets = [0, 0], sizes = [8, 1], strides = [1, 1]} : vector<8x8xf32> to vector<8x1xf32>
    %32 = tpu.concatenate %30, %31 in 1 : vector<8x7xf32>, vector<8x1xf32> -> vector<8x8xf32>
    %33 = vector.extract_strided_slice %0 {offsets = [0, 8], sizes = [8, 8], strides = [1, 1]} : vector<8x16xf32> to vector<8x8xf32>
    %34 = vector.extract_strided_slice %33 {offsets = [0, 1], sizes = [8, 7], strides = [1, 1]} : vector<8x8xf32> to vector<8x7xf32>
    %35 = vector.extract_strided_slice %33 {offsets = [0, 0], sizes = [8, 1], strides = [1, 1]} : vector<8x8xf32> to vector<8x1xf32>
    %36 = tpu.concatenate %34, %35 in 1 : vector<8x7xf32>, vector<8x1xf32> -> vector<8x8xf32>
    %37 = tpu.concatenate %32, %36 in 1 : vector<8x8xf32>, vector<8x8xf32> -> vector<8x16xf32>
    %38 = vector.extract_strided_slice %0 {offsets = [0, 0], sizes = [8, 8], strides = [1, 1]} : vector<8x16xf32> to vector<8x8xf32>
    %39 = vector.extract_strided_slice %38 {offsets = [0, 2], sizes = [8, 6], strides = [1, 1]} : vector<8x8xf32> to vector<8x6xf32>
    %40 = vector.extract_strided_slice %38 {offsets = [0, 0], sizes = [8, 2], strides = [1, 1]} : vector<8x8xf32> to vector<8x2xf32>
    %41 = tpu.concatenate %39, %40 in 1 : vector<8x6xf32>, vector<8x2xf32> -> vector<8x8xf32>
    %42 = vector.extract_strided_slice %0 {offsets = [0, 8], sizes = [8, 8], strides = [1, 1]} : vector<8x16xf32> to vector<8x8xf32>
    %43 = vector.extract_strided_slice %42 {offsets = [0, 2], sizes = [8, 6], strides = [1, 1]} : vector<8x8xf32> to vector<8x6xf32>
    %44 = vector.extract_strided_slice %42 {offsets = [0, 0], sizes = [8, 2], strides = [1, 1]} : vector<8x8xf32> to vector<8x2xf32>
    %45 = tpu.concatenate %43, %44 in 1 : vector<8x6xf32>, vector<8x2xf32> -> vector<8x8xf32>
    %46 = tpu.concatenate %41, %45 in 1 : vector<8x8xf32>, vector<8x8xf32> -> vector<8x16xf32>
    %47 = vector.extract_strided_slice %0 {offsets = [0, 0], sizes = [8, 8], strides = [1, 1]} : vector<8x16xf32> to vector<8x8xf32>
    %48 = vector.extract_strided_slice %47 {offsets = [0, 3], sizes = [8, 5], strides = [1, 1]} : vector<8x8xf32> to vector<8x5xf32>
    %49 = vector.extract_strided_slice %47 {offsets = [0, 0], sizes = [8, 3], strides = [1, 1]} : vector<8x8xf32> to vector<8x3xf32>
    %50 = tpu.concatenate %48, %49 in 1 : vector<8x5xf32>, vector<8x3xf32> -> vector<8x8xf32>
    %51 = vector.extract_strided_slice %0 {offsets = [0, 8], sizes = [8, 8], strides = [1, 1]} : vector<8x16xf32> to vector<8x8xf32>
    %52 = vector.extract_strided_slice %51 {offsets = [0, 3], sizes = [8, 5], strides = [1, 1]} : vector<8x8xf32> to vector<8x5xf32>
    %53 = vector.extract_strided_slice %51 {offsets = [0, 0], sizes = [8, 3], strides = [1, 1]} : vector<8x8xf32> to vector<8x3xf32>
    %54 = tpu.concatenate %52, %53 in 1 : vector<8x5xf32>, vector<8x3xf32> -> vector<8x8xf32>
    %55 = tpu.concatenate %50, %54 in 1 : vector<8x8xf32>, vector<8x8xf32> -> vector<8x16xf32>
    %56 = vector.extract_strided_slice %1 {offsets = [0, 0], sizes = [8, 8], strides = [1, 1]} : vector<8x16xf32> to vector<8x8xf32>
    %57 = vector.extract_strided_slice %56 {offsets = [0, 6], sizes = [8, 2], strides = [1, 1]} : vector<8x8xf32> to vector<8x2xf32>
    %58 = vector.extract_strided_slice %56 {offsets = [0, 0], sizes = [8, 6], strides = [1, 1]} : vector<8x8xf32> to vector<8x6xf32>
    %59 = tpu.concatenate %57, %58 in 1 : vector<8x2xf32>, vector<8x6xf32> -> vector<8x8xf32>
    %60 = vector.extract_strided_slice %1 {offsets = [0, 8], sizes = [8, 8], strides = [1, 1]} : vector<8x16xf32> to vector<8x8xf32>
    %61 = vector.extract_strided_slice %60 {offsets = [0, 6], sizes = [8, 2], strides = [1, 1]} : vector<8x8xf32> to vector<8x2xf32>
    %62 = vector.extract_strided_slice %60 {offsets = [0, 0], sizes = [8, 6], strides = [1, 1]} : vector<8x8xf32> to vector<8x6xf32>
    %63 = tpu.concatenate %61, %62 in 1 : vector<8x2xf32>, vector<8x6xf32> -> vector<8x8xf32>
    %64 = tpu.concatenate %59, %63 in 1 : vector<8x8xf32>, vector<8x8xf32> -> vector<8x16xf32>
    %65 = vector.extract_strided_slice %1 {offsets = [0, 0], sizes = [8, 8], strides = [1, 1]} : vector<8x16xf32> to vector<8x8xf32>
    %66 = vector.extract_strided_slice %65 {offsets = [0, 7], sizes = [8, 1], strides = [1, 1]} : vector<8x8xf32> to vector<8x1xf32>
    %67 = vector.extract_strided_slice %65 {offsets = [0, 0], sizes = [8, 7], strides = [1, 1]} : vector<8x8xf32> to vector<8x7xf32>
    %68 = tpu.concatenate %66, %67 in 1 : vector<8x1xf32>, vector<8x7xf32> -> vector<8x8xf32>
    %69 = vector.extract_strided_slice %1 {offsets = [0, 8], sizes = [8, 8], strides = [1, 1]} : vector<8x16xf32> to vector<8x8xf32>
    %70 = vector.extract_strided_slice %69 {offsets = [0, 7], sizes = [8, 1], strides = [1, 1]} : vector<8x8xf32> to vector<8x1xf32>
    %71 = vector.extract_strided_slice %69 {offsets = [0, 0], sizes = [8, 7], strides = [1, 1]} : vector<8x8xf32> to vector<8x7xf32>
    %72 = tpu.concatenate %70, %71 in 1 : vector<8x1xf32>, vector<8x7xf32> -> vector<8x8xf32>
    %73 = tpu.concatenate %68, %72 in 1 : vector<8x8xf32>, vector<8x8xf32> -> vector<8x16xf32>
    %74 = vector.extract_strided_slice %1 {offsets = [0, 0], sizes = [8, 8], strides = [1, 1]} : vector<8x16xf32> to vector<8x8xf32>
    %75 = vector.extract_strided_slice %74 {offsets = [0, 1], sizes = [8, 7], strides = [1, 1]} : vector<8x8xf32> to vector<8x7xf32>
    %76 = vector.extract_strided_slice %74 {offsets = [0, 0], sizes = [8, 1], strides = [1, 1]} : vector<8x8xf32> to vector<8x1xf32>
    %77 = tpu.concatenate %75, %76 in 1 : vector<8x7xf32>, vector<8x1xf32> -> vector<8x8xf32>
    %78 = vector.extract_strided_slice %1 {offsets = [0, 8], sizes = [8, 8], strides = [1, 1]} : vector<8x16xf32> to vector<8x8xf32>
    %79 = vector.extract_strided_slice %78 {offsets = [0, 1], sizes = [8, 7], strides = [1, 1]} : vector<8x8xf32> to vector<8x7xf32>
    %80 = vector.extract_strided_slice %78 {offsets = [0, 0], sizes = [8, 1], strides = [1, 1]} : vector<8x8xf32> to vector<8x1xf32>
    %81 = tpu.concatenate %79, %80 in 1 : vector<8x7xf32>, vector<8x1xf32> -> vector<8x8xf32>
    %82 = tpu.concatenate %77, %81 in 1 : vector<8x8xf32>, vector<8x8xf32> -> vector<8x16xf32>
    %83 = tpu.concatenate %10, %19, %28, %0, %37, %46, %55, %64, %73, %1, %82 in 0 : vector<8x16xf32>, vector<8x16xf32>, vector<8x16xf32>, vector<8x16xf32>, vector<8x16xf32>, vector<8x16xf32>, vector<8x16xf32>, vector<8x16xf32>, vector<8x16xf32>, vector<8x16xf32>, vector<8x16xf32> -> vector<88x16xf32>
    %c0_3 = arith.constant 0 : index
    %c0_4 = arith.constant 0 : index
    %84 = vector.load %arg2[%c0_3, %c0_4] : memref<40x88xf32, #tpu.memory_space<vmem>>, vector<40x88xf32>
    %cst = arith.constant dense<0.000000e+00> : vector<40x16xf32>
    %85 = tpu.matmul %84, %83, %cst {dimension_numbers = #tpu.dot_dimension_numbers<[1], [0], [0], [1], [0, 0, 1, 1], [], []>} : vector<40x88xf32>, vector<88x16xf32>, vector<40x16xf32> -> vector<40x16xf32>
    %c0_5 = arith.constant 0 : index
    %c0_6 = arith.constant 0 : index
    %86 = vector.load %arg3[%c0_5, %c0_6] : memref<40x1xf32, #tpu.memory_space<vmem>>, vector<40x1xf32>
    %87 = vector.broadcast %86 : vector<40x1xf32> to vector<40x16xf32>
    %88 = arith.addf %85, %87 : vector<40x16xf32>
    %cst_7 = arith.constant 0.000000e+00 : f32
    %89 = vector.broadcast %cst_7 : f32 to vector<40x16xf32>
    %90 = arith.maximumf %88, %89 : vector<40x16xf32>
    %cst_8 = arith.constant dense<0.000000e+00> : vector<40xf32>
    %91 = vector.multi_reduction <add>, %90, %cst_8 [1] : vector<40x16xf32> to vector<40xf32>
    %92 = vector.shape_cast %91 : vector<40xf32> to vector<40x1xf32>
    %cst_9 = arith.constant 0.000000e+00 : f32
    %93 = vector.broadcast %cst_9 : f32 to vector<40x1xf32>
    %94 = arith.addf %93, %92 : vector<40x1xf32>
    %cst_10 = arith.constant 6.250000e-02 : f32
    %95 = vector.broadcast %cst_10 : f32 to vector<40x1xf32>
    %96 = arith.mulf %94, %95 : vector<40x1xf32>
    %97 = vector.broadcast %96 : vector<40x1xf32> to vector<40x16xf32>
    %98 = arith.subf %90, %97 : vector<40x16xf32>
    %99 = vector.broadcast %96 : vector<40x1xf32> to vector<40x16xf32>
    %100 = arith.subf %90, %99 : vector<40x16xf32>
    %101 = arith.mulf %98, %100 : vector<40x16xf32>
    %cst_11 = arith.constant dense<0.000000e+00> : vector<40xf32>
    %102 = vector.multi_reduction <add>, %101, %cst_11 [1] : vector<40x16xf32> to vector<40xf32>
    %103 = vector.shape_cast %102 : vector<40xf32> to vector<40x1xf32>
    %cst_12 = arith.constant 0.000000e+00 : f32
    %104 = vector.broadcast %cst_12 : f32 to vector<40x1xf32>
    %105 = arith.addf %104, %103 : vector<40x1xf32>
    %cst_13 = arith.constant 6.250000e-02 : f32
    %106 = vector.broadcast %cst_13 : f32 to vector<40x1xf32>
    %107 = arith.mulf %105, %106 : vector<40x1xf32>
    %cst_14 = arith.constant 9.99999974E-6 : f32
    %108 = vector.broadcast %cst_14 : f32 to vector<40x1xf32>
    %109 = arith.addf %107, %108 : vector<40x1xf32>
    %110 = math.rsqrt %109 : vector<40x1xf32>
    %111 = vector.broadcast %96 : vector<40x1xf32> to vector<40x16xf32>
    %112 = arith.subf %90, %111 : vector<40x16xf32>
    %113 = vector.broadcast %110 : vector<40x1xf32> to vector<40x16xf32>
    %114 = arith.mulf %112, %113 : vector<40x16xf32>
    %c0_15 = arith.constant 0 : index
    %c0_16 = arith.constant 0 : index
    %115 = vector.load %arg4[%c0_15, %c0_16] : memref<40x1xf32, #tpu.memory_space<vmem>>, vector<40x1xf32>
    %116 = vector.broadcast %115 : vector<40x1xf32> to vector<40x16xf32>
    %117 = arith.mulf %114, %116 : vector<40x16xf32>
    %c0_17 = arith.constant 0 : index
    %c0_18 = arith.constant 0 : index
    %118 = vector.load %arg5[%c0_17, %c0_18] : memref<40x1xf32, #tpu.memory_space<vmem>>, vector<40x1xf32>
    %119 = vector.broadcast %118 : vector<40x1xf32> to vector<40x16xf32>
    %120 = arith.addf %117, %119 : vector<40x16xf32>
    %121 = vector.extract_strided_slice %120 {offsets = [0, 0], sizes = [40, 8], strides = [1, 1]} : vector<40x16xf32> to vector<40x8xf32>
    %122 = vector.extract_strided_slice %121 {offsets = [0, 2], sizes = [40, 6], strides = [1, 1]} : vector<40x8xf32> to vector<40x6xf32>
    %cst_19 = arith.constant 0.000000e+00 : f32
    %123 = vector.broadcast %cst_19 : f32 to vector<40x2xf32>
    %124 = tpu.concatenate %122, %123 in 1 : vector<40x6xf32>, vector<40x2xf32> -> vector<40x8xf32>
    %125 = vector.extract_strided_slice %120 {offsets = [0, 8], sizes = [40, 8], strides = [1, 1]} : vector<40x16xf32> to vector<40x8xf32>
    %126 = vector.extract_strided_slice %125 {offsets = [0, 2], sizes = [40, 6], strides = [1, 1]} : vector<40x8xf32> to vector<40x6xf32>
    %cst_20 = arith.constant 0.000000e+00 : f32
    %127 = vector.broadcast %cst_20 : f32 to vector<40x2xf32>
    %128 = tpu.concatenate %126, %127 in 1 : vector<40x6xf32>, vector<40x2xf32> -> vector<40x8xf32>
    %129 = tpu.concatenate %124, %128 in 1 : vector<40x8xf32>, vector<40x8xf32> -> vector<40x16xf32>
    %130 = vector.extract_strided_slice %120 {offsets = [0, 0], sizes = [40, 8], strides = [1, 1]} : vector<40x16xf32> to vector<40x8xf32>
    %131 = vector.extract_strided_slice %130 {offsets = [0, 1], sizes = [40, 7], strides = [1, 1]} : vector<40x8xf32> to vector<40x7xf32>
    %cst_21 = arith.constant 0.000000e+00 : f32
    %132 = vector.broadcast %cst_21 : f32 to vector<40x1xf32>
    %133 = tpu.concatenate %131, %132 in 1 : vector<40x7xf32>, vector<40x1xf32> -> vector<40x8xf32>
    %134 = vector.extract_strided_slice %120 {offsets = [0, 8], sizes = [40, 8], strides = [1, 1]} : vector<40x16xf32> to vector<40x8xf32>
    %135 = vector.extract_strided_slice %134 {offsets = [0, 1], sizes = [40, 7], strides = [1, 1]} : vector<40x8xf32> to vector<40x7xf32>
    %cst_22 = arith.constant 0.000000e+00 : f32
    %136 = vector.broadcast %cst_22 : f32 to vector<40x1xf32>
    %137 = tpu.concatenate %135, %136 in 1 : vector<40x7xf32>, vector<40x1xf32> -> vector<40x8xf32>
    %138 = tpu.concatenate %133, %137 in 1 : vector<40x8xf32>, vector<40x8xf32> -> vector<40x16xf32>
    %139 = vector.extract_strided_slice %120 {offsets = [0, 0], sizes = [40, 8], strides = [1, 1]} : vector<40x16xf32> to vector<40x8xf32>
    %cst_23 = arith.constant 0.000000e+00 : f32
    %140 = vector.broadcast %cst_23 : f32 to vector<40x1xf32>
    %141 = vector.extract_strided_slice %139 {offsets = [0, 0], sizes = [40, 7], strides = [1, 1]} : vector<40x8xf32> to vector<40x7xf32>
    %142 = tpu.concatenate %140, %141 in 1 : vector<40x1xf32>, vector<40x7xf32> -> vector<40x8xf32>
    %143 = vector.extract_strided_slice %120 {offsets = [0, 8], sizes = [40, 8], strides = [1, 1]} : vector<40x16xf32> to vector<40x8xf32>
    %cst_24 = arith.constant 0.000000e+00 : f32
    %144 = vector.broadcast %cst_24 : f32 to vector<40x1xf32>
    %145 = vector.extract_strided_slice %143 {offsets = [0, 0], sizes = [40, 7], strides = [1, 1]} : vector<40x8xf32> to vector<40x7xf32>
    %146 = tpu.concatenate %144, %145 in 1 : vector<40x1xf32>, vector<40x7xf32> -> vector<40x8xf32>
    %147 = tpu.concatenate %142, %146 in 1 : vector<40x8xf32>, vector<40x8xf32> -> vector<40x16xf32>
    %148 = vector.extract_strided_slice %120 {offsets = [0, 0], sizes = [40, 8], strides = [1, 1]} : vector<40x16xf32> to vector<40x8xf32>
    %cst_25 = arith.constant 0.000000e+00 : f32
    %149 = vector.broadcast %cst_25 : f32 to vector<40x2xf32>
    %150 = vector.extract_strided_slice %148 {offsets = [0, 0], sizes = [40, 6], strides = [1, 1]} : vector<40x8xf32> to vector<40x6xf32>
    %151 = tpu.concatenate %149, %150 in 1 : vector<40x2xf32>, vector<40x6xf32> -> vector<40x8xf32>
    %152 = vector.extract_strided_slice %120 {offsets = [0, 8], sizes = [40, 8], strides = [1, 1]} : vector<40x16xf32> to vector<40x8xf32>
    %cst_26 = arith.constant 0.000000e+00 : f32
    %153 = vector.broadcast %cst_26 : f32 to vector<40x2xf32>
    %154 = vector.extract_strided_slice %152 {offsets = [0, 0], sizes = [40, 6], strides = [1, 1]} : vector<40x8xf32> to vector<40x6xf32>
    %155 = tpu.concatenate %153, %154 in 1 : vector<40x2xf32>, vector<40x6xf32> -> vector<40x8xf32>
    %156 = tpu.concatenate %151, %155 in 1 : vector<40x8xf32>, vector<40x8xf32> -> vector<40x16xf32>
    %157 = tpu.concatenate %129, %138, %120, %147, %156 in 0 : vector<40x16xf32>, vector<40x16xf32>, vector<40x16xf32>, vector<40x16xf32>, vector<40x16xf32> -> vector<200x16xf32>
    %c0_27 = arith.constant 0 : index
    %c0_28 = arith.constant 0 : index
    %158 = vector.load %arg6[%c0_27, %c0_28] : memref<80x200xf32, #tpu.memory_space<vmem>>, vector<80x200xf32>
    %cst_29 = arith.constant dense<0.000000e+00> : vector<80x16xf32>
    %159 = tpu.matmul %158, %157, %cst_29 {dimension_numbers = #tpu.dot_dimension_numbers<[1], [0], [0], [1], [0, 0, 1, 1], [], []>} : vector<80x200xf32>, vector<200x16xf32>, vector<80x16xf32> -> vector<80x16xf32>
    %160 = vector.extract_strided_slice %159 {offsets = [0, 0], sizes = [40, 16], strides = [1, 1]} : vector<80x16xf32> to vector<40x16xf32>
    %c0_30 = arith.constant 0 : index
    %c0_31 = arith.constant 0 : index
    %161 = vector.load %arg7[%c0_30, %c0_31] : memref<40x1xf32, #tpu.memory_space<vmem>>, vector<40x1xf32>
    %162 = vector.broadcast %161 : vector<40x1xf32> to vector<40x16xf32>
    %163 = arith.addf %160, %162 : vector<40x16xf32>
    %cst_32 = arith.constant 0.000000e+00 : f32
    %164 = vector.broadcast %cst_32 : f32 to vector<40x16xf32>
    %165 = arith.maximumf %163, %164 : vector<40x16xf32>
    %166 = vector.extract_strided_slice %159 {offsets = [40, 0], sizes = [40, 16], strides = [1, 1]} : vector<80x16xf32> to vector<40x16xf32>
    %c0_33 = arith.constant 0 : index
    %c0_34 = arith.constant 0 : index
    %167 = vector.load %arg7[%c0_33, %c0_34] : memref<40x1xf32, #tpu.memory_space<vmem>>, vector<40x1xf32>
    %168 = vector.broadcast %167 : vector<40x1xf32> to vector<40x16xf32>
    %169 = arith.addf %166, %168 : vector<40x16xf32>
    %cst_35 = arith.constant 0.000000e+00 : f32
    %170 = vector.broadcast %cst_35 : f32 to vector<40x16xf32>
    %171 = arith.maximumf %169, %170 : vector<40x16xf32>
    %cst_36 = arith.constant dense<0.000000e+00> : vector<40xf32>
    %172 = vector.multi_reduction <add>, %165, %cst_36 [1] : vector<40x16xf32> to vector<40xf32>
    %173 = vector.shape_cast %172 : vector<40xf32> to vector<40x1xf32>
    %cst_37 = arith.constant 0.000000e+00 : f32
    %174 = vector.broadcast %cst_37 : f32 to vector<40x1xf32>
    %175 = arith.addf %174, %173 : vector<40x1xf32>
    %cst_38 = arith.constant dense<0.000000e+00> : vector<40xf32>
    %176 = vector.multi_reduction <add>, %171, %cst_38 [1] : vector<40x16xf32> to vector<40xf32>
    %177 = vector.shape_cast %176 : vector<40xf32> to vector<40x1xf32>
    %178 = arith.addf %175, %177 : vector<40x1xf32>
    %cst_39 = arith.constant 3.125000e-02 : f32
    %179 = vector.broadcast %cst_39 : f32 to vector<40x1xf32>
    %180 = arith.mulf %178, %179 : vector<40x1xf32>
    %181 = vector.broadcast %180 : vector<40x1xf32> to vector<40x16xf32>
    %182 = arith.subf %165, %181 : vector<40x16xf32>
    %183 = vector.broadcast %180 : vector<40x1xf32> to vector<40x16xf32>
    %184 = arith.subf %165, %183 : vector<40x16xf32>
    %185 = arith.mulf %182, %184 : vector<40x16xf32>
    %cst_40 = arith.constant dense<0.000000e+00> : vector<40xf32>
    %186 = vector.multi_reduction <add>, %185, %cst_40 [1] : vector<40x16xf32> to vector<40xf32>
    %187 = vector.shape_cast %186 : vector<40xf32> to vector<40x1xf32>
    %cst_41 = arith.constant 0.000000e+00 : f32
    %188 = vector.broadcast %cst_41 : f32 to vector<40x1xf32>
    %189 = arith.addf %188, %187 : vector<40x1xf32>
    %190 = vector.broadcast %180 : vector<40x1xf32> to vector<40x16xf32>
    %191 = arith.subf %171, %190 : vector<40x16xf32>
    %192 = vector.broadcast %180 : vector<40x1xf32> to vector<40x16xf32>
    %193 = arith.subf %171, %192 : vector<40x16xf32>
    %194 = arith.mulf %191, %193 : vector<40x16xf32>
    %cst_42 = arith.constant dense<0.000000e+00> : vector<40xf32>
    %195 = vector.multi_reduction <add>, %194, %cst_42 [1] : vector<40x16xf32> to vector<40xf32>
    %196 = vector.shape_cast %195 : vector<40xf32> to vector<40x1xf32>
    %197 = arith.addf %189, %196 : vector<40x1xf32>
    %cst_43 = arith.constant 3.125000e-02 : f32
    %198 = vector.broadcast %cst_43 : f32 to vector<40x1xf32>
    %199 = arith.mulf %197, %198 : vector<40x1xf32>
    %cst_44 = arith.constant 9.99999974E-6 : f32
    %200 = vector.broadcast %cst_44 : f32 to vector<40x1xf32>
    %201 = arith.addf %199, %200 : vector<40x1xf32>
    %202 = math.rsqrt %201 : vector<40x1xf32>
    %203 = vector.broadcast %180 : vector<40x1xf32> to vector<40x16xf32>
    %204 = arith.subf %165, %203 : vector<40x16xf32>
    %205 = vector.broadcast %202 : vector<40x1xf32> to vector<40x16xf32>
    %206 = arith.mulf %204, %205 : vector<40x16xf32>
    %c0_45 = arith.constant 0 : index
    %c0_46 = arith.constant 0 : index
    %207 = vector.load %arg8[%c0_45, %c0_46] : memref<40x1xf32, #tpu.memory_space<vmem>>, vector<40x1xf32>
    %208 = vector.broadcast %207 : vector<40x1xf32> to vector<40x16xf32>
    %209 = arith.mulf %206, %208 : vector<40x16xf32>
    %c0_47 = arith.constant 0 : index
    %c0_48 = arith.constant 0 : index
    %210 = vector.load %arg9[%c0_47, %c0_48] : memref<40x1xf32, #tpu.memory_space<vmem>>, vector<40x1xf32>
    %211 = vector.broadcast %210 : vector<40x1xf32> to vector<40x16xf32>
    %212 = arith.addf %209, %211 : vector<40x16xf32>
    %213 = vector.broadcast %180 : vector<40x1xf32> to vector<40x16xf32>
    %214 = arith.subf %171, %213 : vector<40x16xf32>
    %215 = vector.broadcast %202 : vector<40x1xf32> to vector<40x16xf32>
    %216 = arith.mulf %214, %215 : vector<40x16xf32>
    %c0_49 = arith.constant 0 : index
    %c0_50 = arith.constant 0 : index
    %217 = vector.load %arg8[%c0_49, %c0_50] : memref<40x1xf32, #tpu.memory_space<vmem>>, vector<40x1xf32>
    %218 = vector.broadcast %217 : vector<40x1xf32> to vector<40x16xf32>
    %219 = arith.mulf %216, %218 : vector<40x16xf32>
    %c0_51 = arith.constant 0 : index
    %c0_52 = arith.constant 0 : index
    %220 = vector.load %arg9[%c0_51, %c0_52] : memref<40x1xf32, #tpu.memory_space<vmem>>, vector<40x1xf32>
    %221 = vector.broadcast %220 : vector<40x1xf32> to vector<40x16xf32>
    %222 = arith.addf %219, %221 : vector<40x16xf32>
    %223 = vector.extract_strided_slice %212 {offsets = [0, 0], sizes = [40, 8], strides = [1, 1]} : vector<40x16xf32> to vector<40x8xf32>
    %224 = vector.extract_strided_slice %223 {offsets = [0, 1], sizes = [40, 7], strides = [1, 1]} : vector<40x8xf32> to vector<40x7xf32>
    %cst_53 = arith.constant 0.000000e+00 : f32
    %225 = vector.broadcast %cst_53 : f32 to vector<40x1xf32>
    %226 = tpu.concatenate %224, %225 in 1 : vector<40x7xf32>, vector<40x1xf32> -> vector<40x8xf32>
    %227 = vector.extract_strided_slice %212 {offsets = [0, 8], sizes = [40, 8], strides = [1, 1]} : vector<40x16xf32> to vector<40x8xf32>
    %228 = vector.extract_strided_slice %227 {offsets = [0, 1], sizes = [40, 7], strides = [1, 1]} : vector<40x8xf32> to vector<40x7xf32>
    %cst_54 = arith.constant 0.000000e+00 : f32
    %229 = vector.broadcast %cst_54 : f32 to vector<40x1xf32>
    %230 = tpu.concatenate %228, %229 in 1 : vector<40x7xf32>, vector<40x1xf32> -> vector<40x8xf32>
    %231 = tpu.concatenate %226, %230 in 1 : vector<40x8xf32>, vector<40x8xf32> -> vector<40x16xf32>
    %232 = vector.extract_strided_slice %222 {offsets = [0, 0], sizes = [40, 8], strides = [1, 1]} : vector<40x16xf32> to vector<40x8xf32>
    %cst_55 = arith.constant 0.000000e+00 : f32
    %233 = vector.broadcast %cst_55 : f32 to vector<40x1xf32>
    %234 = vector.extract_strided_slice %232 {offsets = [0, 0], sizes = [40, 7], strides = [1, 1]} : vector<40x8xf32> to vector<40x7xf32>
    %235 = tpu.concatenate %233, %234 in 1 : vector<40x1xf32>, vector<40x7xf32> -> vector<40x8xf32>
    %236 = vector.extract_strided_slice %222 {offsets = [0, 8], sizes = [40, 8], strides = [1, 1]} : vector<40x16xf32> to vector<40x8xf32>
    %cst_56 = arith.constant 0.000000e+00 : f32
    %237 = vector.broadcast %cst_56 : f32 to vector<40x1xf32>
    %238 = vector.extract_strided_slice %236 {offsets = [0, 0], sizes = [40, 7], strides = [1, 1]} : vector<40x8xf32> to vector<40x7xf32>
    %239 = tpu.concatenate %237, %238 in 1 : vector<40x1xf32>, vector<40x7xf32> -> vector<40x8xf32>
    %240 = tpu.concatenate %235, %239 in 1 : vector<40x8xf32>, vector<40x8xf32> -> vector<40x16xf32>
    %241 = tpu.concatenate %212, %231, %240, %222 in 0 : vector<40x16xf32>, vector<40x16xf32>, vector<40x16xf32>, vector<40x16xf32> -> vector<160x16xf32>
    %c0_57 = arith.constant 0 : index
    %c0_58 = arith.constant 0 : index
    %242 = vector.load %arg10[%c0_57, %c0_58] : memref<32x160xf32, #tpu.memory_space<vmem>>, vector<32x160xf32>
    %cst_59 = arith.constant dense<0.000000e+00> : vector<32x16xf32>
    %243 = tpu.matmul %242, %241, %cst_59 {dimension_numbers = #tpu.dot_dimension_numbers<[1], [0], [0], [1], [0, 0, 1, 1], [], []>} : vector<32x160xf32>, vector<160x16xf32>, vector<32x16xf32> -> vector<32x16xf32>
    %244 = vector.extract_strided_slice %243 {offsets = [0, 0], sizes = [16, 16], strides = [1, 1]} : vector<32x16xf32> to vector<16x16xf32>
    %c0_60 = arith.constant 0 : index
    %c0_61 = arith.constant 0 : index
    %245 = vector.load %arg11[%c0_60, %c0_61] : memref<16x1xf32, #tpu.memory_space<vmem>>, vector<16x1xf32>
    %246 = vector.broadcast %245 : vector<16x1xf32> to vector<16x16xf32>
    %247 = arith.addf %244, %246 : vector<16x16xf32>
    %248 = vector.extract_strided_slice %243 {offsets = [16, 0], sizes = [16, 16], strides = [1, 1]} : vector<32x16xf32> to vector<16x16xf32>
    %c0_62 = arith.constant 0 : index
    %c0_63 = arith.constant 0 : index
    %249 = vector.load %arg11[%c0_62, %c0_63] : memref<16x1xf32, #tpu.memory_space<vmem>>, vector<16x1xf32>
    %250 = vector.broadcast %249 : vector<16x1xf32> to vector<16x16xf32>
    %251 = arith.addf %248, %250 : vector<16x16xf32>
    %252 = vector.extract_strided_slice %247 {offsets = [0, 0], sizes = [16, 8], strides = [1, 1]} : vector<16x16xf32> to vector<16x8xf32>
    %253 = vector.extract_strided_slice %252 {offsets = [0, 5], sizes = [16, 3], strides = [1, 1]} : vector<16x8xf32> to vector<16x3xf32>
    %254 = vector.extract_strided_slice %252 {offsets = [0, 0], sizes = [16, 5], strides = [1, 1]} : vector<16x8xf32> to vector<16x5xf32>
    %255 = tpu.concatenate %253, %254 in 1 : vector<16x3xf32>, vector<16x5xf32> -> vector<16x8xf32>
    %256 = vector.extract_strided_slice %247 {offsets = [0, 8], sizes = [16, 8], strides = [1, 1]} : vector<16x16xf32> to vector<16x8xf32>
    %257 = vector.extract_strided_slice %256 {offsets = [0, 5], sizes = [16, 3], strides = [1, 1]} : vector<16x8xf32> to vector<16x3xf32>
    %258 = vector.extract_strided_slice %256 {offsets = [0, 0], sizes = [16, 5], strides = [1, 1]} : vector<16x8xf32> to vector<16x5xf32>
    %259 = tpu.concatenate %257, %258 in 1 : vector<16x3xf32>, vector<16x5xf32> -> vector<16x8xf32>
    %260 = tpu.concatenate %255, %259 in 1 : vector<16x8xf32>, vector<16x8xf32> -> vector<16x16xf32>
    %261 = vector.extract_strided_slice %247 {offsets = [0, 0], sizes = [16, 8], strides = [1, 1]} : vector<16x16xf32> to vector<16x8xf32>
    %262 = vector.extract_strided_slice %261 {offsets = [0, 6], sizes = [16, 2], strides = [1, 1]} : vector<16x8xf32> to vector<16x2xf32>
    %263 = vector.extract_strided_slice %261 {offsets = [0, 0], sizes = [16, 6], strides = [1, 1]} : vector<16x8xf32> to vector<16x6xf32>
    %264 = tpu.concatenate %262, %263 in 1 : vector<16x2xf32>, vector<16x6xf32> -> vector<16x8xf32>
    %265 = vector.extract_strided_slice %247 {offsets = [0, 8], sizes = [16, 8], strides = [1, 1]} : vector<16x16xf32> to vector<16x8xf32>
    %266 = vector.extract_strided_slice %265 {offsets = [0, 6], sizes = [16, 2], strides = [1, 1]} : vector<16x8xf32> to vector<16x2xf32>
    %267 = vector.extract_strided_slice %265 {offsets = [0, 0], sizes = [16, 6], strides = [1, 1]} : vector<16x8xf32> to vector<16x6xf32>
    %268 = tpu.concatenate %266, %267 in 1 : vector<16x2xf32>, vector<16x6xf32> -> vector<16x8xf32>
    %269 = tpu.concatenate %264, %268 in 1 : vector<16x8xf32>, vector<16x8xf32> -> vector<16x16xf32>
    %270 = vector.extract_strided_slice %247 {offsets = [0, 0], sizes = [16, 8], strides = [1, 1]} : vector<16x16xf32> to vector<16x8xf32>
    %271 = vector.extract_strided_slice %270 {offsets = [0, 7], sizes = [16, 1], strides = [1, 1]} : vector<16x8xf32> to vector<16x1xf32>
    %272 = vector.extract_strided_slice %270 {offsets = [0, 0], sizes = [16, 7], strides = [1, 1]} : vector<16x8xf32> to vector<16x7xf32>
    %273 = tpu.concatenate %271, %272 in 1 : vector<16x1xf32>, vector<16x7xf32> -> vector<16x8xf32>
    %274 = vector.extract_strided_slice %247 {offsets = [0, 8], sizes = [16, 8], strides = [1, 1]} : vector<16x16xf32> to vector<16x8xf32>
    %275 = vector.extract_strided_slice %274 {offsets = [0, 7], sizes = [16, 1], strides = [1, 1]} : vector<16x8xf32> to vector<16x1xf32>
    %276 = vector.extract_strided_slice %274 {offsets = [0, 0], sizes = [16, 7], strides = [1, 1]} : vector<16x8xf32> to vector<16x7xf32>
    %277 = tpu.concatenate %275, %276 in 1 : vector<16x1xf32>, vector<16x7xf32> -> vector<16x8xf32>
    %278 = tpu.concatenate %273, %277 in 1 : vector<16x8xf32>, vector<16x8xf32> -> vector<16x16xf32>
    %279 = vector.extract_strided_slice %247 {offsets = [0, 0], sizes = [16, 8], strides = [1, 1]} : vector<16x16xf32> to vector<16x8xf32>
    %280 = vector.extract_strided_slice %279 {offsets = [0, 1], sizes = [16, 7], strides = [1, 1]} : vector<16x8xf32> to vector<16x7xf32>
    %281 = vector.extract_strided_slice %279 {offsets = [0, 0], sizes = [16, 1], strides = [1, 1]} : vector<16x8xf32> to vector<16x1xf32>
    %282 = tpu.concatenate %280, %281 in 1 : vector<16x7xf32>, vector<16x1xf32> -> vector<16x8xf32>
    %283 = vector.extract_strided_slice %247 {offsets = [0, 8], sizes = [16, 8], strides = [1, 1]} : vector<16x16xf32> to vector<16x8xf32>
    %284 = vector.extract_strided_slice %283 {offsets = [0, 1], sizes = [16, 7], strides = [1, 1]} : vector<16x8xf32> to vector<16x7xf32>
    %285 = vector.extract_strided_slice %283 {offsets = [0, 0], sizes = [16, 1], strides = [1, 1]} : vector<16x8xf32> to vector<16x1xf32>
    %286 = tpu.concatenate %284, %285 in 1 : vector<16x7xf32>, vector<16x1xf32> -> vector<16x8xf32>
    %287 = tpu.concatenate %282, %286 in 1 : vector<16x8xf32>, vector<16x8xf32> -> vector<16x16xf32>
    %288 = vector.extract_strided_slice %247 {offsets = [0, 0], sizes = [16, 8], strides = [1, 1]} : vector<16x16xf32> to vector<16x8xf32>
    %289 = vector.extract_strided_slice %288 {offsets = [0, 2], sizes = [16, 6], strides = [1, 1]} : vector<16x8xf32> to vector<16x6xf32>
    %290 = vector.extract_strided_slice %288 {offsets = [0, 0], sizes = [16, 2], strides = [1, 1]} : vector<16x8xf32> to vector<16x2xf32>
    %291 = tpu.concatenate %289, %290 in 1 : vector<16x6xf32>, vector<16x2xf32> -> vector<16x8xf32>
    %292 = vector.extract_strided_slice %247 {offsets = [0, 8], sizes = [16, 8], strides = [1, 1]} : vector<16x16xf32> to vector<16x8xf32>
    %293 = vector.extract_strided_slice %292 {offsets = [0, 2], sizes = [16, 6], strides = [1, 1]} : vector<16x8xf32> to vector<16x6xf32>
    %294 = vector.extract_strided_slice %292 {offsets = [0, 0], sizes = [16, 2], strides = [1, 1]} : vector<16x8xf32> to vector<16x2xf32>
    %295 = tpu.concatenate %293, %294 in 1 : vector<16x6xf32>, vector<16x2xf32> -> vector<16x8xf32>
    %296 = tpu.concatenate %291, %295 in 1 : vector<16x8xf32>, vector<16x8xf32> -> vector<16x16xf32>
    %297 = vector.extract_strided_slice %247 {offsets = [0, 0], sizes = [16, 8], strides = [1, 1]} : vector<16x16xf32> to vector<16x8xf32>
    %298 = vector.extract_strided_slice %297 {offsets = [0, 3], sizes = [16, 5], strides = [1, 1]} : vector<16x8xf32> to vector<16x5xf32>
    %299 = vector.extract_strided_slice %297 {offsets = [0, 0], sizes = [16, 3], strides = [1, 1]} : vector<16x8xf32> to vector<16x3xf32>
    %300 = tpu.concatenate %298, %299 in 1 : vector<16x5xf32>, vector<16x3xf32> -> vector<16x8xf32>
    %301 = vector.extract_strided_slice %247 {offsets = [0, 8], sizes = [16, 8], strides = [1, 1]} : vector<16x16xf32> to vector<16x8xf32>
    %302 = vector.extract_strided_slice %301 {offsets = [0, 3], sizes = [16, 5], strides = [1, 1]} : vector<16x8xf32> to vector<16x5xf32>
    %303 = vector.extract_strided_slice %301 {offsets = [0, 0], sizes = [16, 3], strides = [1, 1]} : vector<16x8xf32> to vector<16x3xf32>
    %304 = tpu.concatenate %302, %303 in 1 : vector<16x5xf32>, vector<16x3xf32> -> vector<16x8xf32>
    %305 = tpu.concatenate %300, %304 in 1 : vector<16x8xf32>, vector<16x8xf32> -> vector<16x16xf32>
    %306 = vector.extract_strided_slice %251 {offsets = [0, 0], sizes = [16, 8], strides = [1, 1]} : vector<16x16xf32> to vector<16x8xf32>
    %307 = vector.extract_strided_slice %306 {offsets = [0, 6], sizes = [16, 2], strides = [1, 1]} : vector<16x8xf32> to vector<16x2xf32>
    %308 = vector.extract_strided_slice %306 {offsets = [0, 0], sizes = [16, 6], strides = [1, 1]} : vector<16x8xf32> to vector<16x6xf32>
    %309 = tpu.concatenate %307, %308 in 1 : vector<16x2xf32>, vector<16x6xf32> -> vector<16x8xf32>
    %310 = vector.extract_strided_slice %251 {offsets = [0, 8], sizes = [16, 8], strides = [1, 1]} : vector<16x16xf32> to vector<16x8xf32>
    %311 = vector.extract_strided_slice %310 {offsets = [0, 6], sizes = [16, 2], strides = [1, 1]} : vector<16x8xf32> to vector<16x2xf32>
    %312 = vector.extract_strided_slice %310 {offsets = [0, 0], sizes = [16, 6], strides = [1, 1]} : vector<16x8xf32> to vector<16x6xf32>
    %313 = tpu.concatenate %311, %312 in 1 : vector<16x2xf32>, vector<16x6xf32> -> vector<16x8xf32>
    %314 = tpu.concatenate %309, %313 in 1 : vector<16x8xf32>, vector<16x8xf32> -> vector<16x16xf32>
    %315 = vector.extract_strided_slice %251 {offsets = [0, 0], sizes = [16, 8], strides = [1, 1]} : vector<16x16xf32> to vector<16x8xf32>
    %316 = vector.extract_strided_slice %315 {offsets = [0, 7], sizes = [16, 1], strides = [1, 1]} : vector<16x8xf32> to vector<16x1xf32>
    %317 = vector.extract_strided_slice %315 {offsets = [0, 0], sizes = [16, 7], strides = [1, 1]} : vector<16x8xf32> to vector<16x7xf32>
    %318 = tpu.concatenate %316, %317 in 1 : vector<16x1xf32>, vector<16x7xf32> -> vector<16x8xf32>
    %319 = vector.extract_strided_slice %251 {offsets = [0, 8], sizes = [16, 8], strides = [1, 1]} : vector<16x16xf32> to vector<16x8xf32>
    %320 = vector.extract_strided_slice %319 {offsets = [0, 7], sizes = [16, 1], strides = [1, 1]} : vector<16x8xf32> to vector<16x1xf32>
    %321 = vector.extract_strided_slice %319 {offsets = [0, 0], sizes = [16, 7], strides = [1, 1]} : vector<16x8xf32> to vector<16x7xf32>
    %322 = tpu.concatenate %320, %321 in 1 : vector<16x1xf32>, vector<16x7xf32> -> vector<16x8xf32>
    %323 = tpu.concatenate %318, %322 in 1 : vector<16x8xf32>, vector<16x8xf32> -> vector<16x16xf32>
    %324 = vector.extract_strided_slice %251 {offsets = [0, 0], sizes = [16, 8], strides = [1, 1]} : vector<16x16xf32> to vector<16x8xf32>
    %325 = vector.extract_strided_slice %324 {offsets = [0, 1], sizes = [16, 7], strides = [1, 1]} : vector<16x8xf32> to vector<16x7xf32>
    %326 = vector.extract_strided_slice %324 {offsets = [0, 0], sizes = [16, 1], strides = [1, 1]} : vector<16x8xf32> to vector<16x1xf32>
    %327 = tpu.concatenate %325, %326 in 1 : vector<16x7xf32>, vector<16x1xf32> -> vector<16x8xf32>
    %328 = vector.extract_strided_slice %251 {offsets = [0, 8], sizes = [16, 8], strides = [1, 1]} : vector<16x16xf32> to vector<16x8xf32>
    %329 = vector.extract_strided_slice %328 {offsets = [0, 1], sizes = [16, 7], strides = [1, 1]} : vector<16x8xf32> to vector<16x7xf32>
    %330 = vector.extract_strided_slice %328 {offsets = [0, 0], sizes = [16, 1], strides = [1, 1]} : vector<16x8xf32> to vector<16x1xf32>
    %331 = tpu.concatenate %329, %330 in 1 : vector<16x7xf32>, vector<16x1xf32> -> vector<16x8xf32>
    %332 = tpu.concatenate %327, %331 in 1 : vector<16x8xf32>, vector<16x8xf32> -> vector<16x16xf32>
    %333 = tpu.concatenate %260, %269, %278, %247, %287, %296, %305, %314, %323, %251, %332 in 0 : vector<16x16xf32>, vector<16x16xf32>, vector<16x16xf32>, vector<16x16xf32>, vector<16x16xf32>, vector<16x16xf32>, vector<16x16xf32>, vector<16x16xf32>, vector<16x16xf32>, vector<16x16xf32>, vector<16x16xf32> -> vector<176x16xf32>
    %c0_64 = arith.constant 0 : index
    %c0_65 = arith.constant 0 : index
    %334 = vector.load %arg12[%c0_64, %c0_65] : memref<32x176xf32, #tpu.memory_space<vmem>>, vector<32x176xf32>
    %cst_66 = arith.constant dense<0.000000e+00> : vector<32x16xf32>
    %335 = tpu.matmul %334, %333, %cst_66 {dimension_numbers = #tpu.dot_dimension_numbers<[1], [0], [0], [1], [0, 0, 1, 1], [], []>} : vector<32x176xf32>, vector<176x16xf32>, vector<32x16xf32> -> vector<32x16xf32>
    %c0_67 = arith.constant 0 : index
    %c0_68 = arith.constant 0 : index
    %336 = vector.load %arg13[%c0_67, %c0_68] : memref<32x1xf32, #tpu.memory_space<vmem>>, vector<32x1xf32>
    %337 = vector.broadcast %336 : vector<32x1xf32> to vector<32x16xf32>
    %338 = arith.addf %335, %337 : vector<32x16xf32>
    %cst_69 = arith.constant 0.000000e+00 : f32
    %339 = vector.broadcast %cst_69 : f32 to vector<32x16xf32>
    %340 = arith.maximumf %338, %339 : vector<32x16xf32>
    %cst_70 = arith.constant dense<0.000000e+00> : vector<32xf32>
    %341 = vector.multi_reduction <add>, %340, %cst_70 [1] : vector<32x16xf32> to vector<32xf32>
    %342 = vector.shape_cast %341 : vector<32xf32> to vector<32x1xf32>
    %cst_71 = arith.constant 0.000000e+00 : f32
    %343 = vector.broadcast %cst_71 : f32 to vector<32x1xf32>
    %344 = arith.addf %343, %342 : vector<32x1xf32>
    %cst_72 = arith.constant 6.250000e-02 : f32
    %345 = vector.broadcast %cst_72 : f32 to vector<32x1xf32>
    %346 = arith.mulf %344, %345 : vector<32x1xf32>
    %347 = vector.broadcast %346 : vector<32x1xf32> to vector<32x16xf32>
    %348 = arith.subf %340, %347 : vector<32x16xf32>
    %349 = vector.broadcast %346 : vector<32x1xf32> to vector<32x16xf32>
    %350 = arith.subf %340, %349 : vector<32x16xf32>
    %351 = arith.mulf %348, %350 : vector<32x16xf32>
    %cst_73 = arith.constant dense<0.000000e+00> : vector<32xf32>
    %352 = vector.multi_reduction <add>, %351, %cst_73 [1] : vector<32x16xf32> to vector<32xf32>
    %353 = vector.shape_cast %352 : vector<32xf32> to vector<32x1xf32>
    %cst_74 = arith.constant 0.000000e+00 : f32
    %354 = vector.broadcast %cst_74 : f32 to vector<32x1xf32>
    %355 = arith.addf %354, %353 : vector<32x1xf32>
    %cst_75 = arith.constant 6.250000e-02 : f32
    %356 = vector.broadcast %cst_75 : f32 to vector<32x1xf32>
    %357 = arith.mulf %355, %356 : vector<32x1xf32>
    %cst_76 = arith.constant 9.99999974E-6 : f32
    %358 = vector.broadcast %cst_76 : f32 to vector<32x1xf32>
    %359 = arith.addf %357, %358 : vector<32x1xf32>
    %360 = math.rsqrt %359 : vector<32x1xf32>
    %361 = vector.broadcast %346 : vector<32x1xf32> to vector<32x16xf32>
    %362 = arith.subf %340, %361 : vector<32x16xf32>
    %363 = vector.broadcast %360 : vector<32x1xf32> to vector<32x16xf32>
    %364 = arith.mulf %362, %363 : vector<32x16xf32>
    %c0_77 = arith.constant 0 : index
    %c0_78 = arith.constant 0 : index
    %365 = vector.load %arg14[%c0_77, %c0_78] : memref<32x1xf32, #tpu.memory_space<vmem>>, vector<32x1xf32>
    %366 = vector.broadcast %365 : vector<32x1xf32> to vector<32x16xf32>
    %367 = arith.mulf %364, %366 : vector<32x16xf32>
    %c0_79 = arith.constant 0 : index
    %c0_80 = arith.constant 0 : index
    %368 = vector.load %arg15[%c0_79, %c0_80] : memref<32x1xf32, #tpu.memory_space<vmem>>, vector<32x1xf32>
    %369 = vector.broadcast %368 : vector<32x1xf32> to vector<32x16xf32>
    %370 = arith.addf %367, %369 : vector<32x16xf32>
    %371 = vector.extract_strided_slice %370 {offsets = [0, 0], sizes = [32, 8], strides = [1, 1]} : vector<32x16xf32> to vector<32x8xf32>
    %372 = vector.extract_strided_slice %371 {offsets = [0, 2], sizes = [32, 6], strides = [1, 1]} : vector<32x8xf32> to vector<32x6xf32>
    %cst_81 = arith.constant 0.000000e+00 : f32
    %373 = vector.broadcast %cst_81 : f32 to vector<32x2xf32>
    %374 = tpu.concatenate %372, %373 in 1 : vector<32x6xf32>, vector<32x2xf32> -> vector<32x8xf32>
    %375 = vector.extract_strided_slice %370 {offsets = [0, 8], sizes = [32, 8], strides = [1, 1]} : vector<32x16xf32> to vector<32x8xf32>
    %376 = vector.extract_strided_slice %375 {offsets = [0, 2], sizes = [32, 6], strides = [1, 1]} : vector<32x8xf32> to vector<32x6xf32>
    %cst_82 = arith.constant 0.000000e+00 : f32
    %377 = vector.broadcast %cst_82 : f32 to vector<32x2xf32>
    %378 = tpu.concatenate %376, %377 in 1 : vector<32x6xf32>, vector<32x2xf32> -> vector<32x8xf32>
    %379 = tpu.concatenate %374, %378 in 1 : vector<32x8xf32>, vector<32x8xf32> -> vector<32x16xf32>
    %380 = vector.extract_strided_slice %370 {offsets = [0, 0], sizes = [32, 8], strides = [1, 1]} : vector<32x16xf32> to vector<32x8xf32>
    %381 = vector.extract_strided_slice %380 {offsets = [0, 1], sizes = [32, 7], strides = [1, 1]} : vector<32x8xf32> to vector<32x7xf32>
    %cst_83 = arith.constant 0.000000e+00 : f32
    %382 = vector.broadcast %cst_83 : f32 to vector<32x1xf32>
    %383 = tpu.concatenate %381, %382 in 1 : vector<32x7xf32>, vector<32x1xf32> -> vector<32x8xf32>
    %384 = vector.extract_strided_slice %370 {offsets = [0, 8], sizes = [32, 8], strides = [1, 1]} : vector<32x16xf32> to vector<32x8xf32>
    %385 = vector.extract_strided_slice %384 {offsets = [0, 1], sizes = [32, 7], strides = [1, 1]} : vector<32x8xf32> to vector<32x7xf32>
    %cst_84 = arith.constant 0.000000e+00 : f32
    %386 = vector.broadcast %cst_84 : f32 to vector<32x1xf32>
    %387 = tpu.concatenate %385, %386 in 1 : vector<32x7xf32>, vector<32x1xf32> -> vector<32x8xf32>
    %388 = tpu.concatenate %383, %387 in 1 : vector<32x8xf32>, vector<32x8xf32> -> vector<32x16xf32>
    %389 = vector.extract_strided_slice %370 {offsets = [0, 0], sizes = [32, 8], strides = [1, 1]} : vector<32x16xf32> to vector<32x8xf32>
    %cst_85 = arith.constant 0.000000e+00 : f32
    %390 = vector.broadcast %cst_85 : f32 to vector<32x1xf32>
    %391 = vector.extract_strided_slice %389 {offsets = [0, 0], sizes = [32, 7], strides = [1, 1]} : vector<32x8xf32> to vector<32x7xf32>
    %392 = tpu.concatenate %390, %391 in 1 : vector<32x1xf32>, vector<32x7xf32> -> vector<32x8xf32>
    %393 = vector.extract_strided_slice %370 {offsets = [0, 8], sizes = [32, 8], strides = [1, 1]} : vector<32x16xf32> to vector<32x8xf32>
    %cst_86 = arith.constant 0.000000e+00 : f32
    %394 = vector.broadcast %cst_86 : f32 to vector<32x1xf32>
    %395 = vector.extract_strided_slice %393 {offsets = [0, 0], sizes = [32, 7], strides = [1, 1]} : vector<32x8xf32> to vector<32x7xf32>
    %396 = tpu.concatenate %394, %395 in 1 : vector<32x1xf32>, vector<32x7xf32> -> vector<32x8xf32>
    %397 = tpu.concatenate %392, %396 in 1 : vector<32x8xf32>, vector<32x8xf32> -> vector<32x16xf32>
    %398 = vector.extract_strided_slice %370 {offsets = [0, 0], sizes = [32, 8], strides = [1, 1]} : vector<32x16xf32> to vector<32x8xf32>
    %cst_87 = arith.constant 0.000000e+00 : f32
    %399 = vector.broadcast %cst_87 : f32 to vector<32x2xf32>
    %400 = vector.extract_strided_slice %398 {offsets = [0, 0], sizes = [32, 6], strides = [1, 1]} : vector<32x8xf32> to vector<32x6xf32>
    %401 = tpu.concatenate %399, %400 in 1 : vector<32x2xf32>, vector<32x6xf32> -> vector<32x8xf32>
    %402 = vector.extract_strided_slice %370 {offsets = [0, 8], sizes = [32, 8], strides = [1, 1]} : vector<32x16xf32> to vector<32x8xf32>
    %cst_88 = arith.constant 0.000000e+00 : f32
    %403 = vector.broadcast %cst_88 : f32 to vector<32x2xf32>
    %404 = vector.extract_strided_slice %402 {offsets = [0, 0], sizes = [32, 6], strides = [1, 1]} : vector<32x8xf32> to vector<32x6xf32>
    %405 = tpu.concatenate %403, %404 in 1 : vector<32x2xf32>, vector<32x6xf32> -> vector<32x8xf32>
    %406 = tpu.concatenate %401, %405 in 1 : vector<32x8xf32>, vector<32x8xf32> -> vector<32x16xf32>
    %407 = tpu.concatenate %379, %388, %370, %397, %406 in 0 : vector<32x16xf32>, vector<32x16xf32>, vector<32x16xf32>, vector<32x16xf32>, vector<32x16xf32> -> vector<160x16xf32>
    %c0_89 = arith.constant 0 : index
    %c0_90 = arith.constant 0 : index
    %408 = vector.load %arg16[%c0_89, %c0_90] : memref<64x160xf32, #tpu.memory_space<vmem>>, vector<64x160xf32>
    %cst_91 = arith.constant dense<0.000000e+00> : vector<64x16xf32>
    %409 = tpu.matmul %408, %407, %cst_91 {dimension_numbers = #tpu.dot_dimension_numbers<[1], [0], [0], [1], [0, 0, 1, 1], [], []>} : vector<64x160xf32>, vector<160x16xf32>, vector<64x16xf32> -> vector<64x16xf32>
    %410 = vector.extract_strided_slice %409 {offsets = [0, 0], sizes = [32, 16], strides = [1, 1]} : vector<64x16xf32> to vector<32x16xf32>
    %c0_92 = arith.constant 0 : index
    %c0_93 = arith.constant 0 : index
    %411 = vector.load %arg17[%c0_92, %c0_93] : memref<32x1xf32, #tpu.memory_space<vmem>>, vector<32x1xf32>
    %412 = vector.broadcast %411 : vector<32x1xf32> to vector<32x16xf32>
    %413 = arith.addf %410, %412 : vector<32x16xf32>
    %cst_94 = arith.constant 0.000000e+00 : f32
    %414 = vector.broadcast %cst_94 : f32 to vector<32x16xf32>
    %415 = arith.maximumf %413, %414 : vector<32x16xf32>
    %416 = vector.extract_strided_slice %409 {offsets = [32, 0], sizes = [32, 16], strides = [1, 1]} : vector<64x16xf32> to vector<32x16xf32>
    %c0_95 = arith.constant 0 : index
    %c0_96 = arith.constant 0 : index
    %417 = vector.load %arg17[%c0_95, %c0_96] : memref<32x1xf32, #tpu.memory_space<vmem>>, vector<32x1xf32>
    %418 = vector.broadcast %417 : vector<32x1xf32> to vector<32x16xf32>
    %419 = arith.addf %416, %418 : vector<32x16xf32>
    %cst_97 = arith.constant 0.000000e+00 : f32
    %420 = vector.broadcast %cst_97 : f32 to vector<32x16xf32>
    %421 = arith.maximumf %419, %420 : vector<32x16xf32>
    %cst_98 = arith.constant dense<0.000000e+00> : vector<32xf32>
    %422 = vector.multi_reduction <add>, %415, %cst_98 [1] : vector<32x16xf32> to vector<32xf32>
    %423 = vector.shape_cast %422 : vector<32xf32> to vector<32x1xf32>
    %cst_99 = arith.constant 0.000000e+00 : f32
    %424 = vector.broadcast %cst_99 : f32 to vector<32x1xf32>
    %425 = arith.addf %424, %423 : vector<32x1xf32>
    %cst_100 = arith.constant dense<0.000000e+00> : vector<32xf32>
    %426 = vector.multi_reduction <add>, %421, %cst_100 [1] : vector<32x16xf32> to vector<32xf32>
    %427 = vector.shape_cast %426 : vector<32xf32> to vector<32x1xf32>
    %428 = arith.addf %425, %427 : vector<32x1xf32>
    %cst_101 = arith.constant 3.125000e-02 : f32
    %429 = vector.broadcast %cst_101 : f32 to vector<32x1xf32>
    %430 = arith.mulf %428, %429 : vector<32x1xf32>
    %431 = vector.broadcast %430 : vector<32x1xf32> to vector<32x16xf32>
    %432 = arith.subf %415, %431 : vector<32x16xf32>
    %433 = vector.broadcast %430 : vector<32x1xf32> to vector<32x16xf32>
    %434 = arith.subf %415, %433 : vector<32x16xf32>
    %435 = arith.mulf %432, %434 : vector<32x16xf32>
    %cst_102 = arith.constant dense<0.000000e+00> : vector<32xf32>
    %436 = vector.multi_reduction <add>, %435, %cst_102 [1] : vector<32x16xf32> to vector<32xf32>
    %437 = vector.shape_cast %436 : vector<32xf32> to vector<32x1xf32>
    %cst_103 = arith.constant 0.000000e+00 : f32
    %438 = vector.broadcast %cst_103 : f32 to vector<32x1xf32>
    %439 = arith.addf %438, %437 : vector<32x1xf32>
    %440 = vector.broadcast %430 : vector<32x1xf32> to vector<32x16xf32>
    %441 = arith.subf %421, %440 : vector<32x16xf32>
    %442 = vector.broadcast %430 : vector<32x1xf32> to vector<32x16xf32>
    %443 = arith.subf %421, %442 : vector<32x16xf32>
    %444 = arith.mulf %441, %443 : vector<32x16xf32>
    %cst_104 = arith.constant dense<0.000000e+00> : vector<32xf32>
    %445 = vector.multi_reduction <add>, %444, %cst_104 [1] : vector<32x16xf32> to vector<32xf32>
    %446 = vector.shape_cast %445 : vector<32xf32> to vector<32x1xf32>
    %447 = arith.addf %439, %446 : vector<32x1xf32>
    %cst_105 = arith.constant 3.125000e-02 : f32
    %448 = vector.broadcast %cst_105 : f32 to vector<32x1xf32>
    %449 = arith.mulf %447, %448 : vector<32x1xf32>
    %cst_106 = arith.constant 9.99999974E-6 : f32
    %450 = vector.broadcast %cst_106 : f32 to vector<32x1xf32>
    %451 = arith.addf %449, %450 : vector<32x1xf32>
    %452 = math.rsqrt %451 : vector<32x1xf32>
    %453 = vector.broadcast %430 : vector<32x1xf32> to vector<32x16xf32>
    %454 = arith.subf %415, %453 : vector<32x16xf32>
    %455 = vector.broadcast %452 : vector<32x1xf32> to vector<32x16xf32>
    %456 = arith.mulf %454, %455 : vector<32x16xf32>
    %c0_107 = arith.constant 0 : index
    %c0_108 = arith.constant 0 : index
    %457 = vector.load %arg18[%c0_107, %c0_108] : memref<32x1xf32, #tpu.memory_space<vmem>>, vector<32x1xf32>
    %458 = vector.broadcast %457 : vector<32x1xf32> to vector<32x16xf32>
    %459 = arith.mulf %456, %458 : vector<32x16xf32>
    %c0_109 = arith.constant 0 : index
    %c0_110 = arith.constant 0 : index
    %460 = vector.load %arg19[%c0_109, %c0_110] : memref<32x1xf32, #tpu.memory_space<vmem>>, vector<32x1xf32>
    %461 = vector.broadcast %460 : vector<32x1xf32> to vector<32x16xf32>
    %462 = arith.addf %459, %461 : vector<32x16xf32>
    %463 = vector.broadcast %430 : vector<32x1xf32> to vector<32x16xf32>
    %464 = arith.subf %421, %463 : vector<32x16xf32>
    %465 = vector.broadcast %452 : vector<32x1xf32> to vector<32x16xf32>
    %466 = arith.mulf %464, %465 : vector<32x16xf32>
    %c0_111 = arith.constant 0 : index
    %c0_112 = arith.constant 0 : index
    %467 = vector.load %arg18[%c0_111, %c0_112] : memref<32x1xf32, #tpu.memory_space<vmem>>, vector<32x1xf32>
    %468 = vector.broadcast %467 : vector<32x1xf32> to vector<32x16xf32>
    %469 = arith.mulf %466, %468 : vector<32x16xf32>
    %c0_113 = arith.constant 0 : index
    %c0_114 = arith.constant 0 : index
    %470 = vector.load %arg19[%c0_113, %c0_114] : memref<32x1xf32, #tpu.memory_space<vmem>>, vector<32x1xf32>
    %471 = vector.broadcast %470 : vector<32x1xf32> to vector<32x16xf32>
    %472 = arith.addf %469, %471 : vector<32x16xf32>
    %473 = vector.extract_strided_slice %462 {offsets = [0, 0], sizes = [32, 8], strides = [1, 1]} : vector<32x16xf32> to vector<32x8xf32>
    %474 = vector.extract_strided_slice %473 {offsets = [0, 1], sizes = [32, 7], strides = [1, 1]} : vector<32x8xf32> to vector<32x7xf32>
    %cst_115 = arith.constant 0.000000e+00 : f32
    %475 = vector.broadcast %cst_115 : f32 to vector<32x1xf32>
    %476 = tpu.concatenate %474, %475 in 1 : vector<32x7xf32>, vector<32x1xf32> -> vector<32x8xf32>
    %477 = vector.extract_strided_slice %462 {offsets = [0, 8], sizes = [32, 8], strides = [1, 1]} : vector<32x16xf32> to vector<32x8xf32>
    %478 = vector.extract_strided_slice %477 {offsets = [0, 1], sizes = [32, 7], strides = [1, 1]} : vector<32x8xf32> to vector<32x7xf32>
    %cst_116 = arith.constant 0.000000e+00 : f32
    %479 = vector.broadcast %cst_116 : f32 to vector<32x1xf32>
    %480 = tpu.concatenate %478, %479 in 1 : vector<32x7xf32>, vector<32x1xf32> -> vector<32x8xf32>
    %481 = tpu.concatenate %476, %480 in 1 : vector<32x8xf32>, vector<32x8xf32> -> vector<32x16xf32>
    %482 = vector.extract_strided_slice %472 {offsets = [0, 0], sizes = [32, 8], strides = [1, 1]} : vector<32x16xf32> to vector<32x8xf32>
    %cst_117 = arith.constant 0.000000e+00 : f32
    %483 = vector.broadcast %cst_117 : f32 to vector<32x1xf32>
    %484 = vector.extract_strided_slice %482 {offsets = [0, 0], sizes = [32, 7], strides = [1, 1]} : vector<32x8xf32> to vector<32x7xf32>
    %485 = tpu.concatenate %483, %484 in 1 : vector<32x1xf32>, vector<32x7xf32> -> vector<32x8xf32>
    %486 = vector.extract_strided_slice %472 {offsets = [0, 8], sizes = [32, 8], strides = [1, 1]} : vector<32x16xf32> to vector<32x8xf32>
    %cst_118 = arith.constant 0.000000e+00 : f32
    %487 = vector.broadcast %cst_118 : f32 to vector<32x1xf32>
    %488 = vector.extract_strided_slice %486 {offsets = [0, 0], sizes = [32, 7], strides = [1, 1]} : vector<32x8xf32> to vector<32x7xf32>
    %489 = tpu.concatenate %487, %488 in 1 : vector<32x1xf32>, vector<32x7xf32> -> vector<32x8xf32>
    %490 = tpu.concatenate %485, %489 in 1 : vector<32x8xf32>, vector<32x8xf32> -> vector<32x16xf32>
    %491 = tpu.concatenate %462, %481, %490, %472 in 0 : vector<32x16xf32>, vector<32x16xf32>, vector<32x16xf32>, vector<32x16xf32> -> vector<128x16xf32>
    %c0_119 = arith.constant 0 : index
    %c0_120 = arith.constant 0 : index
    %492 = vector.load %arg20[%c0_119, %c0_120] : memref<32x128xf32, #tpu.memory_space<vmem>>, vector<32x128xf32>
    %cst_121 = arith.constant dense<0.000000e+00> : vector<32x16xf32>
    %493 = tpu.matmul %492, %491, %cst_121 {dimension_numbers = #tpu.dot_dimension_numbers<[1], [0], [0], [1], [0, 0, 1, 1], [], []>} : vector<32x128xf32>, vector<128x16xf32>, vector<32x16xf32> -> vector<32x16xf32>
    %494 = vector.extract_strided_slice %493 {offsets = [0, 0], sizes = [16, 16], strides = [1, 1]} : vector<32x16xf32> to vector<16x16xf32>
    %c0_122 = arith.constant 0 : index
    %c0_123 = arith.constant 0 : index
    %495 = vector.load %arg21[%c0_122, %c0_123] : memref<16x1xf32, #tpu.memory_space<vmem>>, vector<16x1xf32>
    %496 = vector.broadcast %495 : vector<16x1xf32> to vector<16x16xf32>
    %497 = arith.addf %494, %496 : vector<16x16xf32>
    %498 = vector.extract_strided_slice %493 {offsets = [16, 0], sizes = [16, 16], strides = [1, 1]} : vector<32x16xf32> to vector<16x16xf32>
    %c0_124 = arith.constant 0 : index
    %c0_125 = arith.constant 0 : index
    %499 = vector.load %arg21[%c0_124, %c0_125] : memref<16x1xf32, #tpu.memory_space<vmem>>, vector<16x1xf32>
    %500 = vector.broadcast %499 : vector<16x1xf32> to vector<16x16xf32>
    %501 = arith.addf %498, %500 : vector<16x16xf32>
    %502 = arith.addf %497, %247 : vector<16x16xf32>
    %503 = arith.addf %501, %251 : vector<16x16xf32>
    %504 = vector.extract_strided_slice %502 {offsets = [0, 0], sizes = [16, 8], strides = [1, 1]} : vector<16x16xf32> to vector<16x8xf32>
    %505 = vector.extract_strided_slice %504 {offsets = [0, 5], sizes = [16, 3], strides = [1, 1]} : vector<16x8xf32> to vector<16x3xf32>
    %506 = vector.extract_strided_slice %504 {offsets = [0, 0], sizes = [16, 5], strides = [1, 1]} : vector<16x8xf32> to vector<16x5xf32>
    %507 = tpu.concatenate %505, %506 in 1 : vector<16x3xf32>, vector<16x5xf32> -> vector<16x8xf32>
    %508 = vector.extract_strided_slice %502 {offsets = [0, 8], sizes = [16, 8], strides = [1, 1]} : vector<16x16xf32> to vector<16x8xf32>
    %509 = vector.extract_strided_slice %508 {offsets = [0, 5], sizes = [16, 3], strides = [1, 1]} : vector<16x8xf32> to vector<16x3xf32>
    %510 = vector.extract_strided_slice %508 {offsets = [0, 0], sizes = [16, 5], strides = [1, 1]} : vector<16x8xf32> to vector<16x5xf32>
    %511 = tpu.concatenate %509, %510 in 1 : vector<16x3xf32>, vector<16x5xf32> -> vector<16x8xf32>
    %512 = tpu.concatenate %507, %511 in 1 : vector<16x8xf32>, vector<16x8xf32> -> vector<16x16xf32>
    %513 = vector.extract_strided_slice %502 {offsets = [0, 0], sizes = [16, 8], strides = [1, 1]} : vector<16x16xf32> to vector<16x8xf32>
    %514 = vector.extract_strided_slice %513 {offsets = [0, 6], sizes = [16, 2], strides = [1, 1]} : vector<16x8xf32> to vector<16x2xf32>
    %515 = vector.extract_strided_slice %513 {offsets = [0, 0], sizes = [16, 6], strides = [1, 1]} : vector<16x8xf32> to vector<16x6xf32>
    %516 = tpu.concatenate %514, %515 in 1 : vector<16x2xf32>, vector<16x6xf32> -> vector<16x8xf32>
    %517 = vector.extract_strided_slice %502 {offsets = [0, 8], sizes = [16, 8], strides = [1, 1]} : vector<16x16xf32> to vector<16x8xf32>
    %518 = vector.extract_strided_slice %517 {offsets = [0, 6], sizes = [16, 2], strides = [1, 1]} : vector<16x8xf32> to vector<16x2xf32>
    %519 = vector.extract_strided_slice %517 {offsets = [0, 0], sizes = [16, 6], strides = [1, 1]} : vector<16x8xf32> to vector<16x6xf32>
    %520 = tpu.concatenate %518, %519 in 1 : vector<16x2xf32>, vector<16x6xf32> -> vector<16x8xf32>
    %521 = tpu.concatenate %516, %520 in 1 : vector<16x8xf32>, vector<16x8xf32> -> vector<16x16xf32>
    %522 = vector.extract_strided_slice %502 {offsets = [0, 0], sizes = [16, 8], strides = [1, 1]} : vector<16x16xf32> to vector<16x8xf32>
    %523 = vector.extract_strided_slice %522 {offsets = [0, 7], sizes = [16, 1], strides = [1, 1]} : vector<16x8xf32> to vector<16x1xf32>
    %524 = vector.extract_strided_slice %522 {offsets = [0, 0], sizes = [16, 7], strides = [1, 1]} : vector<16x8xf32> to vector<16x7xf32>
    %525 = tpu.concatenate %523, %524 in 1 : vector<16x1xf32>, vector<16x7xf32> -> vector<16x8xf32>
    %526 = vector.extract_strided_slice %502 {offsets = [0, 8], sizes = [16, 8], strides = [1, 1]} : vector<16x16xf32> to vector<16x8xf32>
    %527 = vector.extract_strided_slice %526 {offsets = [0, 7], sizes = [16, 1], strides = [1, 1]} : vector<16x8xf32> to vector<16x1xf32>
    %528 = vector.extract_strided_slice %526 {offsets = [0, 0], sizes = [16, 7], strides = [1, 1]} : vector<16x8xf32> to vector<16x7xf32>
    %529 = tpu.concatenate %527, %528 in 1 : vector<16x1xf32>, vector<16x7xf32> -> vector<16x8xf32>
    %530 = tpu.concatenate %525, %529 in 1 : vector<16x8xf32>, vector<16x8xf32> -> vector<16x16xf32>
    %531 = vector.extract_strided_slice %502 {offsets = [0, 0], sizes = [16, 8], strides = [1, 1]} : vector<16x16xf32> to vector<16x8xf32>
    %532 = vector.extract_strided_slice %531 {offsets = [0, 1], sizes = [16, 7], strides = [1, 1]} : vector<16x8xf32> to vector<16x7xf32>
    %533 = vector.extract_strided_slice %531 {offsets = [0, 0], sizes = [16, 1], strides = [1, 1]} : vector<16x8xf32> to vector<16x1xf32>
    %534 = tpu.concatenate %532, %533 in 1 : vector<16x7xf32>, vector<16x1xf32> -> vector<16x8xf32>
    %535 = vector.extract_strided_slice %502 {offsets = [0, 8], sizes = [16, 8], strides = [1, 1]} : vector<16x16xf32> to vector<16x8xf32>
    %536 = vector.extract_strided_slice %535 {offsets = [0, 1], sizes = [16, 7], strides = [1, 1]} : vector<16x8xf32> to vector<16x7xf32>
    %537 = vector.extract_strided_slice %535 {offsets = [0, 0], sizes = [16, 1], strides = [1, 1]} : vector<16x8xf32> to vector<16x1xf32>
    %538 = tpu.concatenate %536, %537 in 1 : vector<16x7xf32>, vector<16x1xf32> -> vector<16x8xf32>
    %539 = tpu.concatenate %534, %538 in 1 : vector<16x8xf32>, vector<16x8xf32> -> vector<16x16xf32>
    %540 = vector.extract_strided_slice %502 {offsets = [0, 0], sizes = [16, 8], strides = [1, 1]} : vector<16x16xf32> to vector<16x8xf32>
    %541 = vector.extract_strided_slice %540 {offsets = [0, 2], sizes = [16, 6], strides = [1, 1]} : vector<16x8xf32> to vector<16x6xf32>
    %542 = vector.extract_strided_slice %540 {offsets = [0, 0], sizes = [16, 2], strides = [1, 1]} : vector<16x8xf32> to vector<16x2xf32>
    %543 = tpu.concatenate %541, %542 in 1 : vector<16x6xf32>, vector<16x2xf32> -> vector<16x8xf32>
    %544 = vector.extract_strided_slice %502 {offsets = [0, 8], sizes = [16, 8], strides = [1, 1]} : vector<16x16xf32> to vector<16x8xf32>
    %545 = vector.extract_strided_slice %544 {offsets = [0, 2], sizes = [16, 6], strides = [1, 1]} : vector<16x8xf32> to vector<16x6xf32>
    %546 = vector.extract_strided_slice %544 {offsets = [0, 0], sizes = [16, 2], strides = [1, 1]} : vector<16x8xf32> to vector<16x2xf32>
    %547 = tpu.concatenate %545, %546 in 1 : vector<16x6xf32>, vector<16x2xf32> -> vector<16x8xf32>
    %548 = tpu.concatenate %543, %547 in 1 : vector<16x8xf32>, vector<16x8xf32> -> vector<16x16xf32>
    %549 = vector.extract_strided_slice %502 {offsets = [0, 0], sizes = [16, 8], strides = [1, 1]} : vector<16x16xf32> to vector<16x8xf32>
    %550 = vector.extract_strided_slice %549 {offsets = [0, 3], sizes = [16, 5], strides = [1, 1]} : vector<16x8xf32> to vector<16x5xf32>
    %551 = vector.extract_strided_slice %549 {offsets = [0, 0], sizes = [16, 3], strides = [1, 1]} : vector<16x8xf32> to vector<16x3xf32>
    %552 = tpu.concatenate %550, %551 in 1 : vector<16x5xf32>, vector<16x3xf32> -> vector<16x8xf32>
    %553 = vector.extract_strided_slice %502 {offsets = [0, 8], sizes = [16, 8], strides = [1, 1]} : vector<16x16xf32> to vector<16x8xf32>
    %554 = vector.extract_strided_slice %553 {offsets = [0, 3], sizes = [16, 5], strides = [1, 1]} : vector<16x8xf32> to vector<16x5xf32>
    %555 = vector.extract_strided_slice %553 {offsets = [0, 0], sizes = [16, 3], strides = [1, 1]} : vector<16x8xf32> to vector<16x3xf32>
    %556 = tpu.concatenate %554, %555 in 1 : vector<16x5xf32>, vector<16x3xf32> -> vector<16x8xf32>
    %557 = tpu.concatenate %552, %556 in 1 : vector<16x8xf32>, vector<16x8xf32> -> vector<16x16xf32>
    %558 = vector.extract_strided_slice %503 {offsets = [0, 0], sizes = [16, 8], strides = [1, 1]} : vector<16x16xf32> to vector<16x8xf32>
    %559 = vector.extract_strided_slice %558 {offsets = [0, 6], sizes = [16, 2], strides = [1, 1]} : vector<16x8xf32> to vector<16x2xf32>
    %560 = vector.extract_strided_slice %558 {offsets = [0, 0], sizes = [16, 6], strides = [1, 1]} : vector<16x8xf32> to vector<16x6xf32>
    %561 = tpu.concatenate %559, %560 in 1 : vector<16x2xf32>, vector<16x6xf32> -> vector<16x8xf32>
    %562 = vector.extract_strided_slice %503 {offsets = [0, 8], sizes = [16, 8], strides = [1, 1]} : vector<16x16xf32> to vector<16x8xf32>
    %563 = vector.extract_strided_slice %562 {offsets = [0, 6], sizes = [16, 2], strides = [1, 1]} : vector<16x8xf32> to vector<16x2xf32>
    %564 = vector.extract_strided_slice %562 {offsets = [0, 0], sizes = [16, 6], strides = [1, 1]} : vector<16x8xf32> to vector<16x6xf32>
    %565 = tpu.concatenate %563, %564 in 1 : vector<16x2xf32>, vector<16x6xf32> -> vector<16x8xf32>
    %566 = tpu.concatenate %561, %565 in 1 : vector<16x8xf32>, vector<16x8xf32> -> vector<16x16xf32>
    %567 = vector.extract_strided_slice %503 {offsets = [0, 0], sizes = [16, 8], strides = [1, 1]} : vector<16x16xf32> to vector<16x8xf32>
    %568 = vector.extract_strided_slice %567 {offsets = [0, 7], sizes = [16, 1], strides = [1, 1]} : vector<16x8xf32> to vector<16x1xf32>
    %569 = vector.extract_strided_slice %567 {offsets = [0, 0], sizes = [16, 7], strides = [1, 1]} : vector<16x8xf32> to vector<16x7xf32>
    %570 = tpu.concatenate %568, %569 in 1 : vector<16x1xf32>, vector<16x7xf32> -> vector<16x8xf32>
    %571 = vector.extract_strided_slice %503 {offsets = [0, 8], sizes = [16, 8], strides = [1, 1]} : vector<16x16xf32> to vector<16x8xf32>
    %572 = vector.extract_strided_slice %571 {offsets = [0, 7], sizes = [16, 1], strides = [1, 1]} : vector<16x8xf32> to vector<16x1xf32>
    %573 = vector.extract_strided_slice %571 {offsets = [0, 0], sizes = [16, 7], strides = [1, 1]} : vector<16x8xf32> to vector<16x7xf32>
    %574 = tpu.concatenate %572, %573 in 1 : vector<16x1xf32>, vector<16x7xf32> -> vector<16x8xf32>
    %575 = tpu.concatenate %570, %574 in 1 : vector<16x8xf32>, vector<16x8xf32> -> vector<16x16xf32>
    %576 = vector.extract_strided_slice %503 {offsets = [0, 0], sizes = [16, 8], strides = [1, 1]} : vector<16x16xf32> to vector<16x8xf32>
    %577 = vector.extract_strided_slice %576 {offsets = [0, 1], sizes = [16, 7], strides = [1, 1]} : vector<16x8xf32> to vector<16x7xf32>
    %578 = vector.extract_strided_slice %576 {offsets = [0, 0], sizes = [16, 1], strides = [1, 1]} : vector<16x8xf32> to vector<16x1xf32>
    %579 = tpu.concatenate %577, %578 in 1 : vector<16x7xf32>, vector<16x1xf32> -> vector<16x8xf32>
    %580 = vector.extract_strided_slice %503 {offsets = [0, 8], sizes = [16, 8], strides = [1, 1]} : vector<16x16xf32> to vector<16x8xf32>
    %581 = vector.extract_strided_slice %580 {offsets = [0, 1], sizes = [16, 7], strides = [1, 1]} : vector<16x8xf32> to vector<16x7xf32>
    %582 = vector.extract_strided_slice %580 {offsets = [0, 0], sizes = [16, 1], strides = [1, 1]} : vector<16x8xf32> to vector<16x1xf32>
    %583 = tpu.concatenate %581, %582 in 1 : vector<16x7xf32>, vector<16x1xf32> -> vector<16x8xf32>
    %584 = tpu.concatenate %579, %583 in 1 : vector<16x8xf32>, vector<16x8xf32> -> vector<16x16xf32>
    %585 = tpu.concatenate %512, %521, %530, %502, %539, %548, %557, %566, %575, %503, %584 in 0 : vector<16x16xf32>, vector<16x16xf32>, vector<16x16xf32>, vector<16x16xf32>, vector<16x16xf32>, vector<16x16xf32>, vector<16x16xf32>, vector<16x16xf32>, vector<16x16xf32>, vector<16x16xf32>, vector<16x16xf32> -> vector<176x16xf32>
    %c0_126 = arith.constant 0 : index
    %c0_127 = arith.constant 0 : index
    %586 = vector.load %arg22[%c0_126, %c0_127] : memref<32x176xf32, #tpu.memory_space<vmem>>, vector<32x176xf32>
    %cst_128 = arith.constant dense<0.000000e+00> : vector<32x16xf32>
    %587 = tpu.matmul %586, %585, %cst_128 {dimension_numbers = #tpu.dot_dimension_numbers<[1], [0], [0], [1], [0, 0, 1, 1], [], []>} : vector<32x176xf32>, vector<176x16xf32>, vector<32x16xf32> -> vector<32x16xf32>
    %c0_129 = arith.constant 0 : index
    %c0_130 = arith.constant 0 : index
    %588 = vector.load %arg23[%c0_129, %c0_130] : memref<32x1xf32, #tpu.memory_space<vmem>>, vector<32x1xf32>
    %589 = vector.broadcast %588 : vector<32x1xf32> to vector<32x16xf32>
    %590 = arith.addf %587, %589 : vector<32x16xf32>
    %cst_131 = arith.constant 0.000000e+00 : f32
    %591 = vector.broadcast %cst_131 : f32 to vector<32x16xf32>
    %592 = arith.maximumf %590, %591 : vector<32x16xf32>
    %cst_132 = arith.constant dense<0.000000e+00> : vector<32xf32>
    %593 = vector.multi_reduction <add>, %592, %cst_132 [1] : vector<32x16xf32> to vector<32xf32>
    %594 = vector.shape_cast %593 : vector<32xf32> to vector<32x1xf32>
    %cst_133 = arith.constant 0.000000e+00 : f32
    %595 = vector.broadcast %cst_133 : f32 to vector<32x1xf32>
    %596 = arith.addf %595, %594 : vector<32x1xf32>
    %cst_134 = arith.constant 6.250000e-02 : f32
    %597 = vector.broadcast %cst_134 : f32 to vector<32x1xf32>
    %598 = arith.mulf %596, %597 : vector<32x1xf32>
    %599 = vector.broadcast %598 : vector<32x1xf32> to vector<32x16xf32>
    %600 = arith.subf %592, %599 : vector<32x16xf32>
    %601 = vector.broadcast %598 : vector<32x1xf32> to vector<32x16xf32>
    %602 = arith.subf %592, %601 : vector<32x16xf32>
    %603 = arith.mulf %600, %602 : vector<32x16xf32>
    %cst_135 = arith.constant dense<0.000000e+00> : vector<32xf32>
    %604 = vector.multi_reduction <add>, %603, %cst_135 [1] : vector<32x16xf32> to vector<32xf32>
    %605 = vector.shape_cast %604 : vector<32xf32> to vector<32x1xf32>
    %cst_136 = arith.constant 0.000000e+00 : f32
    %606 = vector.broadcast %cst_136 : f32 to vector<32x1xf32>
    %607 = arith.addf %606, %605 : vector<32x1xf32>
    %cst_137 = arith.constant 6.250000e-02 : f32
    %608 = vector.broadcast %cst_137 : f32 to vector<32x1xf32>
    %609 = arith.mulf %607, %608 : vector<32x1xf32>
    %cst_138 = arith.constant 9.99999974E-6 : f32
    %610 = vector.broadcast %cst_138 : f32 to vector<32x1xf32>
    %611 = arith.addf %609, %610 : vector<32x1xf32>
    %612 = math.rsqrt %611 : vector<32x1xf32>
    %613 = vector.broadcast %598 : vector<32x1xf32> to vector<32x16xf32>
    %614 = arith.subf %592, %613 : vector<32x16xf32>
    %615 = vector.broadcast %612 : vector<32x1xf32> to vector<32x16xf32>
    %616 = arith.mulf %614, %615 : vector<32x16xf32>
    %c0_139 = arith.constant 0 : index
    %c0_140 = arith.constant 0 : index
    %617 = vector.load %arg24[%c0_139, %c0_140] : memref<32x1xf32, #tpu.memory_space<vmem>>, vector<32x1xf32>
    %618 = vector.broadcast %617 : vector<32x1xf32> to vector<32x16xf32>
    %619 = arith.mulf %616, %618 : vector<32x16xf32>
    %c0_141 = arith.constant 0 : index
    %c0_142 = arith.constant 0 : index
    %620 = vector.load %arg25[%c0_141, %c0_142] : memref<32x1xf32, #tpu.memory_space<vmem>>, vector<32x1xf32>
    %621 = vector.broadcast %620 : vector<32x1xf32> to vector<32x16xf32>
    %622 = arith.addf %619, %621 : vector<32x16xf32>
    %623 = vector.extract_strided_slice %622 {offsets = [0, 0], sizes = [32, 8], strides = [1, 1]} : vector<32x16xf32> to vector<32x8xf32>
    %624 = vector.extract_strided_slice %623 {offsets = [0, 2], sizes = [32, 6], strides = [1, 1]} : vector<32x8xf32> to vector<32x6xf32>
    %cst_143 = arith.constant 0.000000e+00 : f32
    %625 = vector.broadcast %cst_143 : f32 to vector<32x2xf32>
    %626 = tpu.concatenate %624, %625 in 1 : vector<32x6xf32>, vector<32x2xf32> -> vector<32x8xf32>
    %627 = vector.extract_strided_slice %622 {offsets = [0, 8], sizes = [32, 8], strides = [1, 1]} : vector<32x16xf32> to vector<32x8xf32>
    %628 = vector.extract_strided_slice %627 {offsets = [0, 2], sizes = [32, 6], strides = [1, 1]} : vector<32x8xf32> to vector<32x6xf32>
    %cst_144 = arith.constant 0.000000e+00 : f32
    %629 = vector.broadcast %cst_144 : f32 to vector<32x2xf32>
    %630 = tpu.concatenate %628, %629 in 1 : vector<32x6xf32>, vector<32x2xf32> -> vector<32x8xf32>
    %631 = tpu.concatenate %626, %630 in 1 : vector<32x8xf32>, vector<32x8xf32> -> vector<32x16xf32>
    %632 = vector.extract_strided_slice %622 {offsets = [0, 0], sizes = [32, 8], strides = [1, 1]} : vector<32x16xf32> to vector<32x8xf32>
    %633 = vector.extract_strided_slice %632 {offsets = [0, 1], sizes = [32, 7], strides = [1, 1]} : vector<32x8xf32> to vector<32x7xf32>
    %cst_145 = arith.constant 0.000000e+00 : f32
    %634 = vector.broadcast %cst_145 : f32 to vector<32x1xf32>
    %635 = tpu.concatenate %633, %634 in 1 : vector<32x7xf32>, vector<32x1xf32> -> vector<32x8xf32>
    %636 = vector.extract_strided_slice %622 {offsets = [0, 8], sizes = [32, 8], strides = [1, 1]} : vector<32x16xf32> to vector<32x8xf32>
    %637 = vector.extract_strided_slice %636 {offsets = [0, 1], sizes = [32, 7], strides = [1, 1]} : vector<32x8xf32> to vector<32x7xf32>
    %cst_146 = arith.constant 0.000000e+00 : f32
    %638 = vector.broadcast %cst_146 : f32 to vector<32x1xf32>
    %639 = tpu.concatenate %637, %638 in 1 : vector<32x7xf32>, vector<32x1xf32> -> vector<32x8xf32>
    %640 = tpu.concatenate %635, %639 in 1 : vector<32x8xf32>, vector<32x8xf32> -> vector<32x16xf32>
    %641 = vector.extract_strided_slice %622 {offsets = [0, 0], sizes = [32, 8], strides = [1, 1]} : vector<32x16xf32> to vector<32x8xf32>
    %cst_147 = arith.constant 0.000000e+00 : f32
    %642 = vector.broadcast %cst_147 : f32 to vector<32x1xf32>
    %643 = vector.extract_strided_slice %641 {offsets = [0, 0], sizes = [32, 7], strides = [1, 1]} : vector<32x8xf32> to vector<32x7xf32>
    %644 = tpu.concatenate %642, %643 in 1 : vector<32x1xf32>, vector<32x7xf32> -> vector<32x8xf32>
    %645 = vector.extract_strided_slice %622 {offsets = [0, 8], sizes = [32, 8], strides = [1, 1]} : vector<32x16xf32> to vector<32x8xf32>
    %cst_148 = arith.constant 0.000000e+00 : f32
    %646 = vector.broadcast %cst_148 : f32 to vector<32x1xf32>
    %647 = vector.extract_strided_slice %645 {offsets = [0, 0], sizes = [32, 7], strides = [1, 1]} : vector<32x8xf32> to vector<32x7xf32>
    %648 = tpu.concatenate %646, %647 in 1 : vector<32x1xf32>, vector<32x7xf32> -> vector<32x8xf32>
    %649 = tpu.concatenate %644, %648 in 1 : vector<32x8xf32>, vector<32x8xf32> -> vector<32x16xf32>
    %650 = vector.extract_strided_slice %622 {offsets = [0, 0], sizes = [32, 8], strides = [1, 1]} : vector<32x16xf32> to vector<32x8xf32>
    %cst_149 = arith.constant 0.000000e+00 : f32
    %651 = vector.broadcast %cst_149 : f32 to vector<32x2xf32>
    %652 = vector.extract_strided_slice %650 {offsets = [0, 0], sizes = [32, 6], strides = [1, 1]} : vector<32x8xf32> to vector<32x6xf32>
    %653 = tpu.concatenate %651, %652 in 1 : vector<32x2xf32>, vector<32x6xf32> -> vector<32x8xf32>
    %654 = vector.extract_strided_slice %622 {offsets = [0, 8], sizes = [32, 8], strides = [1, 1]} : vector<32x16xf32> to vector<32x8xf32>
    %cst_150 = arith.constant 0.000000e+00 : f32
    %655 = vector.broadcast %cst_150 : f32 to vector<32x2xf32>
    %656 = vector.extract_strided_slice %654 {offsets = [0, 0], sizes = [32, 6], strides = [1, 1]} : vector<32x8xf32> to vector<32x6xf32>
    %657 = tpu.concatenate %655, %656 in 1 : vector<32x2xf32>, vector<32x6xf32> -> vector<32x8xf32>
    %658 = tpu.concatenate %653, %657 in 1 : vector<32x8xf32>, vector<32x8xf32> -> vector<32x16xf32>
    %659 = tpu.concatenate %631, %640, %622, %649, %658 in 0 : vector<32x16xf32>, vector<32x16xf32>, vector<32x16xf32>, vector<32x16xf32>, vector<32x16xf32> -> vector<160x16xf32>
    %c0_151 = arith.constant 0 : index
    %c0_152 = arith.constant 0 : index
    %660 = vector.load %arg26[%c0_151, %c0_152] : memref<64x160xf32, #tpu.memory_space<vmem>>, vector<64x160xf32>
    %cst_153 = arith.constant dense<0.000000e+00> : vector<64x16xf32>
    %661 = tpu.matmul %660, %659, %cst_153 {dimension_numbers = #tpu.dot_dimension_numbers<[1], [0], [0], [1], [0, 0, 1, 1], [], []>} : vector<64x160xf32>, vector<160x16xf32>, vector<64x16xf32> -> vector<64x16xf32>
    %662 = vector.extract_strided_slice %661 {offsets = [0, 0], sizes = [32, 16], strides = [1, 1]} : vector<64x16xf32> to vector<32x16xf32>
    %c0_154 = arith.constant 0 : index
    %c0_155 = arith.constant 0 : index
    %663 = vector.load %arg27[%c0_154, %c0_155] : memref<32x1xf32, #tpu.memory_space<vmem>>, vector<32x1xf32>
    %664 = vector.broadcast %663 : vector<32x1xf32> to vector<32x16xf32>
    %665 = arith.addf %662, %664 : vector<32x16xf32>
    %cst_156 = arith.constant 0.000000e+00 : f32
    %666 = vector.broadcast %cst_156 : f32 to vector<32x16xf32>
    %667 = arith.maximumf %665, %666 : vector<32x16xf32>
    %668 = vector.extract_strided_slice %661 {offsets = [32, 0], sizes = [32, 16], strides = [1, 1]} : vector<64x16xf32> to vector<32x16xf32>
    %c0_157 = arith.constant 0 : index
    %c0_158 = arith.constant 0 : index
    %669 = vector.load %arg27[%c0_157, %c0_158] : memref<32x1xf32, #tpu.memory_space<vmem>>, vector<32x1xf32>
    %670 = vector.broadcast %669 : vector<32x1xf32> to vector<32x16xf32>
    %671 = arith.addf %668, %670 : vector<32x16xf32>
    %cst_159 = arith.constant 0.000000e+00 : f32
    %672 = vector.broadcast %cst_159 : f32 to vector<32x16xf32>
    %673 = arith.maximumf %671, %672 : vector<32x16xf32>
    %cst_160 = arith.constant dense<0.000000e+00> : vector<32xf32>
    %674 = vector.multi_reduction <add>, %667, %cst_160 [1] : vector<32x16xf32> to vector<32xf32>
    %675 = vector.shape_cast %674 : vector<32xf32> to vector<32x1xf32>
    %cst_161 = arith.constant 0.000000e+00 : f32
    %676 = vector.broadcast %cst_161 : f32 to vector<32x1xf32>
    %677 = arith.addf %676, %675 : vector<32x1xf32>
    %cst_162 = arith.constant dense<0.000000e+00> : vector<32xf32>
    %678 = vector.multi_reduction <add>, %673, %cst_162 [1] : vector<32x16xf32> to vector<32xf32>
    %679 = vector.shape_cast %678 : vector<32xf32> to vector<32x1xf32>
    %680 = arith.addf %677, %679 : vector<32x1xf32>
    %cst_163 = arith.constant 3.125000e-02 : f32
    %681 = vector.broadcast %cst_163 : f32 to vector<32x1xf32>
    %682 = arith.mulf %680, %681 : vector<32x1xf32>
    %683 = vector.broadcast %682 : vector<32x1xf32> to vector<32x16xf32>
    %684 = arith.subf %667, %683 : vector<32x16xf32>
    %685 = vector.broadcast %682 : vector<32x1xf32> to vector<32x16xf32>
    %686 = arith.subf %667, %685 : vector<32x16xf32>
    %687 = arith.mulf %684, %686 : vector<32x16xf32>
    %cst_164 = arith.constant dense<0.000000e+00> : vector<32xf32>
    %688 = vector.multi_reduction <add>, %687, %cst_164 [1] : vector<32x16xf32> to vector<32xf32>
    %689 = vector.shape_cast %688 : vector<32xf32> to vector<32x1xf32>
    %cst_165 = arith.constant 0.000000e+00 : f32
    %690 = vector.broadcast %cst_165 : f32 to vector<32x1xf32>
    %691 = arith.addf %690, %689 : vector<32x1xf32>
    %692 = vector.broadcast %682 : vector<32x1xf32> to vector<32x16xf32>
    %693 = arith.subf %673, %692 : vector<32x16xf32>
    %694 = vector.broadcast %682 : vector<32x1xf32> to vector<32x16xf32>
    %695 = arith.subf %673, %694 : vector<32x16xf32>
    %696 = arith.mulf %693, %695 : vector<32x16xf32>
    %cst_166 = arith.constant dense<0.000000e+00> : vector<32xf32>
    %697 = vector.multi_reduction <add>, %696, %cst_166 [1] : vector<32x16xf32> to vector<32xf32>
    %698 = vector.shape_cast %697 : vector<32xf32> to vector<32x1xf32>
    %699 = arith.addf %691, %698 : vector<32x1xf32>
    %cst_167 = arith.constant 3.125000e-02 : f32
    %700 = vector.broadcast %cst_167 : f32 to vector<32x1xf32>
    %701 = arith.mulf %699, %700 : vector<32x1xf32>
    %cst_168 = arith.constant 9.99999974E-6 : f32
    %702 = vector.broadcast %cst_168 : f32 to vector<32x1xf32>
    %703 = arith.addf %701, %702 : vector<32x1xf32>
    %704 = math.rsqrt %703 : vector<32x1xf32>
    %705 = vector.broadcast %682 : vector<32x1xf32> to vector<32x16xf32>
    %706 = arith.subf %667, %705 : vector<32x16xf32>
    %707 = vector.broadcast %704 : vector<32x1xf32> to vector<32x16xf32>
    %708 = arith.mulf %706, %707 : vector<32x16xf32>
    %c0_169 = arith.constant 0 : index
    %c0_170 = arith.constant 0 : index
    %709 = vector.load %arg28[%c0_169, %c0_170] : memref<32x1xf32, #tpu.memory_space<vmem>>, vector<32x1xf32>
    %710 = vector.broadcast %709 : vector<32x1xf32> to vector<32x16xf32>
    %711 = arith.mulf %708, %710 : vector<32x16xf32>
    %c0_171 = arith.constant 0 : index
    %c0_172 = arith.constant 0 : index
    %712 = vector.load %arg29[%c0_171, %c0_172] : memref<32x1xf32, #tpu.memory_space<vmem>>, vector<32x1xf32>
    %713 = vector.broadcast %712 : vector<32x1xf32> to vector<32x16xf32>
    %714 = arith.addf %711, %713 : vector<32x16xf32>
    %715 = vector.broadcast %682 : vector<32x1xf32> to vector<32x16xf32>
    %716 = arith.subf %673, %715 : vector<32x16xf32>
    %717 = vector.broadcast %704 : vector<32x1xf32> to vector<32x16xf32>
    %718 = arith.mulf %716, %717 : vector<32x16xf32>
    %c0_173 = arith.constant 0 : index
    %c0_174 = arith.constant 0 : index
    %719 = vector.load %arg28[%c0_173, %c0_174] : memref<32x1xf32, #tpu.memory_space<vmem>>, vector<32x1xf32>
    %720 = vector.broadcast %719 : vector<32x1xf32> to vector<32x16xf32>
    %721 = arith.mulf %718, %720 : vector<32x16xf32>
    %c0_175 = arith.constant 0 : index
    %c0_176 = arith.constant 0 : index
    %722 = vector.load %arg29[%c0_175, %c0_176] : memref<32x1xf32, #tpu.memory_space<vmem>>, vector<32x1xf32>
    %723 = vector.broadcast %722 : vector<32x1xf32> to vector<32x16xf32>
    %724 = arith.addf %721, %723 : vector<32x16xf32>
    %725 = vector.extract_strided_slice %714 {offsets = [0, 0], sizes = [32, 8], strides = [1, 1]} : vector<32x16xf32> to vector<32x8xf32>
    %726 = vector.extract_strided_slice %725 {offsets = [0, 1], sizes = [32, 7], strides = [1, 1]} : vector<32x8xf32> to vector<32x7xf32>
    %cst_177 = arith.constant 0.000000e+00 : f32
    %727 = vector.broadcast %cst_177 : f32 to vector<32x1xf32>
    %728 = tpu.concatenate %726, %727 in 1 : vector<32x7xf32>, vector<32x1xf32> -> vector<32x8xf32>
    %729 = vector.extract_strided_slice %714 {offsets = [0, 8], sizes = [32, 8], strides = [1, 1]} : vector<32x16xf32> to vector<32x8xf32>
    %730 = vector.extract_strided_slice %729 {offsets = [0, 1], sizes = [32, 7], strides = [1, 1]} : vector<32x8xf32> to vector<32x7xf32>
    %cst_178 = arith.constant 0.000000e+00 : f32
    %731 = vector.broadcast %cst_178 : f32 to vector<32x1xf32>
    %732 = tpu.concatenate %730, %731 in 1 : vector<32x7xf32>, vector<32x1xf32> -> vector<32x8xf32>
    %733 = tpu.concatenate %728, %732 in 1 : vector<32x8xf32>, vector<32x8xf32> -> vector<32x16xf32>
    %734 = vector.extract_strided_slice %724 {offsets = [0, 0], sizes = [32, 8], strides = [1, 1]} : vector<32x16xf32> to vector<32x8xf32>
    %cst_179 = arith.constant 0.000000e+00 : f32
    %735 = vector.broadcast %cst_179 : f32 to vector<32x1xf32>
    %736 = vector.extract_strided_slice %734 {offsets = [0, 0], sizes = [32, 7], strides = [1, 1]} : vector<32x8xf32> to vector<32x7xf32>
    %737 = tpu.concatenate %735, %736 in 1 : vector<32x1xf32>, vector<32x7xf32> -> vector<32x8xf32>
    %738 = vector.extract_strided_slice %724 {offsets = [0, 8], sizes = [32, 8], strides = [1, 1]} : vector<32x16xf32> to vector<32x8xf32>
    %cst_180 = arith.constant 0.000000e+00 : f32
    %739 = vector.broadcast %cst_180 : f32 to vector<32x1xf32>
    %740 = vector.extract_strided_slice %738 {offsets = [0, 0], sizes = [32, 7], strides = [1, 1]} : vector<32x8xf32> to vector<32x7xf32>
    %741 = tpu.concatenate %739, %740 in 1 : vector<32x1xf32>, vector<32x7xf32> -> vector<32x8xf32>
    %742 = tpu.concatenate %737, %741 in 1 : vector<32x8xf32>, vector<32x8xf32> -> vector<32x16xf32>
    %743 = tpu.concatenate %714, %733, %742, %724 in 0 : vector<32x16xf32>, vector<32x16xf32>, vector<32x16xf32>, vector<32x16xf32> -> vector<128x16xf32>
    %c0_181 = arith.constant 0 : index
    %c0_182 = arith.constant 0 : index
    %744 = vector.load %arg30[%c0_181, %c0_182] : memref<16x128xf32, #tpu.memory_space<vmem>>, vector<16x128xf32>
    %cst_183 = arith.constant dense<0.000000e+00> : vector<16x16xf32>
    %745 = tpu.matmul %744, %743, %cst_183 {dimension_numbers = #tpu.dot_dimension_numbers<[1], [0], [0], [1], [0, 0, 1, 1], [], []>} : vector<16x128xf32>, vector<128x16xf32>, vector<16x16xf32> -> vector<16x16xf32>
    %746 = vector.extract_strided_slice %745 {offsets = [0, 0], sizes = [8, 16], strides = [1, 1]} : vector<16x16xf32> to vector<8x16xf32>
    %c0_184 = arith.constant 0 : index
    %c0_185 = arith.constant 0 : index
    %747 = vector.load %arg31[%c0_184, %c0_185] : memref<8x1xf32, #tpu.memory_space<vmem>>, vector<8x1xf32>
    %748 = vector.broadcast %747 : vector<8x1xf32> to vector<8x16xf32>
    %749 = arith.addf %746, %748 : vector<8x16xf32>
    %750 = vector.extract_strided_slice %745 {offsets = [8, 0], sizes = [8, 16], strides = [1, 1]} : vector<16x16xf32> to vector<8x16xf32>
    %c0_186 = arith.constant 0 : index
    %c0_187 = arith.constant 0 : index
    %751 = vector.load %arg31[%c0_186, %c0_187] : memref<8x1xf32, #tpu.memory_space<vmem>>, vector<8x1xf32>
    %752 = vector.broadcast %751 : vector<8x1xf32> to vector<8x16xf32>
    %753 = arith.addf %750, %752 : vector<8x16xf32>
    %c0_188 = arith.constant 0 : index
    %c0_189 = arith.constant 0 : index
    %754 = vector.load %arg32[%c0_188, %c0_189] : memref<8x16xf32, #tpu.memory_space<vmem>>, vector<8x16xf32>
    tpu.vector_store %arg32[%c0_188, %c0_189], %749 {strides = array<i32>} : memref<8x16xf32, #tpu.memory_space<vmem>>, vector<8x16xf32>,
    %c0_190 = arith.constant 0 : index
    %c0_191 = arith.constant 0 : index
    %755 = vector.load %arg33[%c0_190, %c0_191] : memref<8x16xf32, #tpu.memory_space<vmem>>, vector<8x16xf32>
    tpu.vector_store %arg33[%c0_190, %c0_191], %753 {strides = array<i32>} : memref<8x16xf32, #tpu.memory_space<vmem>>, vector<8x16xf32>,
    return
  }
}

</mosaic_0001>

<llo_original>
// kernel: net_forward.1
$region0: #{net_forward.1}
  #allocation0 [shape = 'u32[]', space=smem, size = 0x4, offset = 0x4, fixed_abs, tag = 'smem constant byte address 0x4 - core index']
  #allocation1 [shape = 'u32[72,128]{1,0:T(1,128)}', space=vmem, size = 0x9000, scoped, tag = 'internal scratch']
  %s0 = inlined_call_operand.smem [shape: u32[34], index: -1, kind: input, shape index: {}]
  %s1 = sld [smem:[%s0]]
  %s2 = scalar_lea.smem %s0, 1
  %s3 = sld [smem:[%s2]]
  %s4 = scalar_lea.smem %s0, 2
  %s5 = sld [smem:[%s4]]
  %s6 = scalar_lea.smem %s0, 3
  %s7 = sld [smem:[%s6]]
  %s8 = scalar_lea.smem %s0, 4
  %s9 = sld [smem:[%s8]]
  %s10 = scalar_lea.smem %s0, 5
  %s11 = sld [smem:[%s10]]
  %s12 = scalar_lea.smem %s0, 6
  %s13 = sld [smem:[%s12]]
  %s14 = scalar_lea.smem %s0, 7
  %s15 = sld [smem:[%s14]]
  %s16 = scalar_lea.smem %s0, 8
  %s17 = sld [smem:[%s16]]
  %s18 = scalar_lea.smem %s0, 9
  %s19 = sld [smem:[%s18]]
  %s20 = scalar_lea.smem %s0, 10
  %s21 = sld [smem:[%s20]]
  %s22 = scalar_lea.smem %s0, 11
  %s23 = sld [smem:[%s22]]
  %s24 = scalar_lea.smem %s0, 12
  %s25 = sld [smem:[%s24]]
  %s26 = scalar_lea.smem %s0, 13
  %s27 = sld [smem:[%s26]]
  %s28 = scalar_lea.smem %s0, 14
  %s29 = sld [smem:[%s28]]
  %s30 = scalar_lea.smem %s0, 15
  %s31 = sld [smem:[%s30]]
  %s32 = scalar_lea.smem %s0, 16
  %s33 = sld [smem:[%s32]]
  %s34 = scalar_lea.smem %s0, 17
  %s35 = sld [smem:[%s34]]
  %s36 = scalar_lea.smem %s0, 18
  %s37 = sld [smem:[%s36]]
  %s38 = scalar_lea.smem %s0, 19
  %s39 = sld [smem:[%s38]]
  %s40 = scalar_lea.smem %s0, 20
  %s41 = sld [smem:[%s40]]
  %s42 = scalar_lea.smem %s0, 21
  %s43 = sld [smem:[%s42]]
  %s44 = scalar_lea.smem %s0, 22
  %s45 = sld [smem:[%s44]]
  %s46 = scalar_lea.smem %s0, 23
  %s47 = sld [smem:[%s46]]
  %s48 = scalar_lea.smem %s0, 24
  %s49 = sld [smem:[%s48]]
  %s50 = scalar_lea.smem %s0, 25
  %s51 = sld [smem:[%s50]]
  %s52 = scalar_lea.smem %s0, 26
  %s53 = sld [smem:[%s52]]
  %s54 = scalar_lea.smem %s0, 27
  %s55 = sld [smem:[%s54]]
  %s56 = scalar_lea.smem %s0, 28
  %s57 = sld [smem:[%s56]]
  %s58 = scalar_lea.smem %s0, 29
  %s59 = sld [smem:[%s58]]
  %s60 = scalar_lea.smem %s0, 30
  %s61 = sld [smem:[%s60]]
  %s62 = scalar_lea.smem %s0, 31
  %s63 = sld [smem:[%s62]]
  %s64 = scalar_lea.smem %s0, 32
  %s65 = sld [smem:[%s64]]
  %s66 = scalar_lea.smem %s0, 33
  %s67 = sld [smem:[%s66]]
  %68 = xla_tuple %s65, %s67
  %s69 = sld [smem:[#allocation0]]
  $region158: #{net_forward.1} parent=0
    _
  %s71 = ssub.s32 1, %s69
  %s72 = scalar_select 0, %s71, %s69
  $region1: #{net_forward.1} parent=0
    #allocation2 [shape = 'u8[81920]{0}', space=vmem, size = 0x14000, scoped, tag = 'input window, operand 6, single buffered']
    #allocation3 [shape = 's32[1]{0}', space=sflag, size = 0x4, scoped, tag = 'scoped memory for net_forward.1']
    #allocation4 [shape = 'u8[65536]{0}', space=vmem, size = 0x10000, scoped, tag = 'input window, operand 16, single buffered']
    #allocation5 [shape = 's32[1]{0}', space=sflag, size = 0x4, scoped, tag = 'scoped memory for net_forward.1']
    #allocation6 [shape = 'u8[65536]{0}', space=vmem, size = 0x10000, scoped, tag = 'input window, operand 26, single buffered']
    %73 = vsyncpa [#allocation3], 0
    %74 = vsyncpa [#allocation5], 0
    // Predicated region
    $region2: #{net_forward.1} parent=1 // pred_check
      _
    $region3: #{net_forward.1} parent=1 // pred_check_branch
      %76 = sbr.rel (0) target = $region5
    $region4: #{net_forward.1} parent=1 // pred_region
      _
    $region5: #{net_forward.1} parent=1 // pred_fallthru
      _
    // Predicated region
    $region6: #{net_forward.1} parent=1 // pred_check
      _
    $region7: #{net_forward.1} parent=1 // pred_check_branch
      %78 = sbr.rel (0) target = $region9
    $region8: #{net_forward.1} parent=1 // pred_region
      _
    $region9: #{net_forward.1} parent=1 // pred_fallthru
      _
    // Predicated region
    $region10: #{net_forward.1} parent=1 // pred_check
      _
    $region11: #{net_forward.1} parent=1 // pred_check_branch
      %80 = sbr.rel (0) target = $region13
    $region12: #{net_forward.1} parent=1 // pred_region
      _
    $region13: #{net_forward.1} parent=1 // pred_fallthru
      _
    // Predicated region
    $region14: #{net_forward.1} parent=1 // pred_check
      _
    $region15: #{net_forward.1} parent=1 // pred_check_branch
      %82 = sbr.rel (0) target = $region17
    $region16: #{net_forward.1} parent=1 // pred_region
      _
    $region17: #{net_forward.1} parent=1 // pred_fallthru
      _
    // Predicated region
    $region18: #{net_forward.1} parent=1 // pred_check
      _
    $region19: #{net_forward.1} parent=1 // pred_check_branch
      %84 = sbr.rel (0) target = $region21
    $region20: #{net_forward.1} parent=1 // pred_region
      _
    $region21: #{net_forward.1} parent=1 // pred_fallthru
      _
    // Predicated region
    $region22: #{net_forward.1} parent=1 // pred_check
      _
    $region23: #{net_forward.1} parent=1 // pred_check_branch
      %86 = sbr.rel (0) target = $region25
    $region24: #{net_forward.1} parent=1 // pred_region
      _
    $region25: #{net_forward.1} parent=1 // pred_fallthru
      _
    // Predicated region
    $region26: #{net_forward.1} parent=1 // pred_check
      _
    $region27: #{net_forward.1} parent=1 // pred_check_branch
      %88 = sbr.rel (0) target = $region29
    $region28: #{net_forward.1} parent=1 // pred_region
      %90 = vsyncadd [#allocation3], 0
      %s91 = sshll.u32 %s13, 4
      %s92 = int_to_ptr.hbm [resolvable:$true] %s91
      %s93 = sshll.u32 [#allocation2], 4
      %s94 = int_to_ptr.vmem [resolvable:$true] %s93
      %99 = dma.hbm_to_vmem [thread:$0]  %s92, 2560, %s94, [#allocation3], 256, 256, 16
    $region29: #{net_forward.1} parent=1 // pred_fallthru
      _
    // Predicated region
    $region30: #{net_forward.1} parent=1 // pred_check
      _
    $region31: #{net_forward.1} parent=1 // pred_check_branch
      %101 = sbr.rel (0) target = $region33
    $region32: #{net_forward.1} parent=1 // pred_region
      _
    $region33: #{net_forward.1} parent=1 // pred_fallthru
      _
    // Predicated region
    $region34: #{net_forward.1} parent=1 // pred_check
      _
    $region35: #{net_forward.1} parent=1 // pred_check_branch
      %103 = sbr.rel (0) target = $region37
    $region36: #{net_forward.1} parent=1 // pred_region
      _
    $region37: #{net_forward.1} parent=1 // pred_fallthru
      _
    // Predicated region
    $region38: #{net_forward.1} parent=1 // pred_check
      _
    $region39: #{net_forward.1} parent=1 // pred_check_branch
      %105 = sbr.rel (0) target = $region41
    $region40: #{net_forward.1} parent=1 // pred_region
      _
    $region41: #{net_forward.1} parent=1 // pred_fallthru
      _
    // Predicated region
    $region42: #{net_forward.1} parent=1 // pred_check
      _
    $region43: #{net_forward.1} parent=1 // pred_check_branch
      %107 = sbr.rel (0) target = $region45
    $region44: #{net_forward.1} parent=1 // pred_region
      _
    $region45: #{net_forward.1} parent=1 // pred_fallthru
      _
    // Predicated region
    $region46: #{net_forward.1} parent=1 // pred_check
      _
    $region47: #{net_forward.1} parent=1 // pred_check_branch
      %109 = sbr.rel (0) target = $region49
    $region48: #{net_forward.1} parent=1 // pred_region
      _
    $region49: #{net_forward.1} parent=1 // pred_fallthru
      _
    // Predicated region
    $region50: #{net_forward.1} parent=1 // pred_check
      _
    $region51: #{net_forward.1} parent=1 // pred_check_branch
      %111 = sbr.rel (0) target = $region53
    $region52: #{net_forward.1} parent=1 // pred_region
      _
    $region53: #{net_forward.1} parent=1 // pred_fallthru
      _
    // Predicated region
    $region54: #{net_forward.1} parent=1 // pred_check
      _
    $region55: #{net_forward.1} parent=1 // pred_check_branch
      %113 = sbr.rel (0) target = $region57
    $region56: #{net_forward.1} parent=1 // pred_region
      _
    $region57: #{net_forward.1} parent=1 // pred_fallthru
      _
    // Predicated region
    $region58: #{net_forward.1} parent=1 // pred_check
      _
    $region59: #{net_forward.1} parent=1 // pred_check_branch
      %115 = sbr.rel (0) target = $region61
    $region60: #{net_forward.1} parent=1 // pred_region
      _
    $region61: #{net_forward.1} parent=1 // pred_fallthru
      _
    // Predicated region
    $region62: #{net_forward.1} parent=1 // pred_check
      _
    $region63: #{net_forward.1} parent=1 // pred_check_branch
      %117 = sbr.rel (0) target = $region65
    $region64: #{net_forward.1} parent=1 // pred_region
      _
    $region65: #{net_forward.1} parent=1 // pred_fallthru
      _
    // Predicated region
    $region66: #{net_forward.1} parent=1 // pred_check
      _
    $region67: #{net_forward.1} parent=1 // pred_check_branch
      %119 = sbr.rel (0) target = $region69
    $region68: #{net_forward.1} parent=1 // pred_region
      %121 = vsyncadd [#allocation5], 0
      %s122 = sshll.u32 %s33, 4
      %s123 = int_to_ptr.hbm [resolvable:$true] %s122
      %s124 = sshll.u32 [#allocation4], 4
      %s125 = int_to_ptr.vmem [resolvable:$true] %s124
      %130 = dma.hbm_to_vmem [thread:$0]  %s123, 2048, %s125, [#allocation5], 256, 256, 16
    $region69: #{net_forward.1} parent=1 // pred_fallthru
      _
    // Predicated region
    $region70: #{net_forward.1} parent=1 // pred_check
      _
    $region71: #{net_forward.1} parent=1 // pred_check_branch
      %132 = sbr.rel (0) target = $region73
    $region72: #{net_forward.1} parent=1 // pred_region
      _
    $region73: #{net_forward.1} parent=1 // pred_fallthru
      _
    // Predicated region
    $region74: #{net_forward.1} parent=1 // pred_check
      _
    $region75: #{net_forward.1} parent=1 // pred_check_branch
      %134 = sbr.rel (0) target = $region77
    $region76: #{net_forward.1} parent=1 // pred_region
      _
    $region77: #{net_forward.1} parent=1 // pred_fallthru
      _
    // Predicated region
    $region78: #{net_forward.1} parent=1 // pred_check
      _
    $region79: #{net_forward.1} parent=1 // pred_check_branch
      %136 = sbr.rel (0) target = $region81
    $region80: #{net_forward.1} parent=1 // pred_region
      _
    $region81: #{net_forward.1} parent=1 // pred_fallthru
      _
    // Predicated region
    $region82: #{net_forward.1} parent=1 // pred_check
      _
    $region83: #{net_forward.1} parent=1 // pred_check_branch
      %138 = sbr.rel (0) target = $region85
    $region84: #{net_forward.1} parent=1 // pred_region
      _
    $region85: #{net_forward.1} parent=1 // pred_fallthru
      _
    // Predicated region
    $region86: #{net_forward.1} parent=1 // pred_check
      _
    $region87: #{net_forward.1} parent=1 // pred_check_branch
      %140 = sbr.rel (0) target = $region89
    $region88: #{net_forward.1} parent=1 // pred_region
      _
    $region89: #{net_forward.1} parent=1 // pred_fallthru
      _
    // Predicated region
    $region90: #{net_forward.1} parent=1 // pred_check
      _
    $region91: #{net_forward.1} parent=1 // pred_check_branch
      %142 = sbr.rel (0) target = $region93
    $region92: #{net_forward.1} parent=1 // pred_region
      _
    $region93: #{net_forward.1} parent=1 // pred_fallthru
      _
    // Predicated region
    $region94: #{net_forward.1} parent=1 // pred_check
      _
    $region95: #{net_forward.1} parent=1 // pred_check_branch
      %144 = sbr.rel (0) target = $region97
    $region96: #{net_forward.1} parent=1 // pred_region
      _
    $region97: #{net_forward.1} parent=1 // pred_fallthru
      _
    // Predicated region
    $region98: #{net_forward.1} parent=1 // pred_check
      _
    $region99: #{net_forward.1} parent=1 // pred_check_branch
      %146 = sbr.rel (0) target = $region101
    $region100: #{net_forward.1} parent=1 // pred_region
      _
    $region101: #{net_forward.1} parent=1 // pred_fallthru
      _
    // Predicated region
    $region102: #{net_forward.1} parent=1 // pred_check
      _
    $region103: #{net_forward.1} parent=1 // pred_check_branch
      %148 = sbr.rel (0) target = $region105
    $region104: #{net_forward.1} parent=1 // pred_region
      _
    $region105: #{net_forward.1} parent=1 // pred_fallthru
      _
    // Predicated region
    $region106: #{net_forward.1} parent=1 // pred_check
      _
    $region107: #{net_forward.1} parent=1 // pred_check_branch
      %150 = sbr.rel (0) target = $region109
    $region108: #{net_forward.1} parent=1 // pred_region
      %152 = vsyncadd [#allocation5], 0
      %s153 = sshll.u32 %s53, 4
      %s154 = int_to_ptr.hbm [resolvable:$true] %s153
      %s155 = sshll.u32 [#allocation6], 4
      %s156 = int_to_ptr.vmem [resolvable:$true] %s155
      %161 = dma.hbm_to_vmem [thread:$0]  %s154, 2048, %s156, [#allocation5], 256, 256, 16
    $region109: #{net_forward.1} parent=1 // pred_fallthru
      _
    // Predicated region
    $region110: #{net_forward.1} parent=1 // pred_check
      _
    $region111: #{net_forward.1} parent=1 // pred_check_branch
      %163 = sbr.rel (0) target = $region113
    $region112: #{net_forward.1} parent=1 // pred_region
      _
    $region113: #{net_forward.1} parent=1 // pred_fallthru
      _
    // Predicated region
    $region114: #{net_forward.1} parent=1 // pred_check
      _
    $region115: #{net_forward.1} parent=1 // pred_check_branch
      %165 = sbr.rel (0) target = $region117
    $region116: #{net_forward.1} parent=1 // pred_region
      _
    $region117: #{net_forward.1} parent=1 // pred_fallthru
      _
    // Predicated region
    $region118: #{net_forward.1} parent=1 // pred_check
      _
    $region119: #{net_forward.1} parent=1 // pred_check_branch
      %167 = sbr.rel (0) target = $region121
    $region120: #{net_forward.1} parent=1 // pred_region
      _
    $region121: #{net_forward.1} parent=1 // pred_fallthru
      _
    // Predicated region
    $region122: #{net_forward.1} parent=1 // pred_check
      _
    $region123: #{net_forward.1} parent=1 // pred_check_branch
      %169 = sbr.rel (0) target = $region125
    $region124: #{net_forward.1} parent=1 // pred_region
      _
    $region125: #{net_forward.1} parent=1 // pred_fallthru
      _
    // Predicated region
    $region126: #{net_forward.1} parent=1 // pred_check
      _
    $region127: #{net_forward.1} parent=1 // pred_check_branch
      %171 = sbr.rel (0) target = $region129
    $region128: #{net_forward.1} parent=1 // pred_region
      _
    $region129: #{net_forward.1} parent=1 // pred_fallthru
      _
    // Predicated region
    $region130: #{net_forward.1} parent=1 // pred_check
      _
    $region131: #{net_forward.1} parent=1 // pred_check_branch
      %173 = sbr.rel (0) target = $region133
    $region132: #{net_forward.1} parent=1 // pred_region
      %175 = dma.done [#allocation3], 2560
    $region133: #{net_forward.1} parent=1 // pred_fallthru
      _
    // Predicated region
    $region134: #{net_forward.1} parent=1 // pred_check
      _
    $region135: #{net_forward.1} parent=1 // pred_check_branch
      %177 = sbr.rel (0) target = $region137
    $region136: #{net_forward.1} parent=1 // pred_region
      %179 = dma.done [#allocation5], 2048
    $region137: #{net_forward.1} parent=1 // pred_fallthru
      _
    // Predicated region
    $region138: #{net_forward.1} parent=1 // pred_check
      _
    $region139: #{net_forward.1} parent=1 // pred_check_branch
      %181 = sbr.rel (0) target = $region141
    $region140: #{net_forward.1} parent=1 // pred_region
      %183 = dma.done [#allocation5], 2048
    $region141: #{net_forward.1} parent=1 // pred_fallthru
      _
    %v184 = vld [vmem:[%s1] sm:$0xff]
    %v185 = vld [vmem:[%s3] sm:$0xff]
    %187 = vrot.lane.b32.xlu0 %v184, 123
    %v188 = vpop.permute.xlu0 %187
    %190 = vrot.lane.b32.xlu0 %v184, 3
    %v191 = vpop.permute.xlu0 %190
    %vm193 = vcmask 23552
    %v194 = vsel %vm193, %v188, %v191
    %195 = vrot.lane.b32.xlu0 %v184, 115
    %v196 = vpop.permute.xlu0 %195
    %v198 = vsel %vm193, %v196, %v188
    %200 = vrot.lane.b32.xlu0 %v198, 8
    %v201 = vpop.permute.xlu0 %200
    %vm203 = vcmask 64512
    %v204 = vsel %vm203, %v194, %v201
    %205 = vrot.lane.b32.xlu0 %v184, 122
    %v206 = vpop.permute.xlu0 %205
    %208 = vrot.lane.b32.xlu0 %v184, 2
    %v209 = vpop.permute.xlu0 %208
    %vm211 = vcmask 15360
    %v212 = vsel %vm211, %v206, %v209
    %213 = vrot.lane.b32.xlu0 %v184, 114
    %v214 = vpop.permute.xlu0 %213
    %v216 = vsel %vm211, %v214, %v206
    %218 = vrot.lane.b32.xlu0 %v216, 8
    %v219 = vpop.permute.xlu0 %218
    %v221 = vsel %vm203, %v212, %v219
    %222 = vrot.lane.b32.xlu0 %v184, 121
    %v223 = vpop.permute.xlu0 %222
    %225 = vrot.lane.b32.xlu0 %v184, 1
    %v226 = vpop.permute.xlu0 %225
    %vm228 = vcmask 7168
    %v229 = vsel %vm228, %v223, %v226
    %230 = vrot.lane.b32.xlu0 %v184, 113
    %v231 = vpop.permute.xlu0 %230
    %v233 = vsel %vm228, %v231, %v223
    %235 = vrot.lane.b32.xlu0 %v233, 8
    %v236 = vpop.permute.xlu0 %235
    %v238 = vsel %vm203, %v229, %v236
    %239 = vrot.lane.b32.xlu0 %v184, 127
    %v240 = vpop.permute.xlu0 %239
    %242 = vrot.lane.b32.xlu0 %v184, 7
    %v243 = vpop.permute.xlu0 %242
    %vm245 = vcmask 56320
    %v246 = vsel %vm245, %v240, %v243
    %247 = vrot.lane.b32.xlu0 %v184, 119
    %v248 = vpop.permute.xlu0 %247
    %v250 = vsel %vm245, %v248, %v240
    %252 = vrot.lane.b32.xlu0 %v250, 8
    %v253 = vpop.permute.xlu0 %252
    %v255 = vsel %vm203, %v246, %v253
    %256 = vrot.lane.b32.xlu0 %v184, 126
    %v257 = vpop.permute.xlu0 %256
    %259 = vrot.lane.b32.xlu0 %v184, 6
    %v260 = vpop.permute.xlu0 %259
    %vm262 = vcmask 48128
    %v263 = vsel %vm262, %v257, %v260
    %264 = vrot.lane.b32.xlu0 %v184, 118
    %v265 = vpop.permute.xlu0 %264
    %v267 = vsel %vm262, %v265, %v257
    %269 = vrot.lane.b32.xlu0 %v267, 8
    %v270 = vpop.permute.xlu0 %269
    %v272 = vsel %vm203, %v263, %v270
    %273 = vrot.lane.b32.xlu0 %v184, 125
    %v274 = vpop.permute.xlu0 %273
    %276 = vrot.lane.b32.xlu0 %v184, 5
    %v277 = vpop.permute.xlu0 %276
    %vm279 = vcmask 39936
    %v280 = vsel %vm279, %v274, %v277
    %281 = vrot.lane.b32.xlu0 %v184, 117
    %v282 = vpop.permute.xlu0 %281
    %v284 = vsel %vm279, %v282, %v274
    %286 = vrot.lane.b32.xlu0 %v284, 8
    %v287 = vpop.permute.xlu0 %286
    %v289 = vsel %vm203, %v280, %v287
    %291 = vrot.lane.b32.xlu0 %v185, 122
    %v292 = vpop.permute.xlu0 %291
    %294 = vrot.lane.b32.xlu0 %v185, 2
    %v295 = vpop.permute.xlu0 %294
    %v297 = vsel %vm211, %v292, %v295
    %298 = vrot.lane.b32.xlu0 %v185, 114
    %v299 = vpop.permute.xlu0 %298
    %v301 = vsel %vm211, %v299, %v292
    %303 = vrot.lane.b32.xlu0 %v301, 8
    %v304 = vpop.permute.xlu0 %303
    %v306 = vsel %vm203, %v297, %v304
    %307 = vrot.lane.b32.xlu0 %v185, 121
    %v308 = vpop.permute.xlu0 %307
    %310 = vrot.lane.b32.xlu0 %v185, 1
    %v311 = vpop.permute.xlu0 %310
    %v313 = vsel %vm228, %v308, %v311
    %314 = vrot.lane.b32.xlu0 %v185, 113
    %v315 = vpop.permute.xlu0 %314
    %v317 = vsel %vm228, %v315, %v308
    %319 = vrot.lane.b32.xlu0 %v317, 8
    %v320 = vpop.permute.xlu0 %319
    %v322 = vsel %vm203, %v313, %v320
    %323 = vrot.lane.b32.xlu0 %v185, 127
    %v324 = vpop.permute.xlu0 %323
    %326 = vrot.lane.b32.xlu0 %v185, 7
    %v327 = vpop.permute.xlu0 %326
    %v329 = vsel %vm245, %v324, %v327
    %330 = vrot.lane.b32.xlu0 %v185, 119
    %v331 = vpop.permute.xlu0 %330
    %v333 = vsel %vm245, %v331, %v324
    %335 = vrot.lane.b32.xlu0 %v333, 8
    %v336 = vpop.permute.xlu0 %335
    %v338 = vsel %vm203, %v329, %v336
    %v339 = vld [vmem:[%s5] sm:$0xff]
    %v340 = vld [vmem:[%s5 + $0x8] sm:$0xff]
    %v341 = vld [vmem:[%s5 + $0x10] sm:$0xff]
    %v342 = vld [vmem:[%s5 + $0x18] sm:$0xff]
    %v343 = vld [vmem:[%s5 + $0x20] sm:$0xff]
    %v344 = vld [vmem:[%s7] sm:$0xff]
    %v345 = vld [vmem:[%s7 + $0x8] sm:$0xff]
    %v346 = vld [vmem:[%s7 + $0x10] sm:$0xff]
    %v347 = vld [vmem:[%s7 + $0x18] sm:$0xff]
    %v348 = vld [vmem:[%s7 + $0x20] sm:$0xff]
    %350 = vset.pattern.permute.xlu0 0
    %351 = vperm.xlu0 %350, %v344
    %v352 = vpop.permute.xlu0 %351
    %355 = vset.pattern.permute.xlu0 0
    %356 = vperm.xlu0 %355, %v345
    %v357 = vpop.permute.xlu0 %356
    %360 = vset.pattern.permute.xlu0 0
    %361 = vperm.xlu0 %360, %v346
    %v362 = vpop.permute.xlu0 %361
    %365 = vset.pattern.permute.xlu0 0
    %366 = vperm.xlu0 %365, %v347
    %v367 = vpop.permute.xlu0 %366
    %370 = vset.pattern.permute.xlu0 0
    %371 = vperm.xlu0 %370, %v348
    %v372 = vpop.permute.xlu0 %371
    %vm374 = vcmask 719872
    %v376 = vsel %vm374, %v339, 0
    %v379 = vsel %vm374, %v340, 0
    %v382 = vsel %vm374, %v341, 0
    %v385 = vsel %vm374, %v342, 0
    %v388 = vsel %vm374, %v343, 0
    %390 = vmatpush.msra.mxu0 0.0
    %391 = vmatpush.msra.mxu0 0.0
    %392 = vmatpush.msra.mxu0 0.0
    %393 = vmatpush.msra.mxu0 0.0
    %394 = vmatpush.msra.mxu0 0.0
    %395 = vmatpush.msra.mxu0 %v338
    %396 = vmatpush.msra.mxu0 %v185
    %397 = vmatpush.msra.mxu0 %v322
    %398 = vmatpush.msra.mxu0 %v306
    %399 = vmatpush.msra.mxu0 %v289
    %400 = vmatpush.msra.mxu0 %v272
    %401 = vmatpush.msra.mxu0 %v255
    %402 = vmatpush.msra.mxu0 %v184
    %403 = vmatpush.msra.mxu0 %v238
    %404 = vmatpush.msra.mxu0 %v221
    %405 = vmatpush.msra.mxu0 %v204
    %406 = vmatmul.f32.gmra.mxu0 %v376
    %v407 = vpop.f32.mrf.mxu0
    %v408 = vadd.f32 %v352, %v407
    %409 = vmatmul.f32.gmra.mxu0 %v379
    %v410 = vpop.f32.mrf.mxu0
    %v411 = vadd.f32 %v357, %v410
    %412 = vmatmul.f32.gmra.mxu0 %v382
    %v413 = vpop.f32.mrf.mxu0
    %v414 = vadd.f32 %v362, %v413
    %415 = vmatmul.f32.gmra.mxu0 %v385
    %v416 = vpop.f32.mrf.mxu0
    %v417 = vadd.f32 %v367, %v416
    %418 = vmatmul.f32.gmra.mxu0 %v388
    %v419 = vpop.f32.mrf.mxu0
    %v420 = vadd.f32 %v372, %v419
    %421 = vdwg.mxu0
    %v422 = vmax.f32 %v408, 0.0
    %v423 = vmax.f32 %v411, 0.0
    %v424 = vmax.f32 %v414, 0.0
    %v425 = vmax.f32 %v417, 0.0
    %v426 = vmax.f32 %v420, 0.0
    %vm427 = vcmask 130048
    %v428 = vsel %vm427, %v422, 0.0
    %429 = vadd.xlane.f32.xlu0 %v428
    %v430 = vpop.xlane.xlu0 %429
    %v431 = vsel %vm427, %v423, 0.0
    %432 = vadd.xlane.f32.xlu0 %v431
    %v433 = vpop.xlane.xlu0 %432
    %v434 = vsel %vm427, %v424, 0.0
    %435 = vadd.xlane.f32.xlu0 %v434
    %v436 = vpop.xlane.xlu0 %435
    %v437 = vsel %vm427, %v425, 0.0
    %438 = vadd.xlane.f32.xlu0 %v437
    %v439 = vpop.xlane.xlu0 %438
    %v440 = vsel %vm427, %v426, 0.0
    %441 = vadd.xlane.f32.xlu0 %v440
    %v442 = vpop.xlane.xlu0 %441
    %v443 = vadd.f32 %v430, 0.0
    %v444 = vadd.f32 %v433, 0.0
    %v445 = vadd.f32 %v436, 0.0
    %v446 = vadd.f32 %v439, 0.0
    %v447 = vadd.f32 %v442, 0.0
    %v448 = vmul.f32 %v443, 0.0625
    %v449 = vmul.f32 %v444, 0.0625
    %v450 = vmul.f32 %v445, 0.0625
    %v451 = vmul.f32 %v446, 0.0625
    %v452 = vmul.f32 %v447, 0.0625
    %v453 = vsub.f32 %v422, %v448
    %v454 = vsub.f32 %v423, %v449
    %v455 = vsub.f32 %v424, %v450
    %v456 = vsub.f32 %v425, %v451
    %v457 = vsub.f32 %v426, %v452
    %v458 = vmul.f32 %v453, %v453
    %v459 = vmul.f32 %v454, %v454
    %v460 = vmul.f32 %v455, %v455
    %v461 = vmul.f32 %v456, %v456
    %v462 = vmul.f32 %v457, %v457
    %v463 = vsel %vm427, %v458, 0.0
    %464 = vadd.xlane.f32.xlu0 %v463
    %v465 = vpop.xlane.xlu0 %464
    %v466 = vsel %vm427, %v459, 0.0
    %467 = vadd.xlane.f32.xlu0 %v466
    %v468 = vpop.xlane.xlu0 %467
    %v469 = vsel %vm427, %v460, 0.0
    %470 = vadd.xlane.f32.xlu0 %v469
    %v471 = vpop.xlane.xlu0 %470
    %v472 = vsel %vm427, %v461, 0.0
    %473 = vadd.xlane.f32.xlu0 %v472
    %v474 = vpop.xlane.xlu0 %473
    %v475 = vsel %vm427, %v462, 0.0
    %476 = vadd.xlane.f32.xlu0 %v475
    %v477 = vpop.xlane.xlu0 %476
    %v478 = vadd.f32 %v465, 0.0
    %v479 = vadd.f32 %v468, 0.0
    %v480 = vadd.f32 %v471, 0.0
    %v481 = vadd.f32 %v474, 0.0
    %v482 = vadd.f32 %v477, 0.0
    %v483 = vmul.f32 %v478, 0.0625
    %v484 = vmul.f32 %v479, 0.0625
    %v485 = vmul.f32 %v480, 0.0625
    %v486 = vmul.f32 %v481, 0.0625
    %v487 = vmul.f32 %v482, 0.0625
    %v488 = vadd.f32 %v483, 1e-05
    %v489 = vadd.f32 %v484, 1e-05
    %v490 = vadd.f32 %v485, 1e-05
    %v491 = vadd.f32 %v486, 1e-05
    %v492 = vadd.f32 %v487, 1e-05
    %v493 = vrsqrt.pop %v488
    %v494 = vmul.f32 %v493, %v488
    %v495 = vmul.f32 %v494, %v493
    %v496 = vmul.f32 0.5, %v495
    %v497 = vsub.f32 1.5, %v496
    %v498 = vmul.f32 %v493, %v497
    %vm499 = vweird.f32 %v488
    %vm500 = vweird.f32 %v493
    %vm501 = vmor %vm499, %vm500
    %v502 = vsel %vm501, %v493, %v498
    %v503 = vrsqrt.pop %v489
    %v504 = vmul.f32 %v503, %v489
    %v505 = vmul.f32 %v504, %v503
    %v506 = vmul.f32 0.5, %v505
    %v507 = vsub.f32 1.5, %v506
    %v508 = vmul.f32 %v503, %v507
    %vm509 = vweird.f32 %v489
    %vm510 = vweird.f32 %v503
    %vm511 = vmor %vm509, %vm510
    %v512 = vsel %vm511, %v503, %v508
    %v513 = vrsqrt.pop %v490
    %v514 = vmul.f32 %v513, %v490
    %v515 = vmul.f32 %v514, %v513
    %v516 = vmul.f32 0.5, %v515
    %v517 = vsub.f32 1.5, %v516
    %v518 = vmul.f32 %v513, %v517
    %vm519 = vweird.f32 %v490
    %vm520 = vweird.f32 %v513
    %vm521 = vmor %vm519, %vm520
    %v522 = vsel %vm521, %v513, %v518
    %v523 = vrsqrt.pop %v491
    %v524 = vmul.f32 %v523, %v491
    %v525 = vmul.f32 %v524, %v523
    %v526 = vmul.f32 0.5, %v525
    %v527 = vsub.f32 1.5, %v526
    %v528 = vmul.f32 %v523, %v527
    %vm529 = vweird.f32 %v491
    %vm530 = vweird.f32 %v523
    %vm531 = vmor %vm529, %vm530
    %v532 = vsel %vm531, %v523, %v528
    %v533 = vrsqrt.pop %v492
    %v534 = vmul.f32 %v533, %v492
    %v535 = vmul.f32 %v534, %v533
    %v536 = vmul.f32 0.5, %v535
    %v537 = vsub.f32 1.5, %v536
    %v538 = vmul.f32 %v533, %v537
    %vm539 = vweird.f32 %v492
    %vm540 = vweird.f32 %v533
    %vm541 = vmor %vm539, %vm540
    %v542 = vsel %vm541, %v533, %v538
    %v543 = vmul.f32 %v453, %v502
    %v544 = vmul.f32 %v454, %v512
    %v545 = vmul.f32 %v455, %v522
    %v546 = vmul.f32 %v456, %v532
    %v547 = vmul.f32 %v457, %v542
    %v548 = vld [vmem:[%s9] sm:$0xff]
    %v549 = vld [vmem:[%s9 + $0x8] sm:$0xff]
    %v550 = vld [vmem:[%s9 + $0x10] sm:$0xff]
    %v551 = vld [vmem:[%s9 + $0x18] sm:$0xff]
    %v552 = vld [vmem:[%s9 + $0x20] sm:$0xff]
    %554 = vset.pattern.permute.xlu0 0
    %555 = vperm.xlu0 %554, %v548
    %v556 = vpop.permute.xlu0 %555
    %559 = vset.pattern.permute.xlu0 0
    %560 = vperm.xlu0 %559, %v549
    %v561 = vpop.permute.xlu0 %560
    %564 = vset.pattern.permute.xlu0 0
    %565 = vperm.xlu0 %564, %v550
    %v566 = vpop.permute.xlu0 %565
    %569 = vset.pattern.permute.xlu0 0
    %570 = vperm.xlu0 %569, %v551
    %v571 = vpop.permute.xlu0 %570
    %574 = vset.pattern.permute.xlu0 0
    %575 = vperm.xlu0 %574, %v552
    %v576 = vpop.permute.xlu0 %575
    %v578 = vmul.f32 %v543, %v556
    %v579 = vmul.f32 %v544, %v561
    %v580 = vmul.f32 %v545, %v566
    %v581 = vmul.f32 %v546, %v571
    %v582 = vmul.f32 %v547, %v576
    %v583 = vld [vmem:[%s11] sm:$0xff]
    %v584 = vld [vmem:[%s11 + $0x8] sm:$0xff]
    %v585 = vld [vmem:[%s11 + $0x10] sm:$0xff]
    %v586 = vld [vmem:[%s11 + $0x18] sm:$0xff]
    %v587 = vld [vmem:[%s11 + $0x20] sm:$0xff]
    %589 = vset.pattern.permute.xlu0 0
    %590 = vperm.xlu0 %589, %v583
    %v591 = vpop.permute.xlu0 %590
    %594 = vset.pattern.permute.xlu0 0
    %595 = vperm.xlu0 %594, %v584
    %v596 = vpop.permute.xlu0 %595
    %599 = vset.pattern.permute.xlu0 0
    %600 = vperm.xlu0 %599, %v585
    %v601 = vpop.permute.xlu0 %600
    %604 = vset.pattern.permute.xlu0 0
    %605 = vperm.xlu0 %604, %v586
    %v606 = vpop.permute.xlu0 %605
    %609 = vset.pattern.permute.xlu0 0
    %610 = vperm.xlu0 %609, %v587
    %v611 = vpop.permute.xlu0 %610
    %v613 = vadd.f32 %v578, %v591
    %v614 = vadd.f32 %v579, %v596
    %v615 = vadd.f32 %v580, %v601
    %v616 = vadd.f32 %v581, %v606
    %v617 = vadd.f32 %v582, %v611
    %623 = vrot.lane.b32.xlu0 %v613, 126
    %v624 = vpop.permute.xlu0 %623
    %625 = vrot.lane.b32.xlu0 %v614, 126
    %v626 = vpop.permute.xlu0 %625
    %627 = vrot.lane.b32.xlu0 %v615, 126
    %v628 = vpop.permute.xlu0 %627
    %629 = vrot.lane.b32.xlu0 %v616, 126
    %v630 = vpop.permute.xlu0 %629
    %631 = vrot.lane.b32.xlu0 %v617, 126
    %v632 = vpop.permute.xlu0 %631
    %v638 = vsel %vm262, %v624, 0.0
    %v639 = vsel %vm262, %v626, 0.0
    %v640 = vsel %vm262, %v628, 0.0
    %v641 = vsel %vm262, %v630, 0.0
    %v642 = vsel %vm262, %v632, 0.0
    %643 = vrot.lane.b32.xlu0 %v613, 118
    %v644 = vpop.permute.xlu0 %643
    %645 = vrot.lane.b32.xlu0 %v614, 118
    %v646 = vpop.permute.xlu0 %645
    %647 = vrot.lane.b32.xlu0 %v615, 118
    %v648 = vpop.permute.xlu0 %647
    %649 = vrot.lane.b32.xlu0 %v616, 118
    %v650 = vpop.permute.xlu0 %649
    %651 = vrot.lane.b32.xlu0 %v617, 118
    %v652 = vpop.permute.xlu0 %651
    %v658 = vsel %vm262, %v644, 0.0
    %v659 = vsel %vm262, %v646, 0.0
    %v660 = vsel %vm262, %v648, 0.0
    %v661 = vsel %vm262, %v650, 0.0
    %v662 = vsel %vm262, %v652, 0.0
    %668 = vrot.lane.b32.xlu0 %v658, 8
    %v669 = vpop.permute.xlu0 %668
    %670 = vrot.lane.b32.xlu0 %v659, 8
    %v671 = vpop.permute.xlu0 %670
    %672 = vrot.lane.b32.xlu0 %v660, 8
    %v673 = vpop.permute.xlu0 %672
    %674 = vrot.lane.b32.xlu0 %v661, 8
    %v675 = vpop.permute.xlu0 %674
    %676 = vrot.lane.b32.xlu0 %v662, 8
    %v677 = vpop.permute.xlu0 %676
    %v683 = vsel %vm203, %v638, %v669
    %v684 = vsel %vm203, %v639, %v671
    %v685 = vsel %vm203, %v640, %v673
    %v686 = vsel %vm203, %v641, %v675
    %v687 = vsel %vm203, %v642, %v677
    %688 = vrot.lane.b32.xlu0 %v613, 127
    %v689 = vpop.permute.xlu0 %688
    %690 = vrot.lane.b32.xlu0 %v614, 127
    %v691 = vpop.permute.xlu0 %690
    %692 = vrot.lane.b32.xlu0 %v615, 127
    %v693 = vpop.permute.xlu0 %692
    %694 = vrot.lane.b32.xlu0 %v616, 127
    %v695 = vpop.permute.xlu0 %694
    %696 = vrot.lane.b32.xlu0 %v617, 127
    %v697 = vpop.permute.xlu0 %696
    %v703 = vsel %vm245, %v689, 0.0
    %v704 = vsel %vm245, %v691, 0.0
    %v705 = vsel %vm245, %v693, 0.0
    %v706 = vsel %vm245, %v695, 0.0
    %v707 = vsel %vm245, %v697, 0.0
    %708 = vrot.lane.b32.xlu0 %v613, 119
    %v709 = vpop.permute.xlu0 %708
    %710 = vrot.lane.b32.xlu0 %v614, 119
    %v711 = vpop.permute.xlu0 %710
    %712 = vrot.lane.b32.xlu0 %v615, 119
    %v713 = vpop.permute.xlu0 %712
    %714 = vrot.lane.b32.xlu0 %v616, 119
    %v715 = vpop.permute.xlu0 %714
    %716 = vrot.lane.b32.xlu0 %v617, 119
    %v717 = vpop.permute.xlu0 %716
    %v723 = vsel %vm245, %v709, 0.0
    %v724 = vsel %vm245, %v711, 0.0
    %v725 = vsel %vm245, %v713, 0.0
    %v726 = vsel %vm245, %v715, 0.0
    %v727 = vsel %vm245, %v717, 0.0
    %733 = vrot.lane.b32.xlu0 %v723, 8
    %v734 = vpop.permute.xlu0 %733
    %735 = vrot.lane.b32.xlu0 %v724, 8
    %v736 = vpop.permute.xlu0 %735
    %737 = vrot.lane.b32.xlu0 %v725, 8
    %v738 = vpop.permute.xlu0 %737
    %739 = vrot.lane.b32.xlu0 %v726, 8
    %v740 = vpop.permute.xlu0 %739
    %741 = vrot.lane.b32.xlu0 %v727, 8
    %v742 = vpop.permute.xlu0 %741
    %v748 = vsel %vm203, %v703, %v734
    %v749 = vsel %vm203, %v704, %v736
    %v750 = vsel %vm203, %v705, %v738
    %v751 = vsel %vm203, %v706, %v740
    %v752 = vsel %vm203, %v707, %v742
    %753 = vrot.lane.b32.xlu0 %v613, 1
    %v754 = vpop.permute.xlu0 %753
    %755 = vrot.lane.b32.xlu0 %v614, 1
    %v756 = vpop.permute.xlu0 %755
    %757 = vrot.lane.b32.xlu0 %v615, 1
    %v758 = vpop.permute.xlu0 %757
    %759 = vrot.lane.b32.xlu0 %v616, 1
    %v760 = vpop.permute.xlu0 %759
    %761 = vrot.lane.b32.xlu0 %v617, 1
    %v762 = vpop.permute.xlu0 %761
    %v768 = vsel %vm228, 0.0, %v754
    %v769 = vsel %vm228, 0.0, %v756
    %v770 = vsel %vm228, 0.0, %v758
    %v771 = vsel %vm228, 0.0, %v760
    %v772 = vsel %vm228, 0.0, %v762
    %773 = vrot.lane.b32.xlu0 %v613, 121
    %v774 = vpop.permute.xlu0 %773
    %775 = vrot.lane.b32.xlu0 %v614, 121
    %v776 = vpop.permute.xlu0 %775
    %777 = vrot.lane.b32.xlu0 %v615, 121
    %v778 = vpop.permute.xlu0 %777
    %779 = vrot.lane.b32.xlu0 %v616, 121
    %v780 = vpop.permute.xlu0 %779
    %781 = vrot.lane.b32.xlu0 %v617, 121
    %v782 = vpop.permute.xlu0 %781
    %v788 = vsel %vm228, 0.0, %v774
    %v789 = vsel %vm228, 0.0, %v776
    %v790 = vsel %vm228, 0.0, %v778
    %v791 = vsel %vm228, 0.0, %v780
    %v792 = vsel %vm228, 0.0, %v782
    %798 = vrot.lane.b32.xlu0 %v788, 8
    %v799 = vpop.permute.xlu0 %798
    %800 = vrot.lane.b32.xlu0 %v789, 8
    %v801 = vpop.permute.xlu0 %800
    %802 = vrot.lane.b32.xlu0 %v790, 8
    %v803 = vpop.permute.xlu0 %802
    %804 = vrot.lane.b32.xlu0 %v791, 8
    %v805 = vpop.permute.xlu0 %804
    %806 = vrot.lane.b32.xlu0 %v792, 8
    %v807 = vpop.permute.xlu0 %806
    %v813 = vsel %vm203, %v768, %v799
    %v814 = vsel %vm203, %v769, %v801
    %v815 = vsel %vm203, %v770, %v803
    %v816 = vsel %vm203, %v771, %v805
    %v817 = vsel %vm203, %v772, %v807
    %818 = vrot.lane.b32.xlu0 %v613, 2
    %v819 = vpop.permute.xlu0 %818
    %820 = vrot.lane.b32.xlu0 %v614, 2
    %v821 = vpop.permute.xlu0 %820
    %822 = vrot.lane.b32.xlu0 %v615, 2
    %v823 = vpop.permute.xlu0 %822
    %824 = vrot.lane.b32.xlu0 %v616, 2
    %v825 = vpop.permute.xlu0 %824
    %826 = vrot.lane.b32.xlu0 %v617, 2
    %v827 = vpop.permute.xlu0 %826
    %v833 = vsel %vm211, 0.0, %v819
    %v834 = vsel %vm211, 0.0, %v821
    %v835 = vsel %vm211, 0.0, %v823
    %v836 = vsel %vm211, 0.0, %v825
    %v837 = vsel %vm211, 0.0, %v827
    %838 = vrot.lane.b32.xlu0 %v613, 122
    %v839 = vpop.permute.xlu0 %838
    %840 = vrot.lane.b32.xlu0 %v614, 122
    %v841 = vpop.permute.xlu0 %840
    %842 = vrot.lane.b32.xlu0 %v615, 122
    %v843 = vpop.permute.xlu0 %842
    %844 = vrot.lane.b32.xlu0 %v616, 122
    %v845 = vpop.permute.xlu0 %844
    %846 = vrot.lane.b32.xlu0 %v617, 122
    %v847 = vpop.permute.xlu0 %846
    %v853 = vsel %vm211, 0.0, %v839
    %v854 = vsel %vm211, 0.0, %v841
    %v855 = vsel %vm211, 0.0, %v843
    %v856 = vsel %vm211, 0.0, %v845
    %v857 = vsel %vm211, 0.0, %v847
    %863 = vrot.lane.b32.xlu0 %v853, 8
    %v864 = vpop.permute.xlu0 %863
    %865 = vrot.lane.b32.xlu0 %v854, 8
    %v866 = vpop.permute.xlu0 %865
    %867 = vrot.lane.b32.xlu0 %v855, 8
    %v868 = vpop.permute.xlu0 %867
    %869 = vrot.lane.b32.xlu0 %v856, 8
    %v870 = vpop.permute.xlu0 %869
    %871 = vrot.lane.b32.xlu0 %v857, 8
    %v872 = vpop.permute.xlu0 %871
    %v878 = vsel %vm203, %v833, %v864
    %v879 = vsel %vm203, %v834, %v866
    %v880 = vsel %vm203, %v835, %v868
    %v881 = vsel %vm203, %v836, %v870
    %v882 = vsel %vm203, %v837, %v872
    %v883 = vld [vmem:[#allocation2] sm:$0xff]
    %v884 = vld [vmem:[#allocation2 + $0x8] sm:$0xff]
    %v885 = vld [vmem:[#allocation2 + $0x10] sm:$0xff]
    %v886 = vld [vmem:[#allocation2 + $0x18] sm:$0xff]
    %v887 = vld [vmem:[#allocation2 + $0x20] sm:$0xff]
    %v888 = vld [vmem:[#allocation2 + $0x28] sm:$0xff]
    %v889 = vld [vmem:[#allocation2 + $0x30] sm:$0xff]
    %v890 = vld [vmem:[#allocation2 + $0x38] sm:$0xff]
    %v891 = vld [vmem:[#allocation2 + $0x40] sm:$0xff]
    %v892 = vld [vmem:[#allocation2 + $0x48] sm:$0xff]
    %v893 = vld [vmem:[#allocation2 + $0x50] sm:$0xff]
    %v894 = vld [vmem:[#allocation2 + $0x58] sm:$0xff]
    %v895 = vld [vmem:[#allocation2 + $0x60] sm:$0xff]
    %v896 = vld [vmem:[#allocation2 + $0x68] sm:$0xff]
    %v897 = vld [vmem:[#allocation2 + $0x70] sm:$0xff]
    %v898 = vld [vmem:[#allocation2 + $0x78] sm:$0xff]
    %v899 = vld [vmem:[#allocation2 + $0x80] sm:$0xff]
    %v900 = vld [vmem:[#allocation2 + $0x88] sm:$0xff]
    %v901 = vld [vmem:[#allocation2 + $0x90] sm:$0xff]
    %v902 = vld [vmem:[#allocation2 + $0x98] sm:$0xff]
    %vm903 = vcmask 588800
    %v905 = vsel %vm903, %v884, 0
    %v908 = vsel %vm903, %v886, 0
    %v911 = vsel %vm903, %v888, 0
    %v914 = vsel %vm903, %v890, 0
    %v917 = vsel %vm903, %v892, 0
    %v920 = vsel %vm903, %v894, 0
    %v923 = vsel %vm903, %v896, 0
    %v926 = vsel %vm903, %v898, 0
    %v929 = vsel %vm903, %v900, 0
    %v932 = vsel %vm903, %v902, 0
    %934 = vmatpush.msra.mxu0 %v813
    %935 = vmatpush.msra.mxu0 %v617
    %936 = vmatpush.msra.mxu0 %v616
    %937 = vmatpush.msra.mxu0 %v615
    %938 = vmatpush.msra.mxu0 %v614
    %939 = vmatpush.msra.mxu0 %v613
    %940 = vmatpush.msra.mxu0 %v752
    %941 = vmatpush.msra.mxu0 %v751
    %942 = vmatpush.msra.mxu0 %v750
    %943 = vmatpush.msra.mxu0 %v749
    %944 = vmatpush.msra.mxu0 %v748
    %945 = vmatpush.msra.mxu0 %v687
    %946 = vmatpush.msra.mxu0 %v686
    %947 = vmatpush.msra.mxu0 %v685
    %948 = vmatpush.msra.mxu0 %v684
    %949 = vmatpush.msra.mxu0 %v683
    %950 = vmatmul.f32.gmra.mxu0 %v883
    %v951 = vpop.f32.mrf.mxu0
    %v952 = vadd.f32 0.0, %v951
    %953 = vmatmul.f32.gmra.mxu0 %v885
    %v954 = vpop.f32.mrf.mxu0
    %v955 = vadd.f32 0.0, %v954
    %956 = vmatmul.f32.gmra.mxu0 %v887
    %v957 = vpop.f32.mrf.mxu0
    %v958 = vadd.f32 0.0, %v957
    %959 = vmatmul.f32.gmra.mxu0 %v889
    %v960 = vpop.f32.mrf.mxu0
    %v961 = vadd.f32 0.0, %v960
    %962 = vmatmul.f32.gmra.mxu0 %v891
    %v963 = vpop.f32.mrf.mxu0
    %v964 = vadd.f32 0.0, %v963
    %965 = vmatmul.f32.gmra.mxu0 %v893
    %v966 = vpop.f32.mrf.mxu0
    %v967 = vadd.f32 0.0, %v966
    %968 = vmatmul.f32.gmra.mxu0 %v895
    %v969 = vpop.f32.mrf.mxu0
    %v970 = vadd.f32 0.0, %v969
    %971 = vmatmul.f32.gmra.mxu0 %v897
    %v972 = vpop.f32.mrf.mxu0
    %v973 = vadd.f32 0.0, %v972
    %974 = vmatmul.f32.gmra.mxu0 %v899
    %v975 = vpop.f32.mrf.mxu0
    %v976 = vadd.f32 0.0, %v975
    %977 = vmatmul.f32.gmra.mxu0 %v901
    %v978 = vpop.f32.mrf.mxu0
    %v979 = vadd.f32 0.0, %v978
    %980 = vdwg.mxu0
    %981 = vmatpush.msra.mxu0 0.0
    %982 = vmatpush.msra.mxu0 0.0
    %983 = vmatpush.msra.mxu0 0.0
    %984 = vmatpush.msra.mxu0 0.0
    %985 = vmatpush.msra.mxu0 0.0
    %986 = vmatpush.msra.mxu0 0.0
    %987 = vmatpush.msra.mxu0 0.0
    %988 = vmatpush.msra.mxu0 %v882
    %989 = vmatpush.msra.mxu0 %v881
    %990 = vmatpush.msra.mxu0 %v880
    %991 = vmatpush.msra.mxu0 %v879
    %992 = vmatpush.msra.mxu0 %v878
    %993 = vmatpush.msra.mxu0 %v817
    %994 = vmatpush.msra.mxu0 %v816
    %995 = vmatpush.msra.mxu0 %v815
    %996 = vmatpush.msra.mxu0 %v814
    %997 = vmatmul.f32.gmra.mxu0 %v905
    %v998 = vpop.f32.mrf.mxu0
    %v999 = vadd.f32 %v952, %v998
    %1000 = vmatmul.f32.gmra.mxu0 %v908
    %v1001 = vpop.f32.mrf.mxu0
    %v1002 = vadd.f32 %v955, %v1001
    %1003 = vmatmul.f32.gmra.mxu0 %v911
    %v1004 = vpop.f32.mrf.mxu0
    %v1005 = vadd.f32 %v958, %v1004
    %1006 = vmatmul.f32.gmra.mxu0 %v914
    %v1007 = vpop.f32.mrf.mxu0
    %v1008 = vadd.f32 %v961, %v1007
    %1009 = vmatmul.f32.gmra.mxu0 %v917
    %v1010 = vpop.f32.mrf.mxu0
    %v1011 = vadd.f32 %v964, %v1010
    %1012 = vmatmul.f32.gmra.mxu0 %v920
    %v1013 = vpop.f32.mrf.mxu0
    %v1014 = vadd.f32 %v967, %v1013
    %1015 = vmatmul.f32.gmra.mxu0 %v923
    %v1016 = vpop.f32.mrf.mxu0
    %v1017 = vadd.f32 %v970, %v1016
    %1018 = vmatmul.f32.gmra.mxu0 %v926
    %v1019 = vpop.f32.mrf.mxu0
    %v1020 = vadd.f32 %v973, %v1019
    %1021 = vmatmul.f32.gmra.mxu0 %v929
    %v1022 = vpop.f32.mrf.mxu0
    %v1023 = vadd.f32 %v976, %v1022
    %1024 = vmatmul.f32.gmra.mxu0 %v932
    %v1025 = vpop.f32.mrf.mxu0
    %v1026 = vadd.f32 %v979, %v1025
    %1027 = vdwg.mxu0
    %v1028 = vld [vmem:[%s15] sm:$0xff]
    %v1029 = vld [vmem:[%s15 + $0x8] sm:$0xff]
    %v1030 = vld [vmem:[%s15 + $0x10] sm:$0xff]
    %v1031 = vld [vmem:[%s15 + $0x18] sm:$0xff]
    %v1032 = vld [vmem:[%s15 + $0x20] sm:$0xff]
    %1034 = vset.pattern.permute.xlu0 0
    %1035 = vperm.xlu0 %1034, %v1028
    %v1036 = vpop.permute.xlu0 %1035
    %1039 = vset.pattern.permute.xlu0 0
    %1040 = vperm.xlu0 %1039, %v1029
    %v1041 = vpop.permute.xlu0 %1040
    %1044 = vset.pattern.permute.xlu0 0
    %1045 = vperm.xlu0 %1044, %v1030
    %v1046 = vpop.permute.xlu0 %1045
    %1049 = vset.pattern.permute.xlu0 0
    %1050 = vperm.xlu0 %1049, %v1031
    %v1051 = vpop.permute.xlu0 %1050
    %1054 = vset.pattern.permute.xlu0 0
    %1055 = vperm.xlu0 %1054, %v1032
    %v1056 = vpop.permute.xlu0 %1055
    %v1058 = vadd.f32 %v999, %v1036
    %v1059 = vadd.f32 %v1002, %v1041
    %v1060 = vadd.f32 %v1005, %v1046
    %v1061 = vadd.f32 %v1008, %v1051
    %v1062 = vadd.f32 %v1011, %v1056
    %v1063 = vmax.f32 %v1058, 0.0
    %v1064 = vmax.f32 %v1059, 0.0
    %v1065 = vmax.f32 %v1060, 0.0
    %v1066 = vmax.f32 %v1061, 0.0
    %v1067 = vmax.f32 %v1062, 0.0
    %v1068 = vadd.f32 %v1014, %v1036
    %v1069 = vadd.f32 %v1017, %v1041
    %v1070 = vadd.f32 %v1020, %v1046
    %v1071 = vadd.f32 %v1023, %v1051
    %v1072 = vadd.f32 %v1026, %v1056
    %v1073 = vmax.f32 %v1068, 0.0
    %v1074 = vmax.f32 %v1069, 0.0
    %v1075 = vmax.f32 %v1070, 0.0
    %v1076 = vmax.f32 %v1071, 0.0
    %v1077 = vmax.f32 %v1072, 0.0
    %v1078 = vsel %vm427, %v1063, 0.0
    %1079 = vadd.xlane.f32.xlu0 %v1078
    %v1080 = vpop.xlane.xlu0 %1079
    %v1081 = vsel %vm427, %v1064, 0.0
    %1082 = vadd.xlane.f32.xlu0 %v1081
    %v1083 = vpop.xlane.xlu0 %1082
    %v1084 = vsel %vm427, %v1065, 0.0
    %1085 = vadd.xlane.f32.xlu0 %v1084
    %v1086 = vpop.xlane.xlu0 %1085
    %v1087 = vsel %vm427, %v1066, 0.0
    %1088 = vadd.xlane.f32.xlu0 %v1087
    %v1089 = vpop.xlane.xlu0 %1088
    %v1090 = vsel %vm427, %v1067, 0.0
    %1091 = vadd.xlane.f32.xlu0 %v1090
    %v1092 = vpop.xlane.xlu0 %1091
    %v1093 = vadd.f32 %v1080, 0.0
    %v1094 = vadd.f32 %v1083, 0.0
    %v1095 = vadd.f32 %v1086, 0.0
    %v1096 = vadd.f32 %v1089, 0.0
    %v1097 = vadd.f32 %v1092, 0.0
    %v1098 = vsel %vm427, %v1073, 0.0
    %1099 = vadd.xlane.f32.xlu0 %v1098
    %v1100 = vpop.xlane.xlu0 %1099
    %v1101 = vsel %vm427, %v1074, 0.0
    %1102 = vadd.xlane.f32.xlu0 %v1101
    %v1103 = vpop.xlane.xlu0 %1102
    %v1104 = vsel %vm427, %v1075, 0.0
    %1105 = vadd.xlane.f32.xlu0 %v1104
    %v1106 = vpop.xlane.xlu0 %1105
    %v1107 = vsel %vm427, %v1076, 0.0
    %1108 = vadd.xlane.f32.xlu0 %v1107
    %v1109 = vpop.xlane.xlu0 %1108
    %v1110 = vsel %vm427, %v1077, 0.0
    %1111 = vadd.xlane.f32.xlu0 %v1110
    %v1112 = vpop.xlane.xlu0 %1111
    %v1113 = vadd.f32 %v1093, %v1100
    %v1114 = vadd.f32 %v1094, %v1103
    %v1115 = vadd.f32 %v1095, %v1106
    %v1116 = vadd.f32 %v1096, %v1109
    %v1117 = vadd.f32 %v1097, %v1112
    %v1118 = vmul.f32 %v1113, 0.03125
    %v1119 = vmul.f32 %v1114, 0.03125
    %v1120 = vmul.f32 %v1115, 0.03125
    %v1121 = vmul.f32 %v1116, 0.03125
    %v1122 = vmul.f32 %v1117, 0.03125
    %v1123 = vsub.f32 %v1063, %v1118
    %v1124 = vsub.f32 %v1064, %v1119
    %v1125 = vsub.f32 %v1065, %v1120
    %v1126 = vsub.f32 %v1066, %v1121
    %v1127 = vsub.f32 %v1067, %v1122
    %v1128 = vmul.f32 %v1123, %v1123
    %v1129 = vmul.f32 %v1124, %v1124
    %v1130 = vmul.f32 %v1125, %v1125
    %v1131 = vmul.f32 %v1126, %v1126
    %v1132 = vmul.f32 %v1127, %v1127
    %v1133 = vsel %vm427, %v1128, 0.0
    %1134 = vadd.xlane.f32.xlu0 %v1133
    %v1135 = vpop.xlane.xlu0 %1134
    %v1136 = vsel %vm427, %v1129, 0.0
    %1137 = vadd.xlane.f32.xlu0 %v1136
    %v1138 = vpop.xlane.xlu0 %1137
    %v1139 = vsel %vm427, %v1130, 0.0
    %1140 = vadd.xlane.f32.xlu0 %v1139
    %v1141 = vpop.xlane.xlu0 %1140
    %v1142 = vsel %vm427, %v1131, 0.0
    %1143 = vadd.xlane.f32.xlu0 %v1142
    %v1144 = vpop.xlane.xlu0 %1143
    %v1145 = vsel %vm427, %v1132, 0.0
    %1146 = vadd.xlane.f32.xlu0 %v1145
    %v1147 = vpop.xlane.xlu0 %1146
    %v1148 = vadd.f32 %v1135, 0.0
    %v1149 = vadd.f32 %v1138, 0.0
    %v1150 = vadd.f32 %v1141, 0.0
    %v1151 = vadd.f32 %v1144, 0.0
    %v1152 = vadd.f32 %v1147, 0.0
    %v1153 = vsub.f32 %v1073, %v1118
    %v1154 = vsub.f32 %v1074, %v1119
    %v1155 = vsub.f32 %v1075, %v1120
    %v1156 = vsub.f32 %v1076, %v1121
    %v1157 = vsub.f32 %v1077, %v1122
    %v1158 = vmul.f32 %v1153, %v1153
    %v1159 = vmul.f32 %v1154, %v1154
    %v1160 = vmul.f32 %v1155, %v1155
    %v1161 = vmul.f32 %v1156, %v1156
    %v1162 = vmul.f32 %v1157, %v1157
    %v1163 = vsel %vm427, %v1158, 0.0
    %1164 = vadd.xlane.f32.xlu0 %v1163
    %v1165 = vpop.xlane.xlu0 %1164
    %v1166 = vsel %vm427, %v1159, 0.0
    %1167 = vadd.xlane.f32.xlu0 %v1166
    %v1168 = vpop.xlane.xlu0 %1167
    %v1169 = vsel %vm427, %v1160, 0.0
    %1170 = vadd.xlane.f32.xlu0 %v1169
    %v1171 = vpop.xlane.xlu0 %1170
    %v1172 = vsel %vm427, %v1161, 0.0
    %1173 = vadd.xlane.f32.xlu0 %v1172
    %v1174 = vpop.xlane.xlu0 %1173
    %v1175 = vsel %vm427, %v1162, 0.0
    %1176 = vadd.xlane.f32.xlu0 %v1175
    %v1177 = vpop.xlane.xlu0 %1176
    %v1178 = vadd.f32 %v1148, %v1165
    %v1179 = vadd.f32 %v1149, %v1168
    %v1180 = vadd.f32 %v1150, %v1171
    %v1181 = vadd.f32 %v1151, %v1174
    %v1182 = vadd.f32 %v1152, %v1177
    %v1183 = vmul.f32 %v1178, 0.03125
    %v1184 = vmul.f32 %v1179, 0.03125
    %v1185 = vmul.f32 %v1180, 0.03125
    %v1186 = vmul.f32 %v1181, 0.03125
    %v1187 = vmul.f32 %v1182, 0.03125
    %v1188 = vadd.f32 %v1183, 1e-05
    %v1189 = vadd.f32 %v1184, 1e-05
    %v1190 = vadd.f32 %v1185, 1e-05
    %v1191 = vadd.f32 %v1186, 1e-05
    %v1192 = vadd.f32 %v1187, 1e-05
    %v1193 = vrsqrt.pop %v1188
    %v1194 = vmul.f32 %v1193, %v1188
    %v1195 = vmul.f32 %v1194, %v1193
    %v1196 = vmul.f32 0.5, %v1195
    %v1197 = vsub.f32 1.5, %v1196
    %v1198 = vmul.f32 %v1193, %v1197
    %vm1199 = vweird.f32 %v1188
    %vm1200 = vweird.f32 %v1193
    %vm1201 = vmor %vm1199, %vm1200
    %v1202 = vsel %vm1201, %v1193, %v1198
    %v1203 = vrsqrt.pop %v1189
    %v1204 = vmul.f32 %v1203, %v1189
    %v1205 = vmul.f32 %v1204, %v1203
    %v1206 = vmul.f32 0.5, %v1205
    %v1207 = vsub.f32 1.5, %v1206
    %v1208 = vmul.f32 %v1203, %v1207
    %vm1209 = vweird.f32 %v1189
    %vm1210 = vweird.f32 %v1203
    %vm1211 = vmor %vm1209, %vm1210
    %v1212 = vsel %vm1211, %v1203, %v1208
    %v1213 = vrsqrt.pop %v1190
    %v1214 = vmul.f32 %v1213, %v1190
    %v1215 = vmul.f32 %v1214, %v1213
    %v1216 = vmul.f32 0.5, %v1215
    %v1217 = vsub.f32 1.5, %v1216
    %v1218 = vmul.f32 %v1213, %v1217
    %vm1219 = vweird.f32 %v1190
    %vm1220 = vweird.f32 %v1213
    %vm1221 = vmor %vm1219, %vm1220
    %v1222 = vsel %vm1221, %v1213, %v1218
    %v1223 = vrsqrt.pop %v1191
    %v1224 = vmul.f32 %v1223, %v1191
    %v1225 = vmul.f32 %v1224, %v1223
    %v1226 = vmul.f32 0.5, %v1225
    %v1227 = vsub.f32 1.5, %v1226
    %v1228 = vmul.f32 %v1223, %v1227
    %vm1229 = vweird.f32 %v1191
    %vm1230 = vweird.f32 %v1223
    %vm1231 = vmor %vm1229, %vm1230
    %v1232 = vsel %vm1231, %v1223, %v1228
    %v1233 = vrsqrt.pop %v1192
    %v1234 = vmul.f32 %v1233, %v1192
    %v1235 = vmul.f32 %v1234, %v1233
    %v1236 = vmul.f32 0.5, %v1235
    %v1237 = vsub.f32 1.5, %v1236
    %v1238 = vmul.f32 %v1233, %v1237
    %vm1239 = vweird.f32 %v1192
    %vm1240 = vweird.f32 %v1233
    %vm1241 = vmor %vm1239, %vm1240
    %v1242 = vsel %vm1241, %v1233, %v1238
    %v1243 = vmul.f32 %v1123, %v1202
    %v1244 = vmul.f32 %v1124, %v1212
    %v1245 = vmul.f32 %v1125, %v1222
    %v1246 = vmul.f32 %v1126, %v1232
    %v1247 = vmul.f32 %v1127, %v1242
    %v1248 = vld [vmem:[%s17] sm:$0xff]
    %v1249 = vld [vmem:[%s17 + $0x8] sm:$0xff]
    %v1250 = vld [vmem:[%s17 + $0x10] sm:$0xff]
    %v1251 = vld [vmem:[%s17 + $0x18] sm:$0xff]
    %v1252 = vld [vmem:[%s17 + $0x20] sm:$0xff]
    %1254 = vset.pattern.permute.xlu0 0
    %1255 = vperm.xlu0 %1254, %v1248
    %v1256 = vpop.permute.xlu0 %1255
    %1259 = vset.pattern.permute.xlu0 0
    %1260 = vperm.xlu0 %1259, %v1249
    %v1261 = vpop.permute.xlu0 %1260
    %1264 = vset.pattern.permute.xlu0 0
    %1265 = vperm.xlu0 %1264, %v1250
    %v1266 = vpop.permute.xlu0 %1265
    %1269 = vset.pattern.permute.xlu0 0
    %1270 = vperm.xlu0 %1269, %v1251
    %v1271 = vpop.permute.xlu0 %1270
    %1274 = vset.pattern.permute.xlu0 0
    %1275 = vperm.xlu0 %1274, %v1252
    %v1276 = vpop.permute.xlu0 %1275
    %v1278 = vmul.f32 %v1243, %v1256
    %v1279 = vmul.f32 %v1244, %v1261
    %v1280 = vmul.f32 %v1245, %v1266
    %v1281 = vmul.f32 %v1246, %v1271
    %v1282 = vmul.f32 %v1247, %v1276
    %v1283 = vld [vmem:[%s19] sm:$0xff]
    %v1284 = vld [vmem:[%s19 + $0x8] sm:$0xff]
    %v1285 = vld [vmem:[%s19 + $0x10] sm:$0xff]
    %v1286 = vld [vmem:[%s19 + $0x18] sm:$0xff]
    %v1287 = vld [vmem:[%s19 + $0x20] sm:$0xff]
    %1289 = vset.pattern.permute.xlu0 0
    %1290 = vperm.xlu0 %1289, %v1283
    %v1291 = vpop.permute.xlu0 %1290
    %1294 = vset.pattern.permute.xlu0 0
    %1295 = vperm.xlu0 %1294, %v1284
    %v1296 = vpop.permute.xlu0 %1295
    %1299 = vset.pattern.permute.xlu0 0
    %1300 = vperm.xlu0 %1299, %v1285
    %v1301 = vpop.permute.xlu0 %1300
    %1304 = vset.pattern.permute.xlu0 0
    %1305 = vperm.xlu0 %1304, %v1286
    %v1306 = vpop.permute.xlu0 %1305
    %1309 = vset.pattern.permute.xlu0 0
    %1310 = vperm.xlu0 %1309, %v1287
    %v1311 = vpop.permute.xlu0 %1310
    %v1313 = vadd.f32 %v1278, %v1291
    %v1314 = vadd.f32 %v1279, %v1296
    %v1315 = vadd.f32 %v1280, %v1301
    %v1316 = vadd.f32 %v1281, %v1306
    %v1317 = vadd.f32 %v1282, %v1311
    %v1318 = vmul.f32 %v1153, %v1202
    %v1319 = vmul.f32 %v1154, %v1212
    %v1320 = vmul.f32 %v1155, %v1222
    %v1321 = vmul.f32 %v1156, %v1232
    %v1322 = vmul.f32 %v1157, %v1242
    %v1323 = vmul.f32 %v1318, %v1256
    %v1324 = vmul.f32 %v1319, %v1261
    %v1325 = vmul.f32 %v1320, %v1266
    %v1326 = vmul.f32 %v1321, %v1271
    %v1327 = vmul.f32 %v1322, %v1276
    %v1328 = vadd.f32 %v1323, %v1291
    %v1329 = vadd.f32 %v1324, %v1296
    %v1330 = vadd.f32 %v1325, %v1301
    %v1331 = vadd.f32 %v1326, %v1306
    %v1332 = vadd.f32 %v1327, %v1311
    %1338 = vrot.lane.b32.xlu0 %v1313, 127
    %v1339 = vpop.permute.xlu0 %1338
    %1340 = vrot.lane.b32.xlu0 %v1314, 127
    %v1341 = vpop.permute.xlu0 %1340
    %1342 = vrot.lane.b32.xlu0 %v1315, 127
    %v1343 = vpop.permute.xlu0 %1342
    %1344 = vrot.lane.b32.xlu0 %v1316, 127
    %v1345 = vpop.permute.xlu0 %1344
    %1346 = vrot.lane.b32.xlu0 %v1317, 127
    %v1347 = vpop.permute.xlu0 %1346
    %v1353 = vsel %vm245, %v1339, 0.0
    %v1354 = vsel %vm245, %v1341, 0.0
    %v1355 = vsel %vm245, %v1343, 0.0
    %v1356 = vsel %vm245, %v1345, 0.0
    %v1357 = vsel %vm245, %v1347, 0.0
    %1358 = vrot.lane.b32.xlu0 %v1313, 119
    %v1359 = vpop.permute.xlu0 %1358
    %1360 = vrot.lane.b32.xlu0 %v1314, 119
    %v1361 = vpop.permute.xlu0 %1360
    %1362 = vrot.lane.b32.xlu0 %v1315, 119
    %v1363 = vpop.permute.xlu0 %1362
    %1364 = vrot.lane.b32.xlu0 %v1316, 119
    %v1365 = vpop.permute.xlu0 %1364
    %1366 = vrot.lane.b32.xlu0 %v1317, 119
    %v1367 = vpop.permute.xlu0 %1366
    %v1373 = vsel %vm245, %v1359, 0.0
    %v1374 = vsel %vm245, %v1361, 0.0
    %v1375 = vsel %vm245, %v1363, 0.0
    %v1376 = vsel %vm245, %v1365, 0.0
    %v1377 = vsel %vm245, %v1367, 0.0
    %1383 = vrot.lane.b32.xlu0 %v1373, 8
    %v1384 = vpop.permute.xlu0 %1383
    %1385 = vrot.lane.b32.xlu0 %v1374, 8
    %v1386 = vpop.permute.xlu0 %1385
    %1387 = vrot.lane.b32.xlu0 %v1375, 8
    %v1388 = vpop.permute.xlu0 %1387
    %1389 = vrot.lane.b32.xlu0 %v1376, 8
    %v1390 = vpop.permute.xlu0 %1389
    %1391 = vrot.lane.b32.xlu0 %v1377, 8
    %v1392 = vpop.permute.xlu0 %1391
    %v1398 = vsel %vm203, %v1353, %v1384
    %v1399 = vsel %vm203, %v1354, %v1386
    %v1400 = vsel %vm203, %v1355, %v1388
    %v1401 = vsel %vm203, %v1356, %v1390
    %v1402 = vsel %vm203, %v1357, %v1392
    %1408 = vrot.lane.b32.xlu0 %v1328, 1
    %v1409 = vpop.permute.xlu0 %1408
    %1410 = vrot.lane.b32.xlu0 %v1329, 1
    %v1411 = vpop.permute.xlu0 %1410
    %1412 = vrot.lane.b32.xlu0 %v1330, 1
    %v1413 = vpop.permute.xlu0 %1412
    %1414 = vrot.lane.b32.xlu0 %v1331, 1
    %v1415 = vpop.permute.xlu0 %1414
    %1416 = vrot.lane.b32.xlu0 %v1332, 1
    %v1417 = vpop.permute.xlu0 %1416
    %v1423 = vsel %vm228, 0.0, %v1409
    %v1424 = vsel %vm228, 0.0, %v1411
    %v1425 = vsel %vm228, 0.0, %v1413
    %v1426 = vsel %vm228, 0.0, %v1415
    %v1427 = vsel %vm228, 0.0, %v1417
    %1428 = vrot.lane.b32.xlu0 %v1328, 121
    %v1429 = vpop.permute.xlu0 %1428
    %1430 = vrot.lane.b32.xlu0 %v1329, 121
    %v1431 = vpop.permute.xlu0 %1430
    %1432 = vrot.lane.b32.xlu0 %v1330, 121
    %v1433 = vpop.permute.xlu0 %1432
    %1434 = vrot.lane.b32.xlu0 %v1331, 121
    %v1435 = vpop.permute.xlu0 %1434
    %1436 = vrot.lane.b32.xlu0 %v1332, 121
    %v1437 = vpop.permute.xlu0 %1436
    %v1443 = vsel %vm228, 0.0, %v1429
    %v1444 = vsel %vm228, 0.0, %v1431
    %v1445 = vsel %vm228, 0.0, %v1433
    %v1446 = vsel %vm228, 0.0, %v1435
    %v1447 = vsel %vm228, 0.0, %v1437
    %1453 = vrot.lane.b32.xlu0 %v1443, 8
    %v1454 = vpop.permute.xlu0 %1453
    %1455 = vrot.lane.b32.xlu0 %v1444, 8
    %v1456 = vpop.permute.xlu0 %1455
    %1457 = vrot.lane.b32.xlu0 %v1445, 8
    %v1458 = vpop.permute.xlu0 %1457
    %1459 = vrot.lane.b32.xlu0 %v1446, 8
    %v1460 = vpop.permute.xlu0 %1459
    %1461 = vrot.lane.b32.xlu0 %v1447, 8
    %v1462 = vpop.permute.xlu0 %1461
    %v1468 = vsel %vm203, %v1423, %v1454
    %v1469 = vsel %vm203, %v1424, %v1456
    %v1470 = vsel %vm203, %v1425, %v1458
    %v1471 = vsel %vm203, %v1426, %v1460
    %v1472 = vsel %vm203, %v1427, %v1462
    %v1473 = vld [vmem:[%s21] sm:$0xff]
    %v1474 = vld [vmem:[%s21 + $0x8] sm:$0xff]
    %v1475 = vld [vmem:[%s21 + $0x10] sm:$0xff]
    %v1476 = vld [vmem:[%s21 + $0x18] sm:$0xff]
    %v1477 = vld [vmem:[%s21 + $0x20] sm:$0xff]
    %v1478 = vld [vmem:[%s21 + $0x28] sm:$0xff]
    %v1479 = vld [vmem:[%s21 + $0x30] sm:$0xff]
    %v1480 = vld [vmem:[%s21 + $0x38] sm:$0xff]
    %vm1481 = vcmask 261120
    %v1483 = vsel %vm1481, %v1474, 0
    %v1486 = vsel %vm1481, %v1476, 0
    %v1489 = vsel %vm1481, %v1478, 0
    %v1492 = vsel %vm1481, %v1480, 0
    %1494 = vmatpush.msra.mxu0 %v1328
    %1495 = vmatpush.msra.mxu0 %v1472
    %1496 = vmatpush.msra.mxu0 %v1471
    %1497 = vmatpush.msra.mxu0 %v1470
    %1498 = vmatpush.msra.mxu0 %v1469
    %1499 = vmatpush.msra.mxu0 %v1468
    %1500 = vmatpush.msra.mxu0 %v1402
    %1501 = vmatpush.msra.mxu0 %v1401
    %1502 = vmatpush.msra.mxu0 %v1400
    %1503 = vmatpush.msra.mxu0 %v1399
    %1504 = vmatpush.msra.mxu0 %v1398
    %1505 = vmatpush.msra.mxu0 %v1317
    %1506 = vmatpush.msra.mxu0 %v1316
    %1507 = vmatpush.msra.mxu0 %v1315
    %1508 = vmatpush.msra.mxu0 %v1314
    %1509 = vmatpush.msra.mxu0 %v1313
    %1510 = vmatmul.f32.gmra.mxu0 %v1473
    %v1511 = vpop.f32.mrf.mxu0
    %v1512 = vadd.f32 0.0, %v1511
    %1513 = vmatmul.f32.gmra.mxu0 %v1475
    %v1514 = vpop.f32.mrf.mxu0
    %v1515 = vadd.f32 0.0, %v1514
    %1516 = vmatmul.f32.gmra.mxu0 %v1477
    %v1517 = vpop.f32.mrf.mxu0
    %v1518 = vadd.f32 0.0, %v1517
    %1519 = vmatmul.f32.gmra.mxu0 %v1479
    %v1520 = vpop.f32.mrf.mxu0
    %v1521 = vadd.f32 0.0, %v1520
    %1522 = vdwg.mxu0
    %1523 = vmatpush.msra.mxu0 0.0
    %1524 = vmatpush.msra.mxu0 0.0
    %1525 = vmatpush.msra.mxu0 0.0
    %1526 = vmatpush.msra.mxu0 0.0
    %1527 = vmatpush.msra.mxu0 0.0
    %1528 = vmatpush.msra.mxu0 0.0
    %1529 = vmatpush.msra.mxu0 0.0
    %1530 = vmatpush.msra.mxu0 0.0
    %1531 = vmatpush.msra.mxu0 0.0
    %1532 = vmatpush.msra.mxu0 0.0
    %1533 = vmatpush.msra.mxu0 0.0
    %1534 = vmatpush.msra.mxu0 0.0
    %1535 = vmatpush.msra.mxu0 %v1332
    %1536 = vmatpush.msra.mxu0 %v1331
    %1537 = vmatpush.msra.mxu0 %v1330
    %1538 = vmatpush.msra.mxu0 %v1329
    %1539 = vmatmul.f32.gmra.mxu0 %v1483
    %v1540 = vpop.f32.mrf.mxu0
    %v1541 = vadd.f32 %v1512, %v1540
    %1542 = vmatmul.f32.gmra.mxu0 %v1486
    %v1543 = vpop.f32.mrf.mxu0
    %v1544 = vadd.f32 %v1515, %v1543
    %1545 = vmatmul.f32.gmra.mxu0 %v1489
    %v1546 = vpop.f32.mrf.mxu0
    %v1547 = vadd.f32 %v1518, %v1546
    %1548 = vmatmul.f32.gmra.mxu0 %v1492
    %v1549 = vpop.f32.mrf.mxu0
    %v1550 = vadd.f32 %v1521, %v1549
    %1551 = vdwg.mxu0
    %v1552 = vld [vmem:[%s23] sm:$0xff]
    %v1553 = vld [vmem:[%s23 + $0x8] sm:$0xff]
    %1555 = vset.pattern.permute.xlu0 0
    %1556 = vperm.xlu0 %1555, %v1552
    %v1557 = vpop.permute.xlu0 %1556
    %1560 = vset.pattern.permute.xlu0 0
    %1561 = vperm.xlu0 %1560, %v1553
    %v1562 = vpop.permute.xlu0 %1561
    %v1564 = vadd.f32 %v1541, %v1557
    %v1565 = vadd.f32 %v1544, %v1562
    %v1566 = vadd.f32 %v1547, %v1557
    %v1567 = vadd.f32 %v1550, %v1562
    %1570 = vrot.lane.b32.xlu0 %v1564, 123
    %v1571 = vpop.permute.xlu0 %1570
    %1572 = vrot.lane.b32.xlu0 %v1565, 123
    %v1573 = vpop.permute.xlu0 %1572
    %1576 = vrot.lane.b32.xlu0 %v1564, 3
    %v1577 = vpop.permute.xlu0 %1576
    %1578 = vrot.lane.b32.xlu0 %v1565, 3
    %v1579 = vpop.permute.xlu0 %1578
    %v1582 = vsel %vm193, %v1571, %v1577
    %v1583 = vsel %vm193, %v1573, %v1579
    %1584 = vrot.lane.b32.xlu0 %v1564, 115
    %v1585 = vpop.permute.xlu0 %1584
    %1586 = vrot.lane.b32.xlu0 %v1565, 115
    %v1587 = vpop.permute.xlu0 %1586
    %v1590 = vsel %vm193, %v1585, %v1571
    %v1591 = vsel %vm193, %v1587, %v1573
    %1594 = vrot.lane.b32.xlu0 %v1590, 8
    %v1595 = vpop.permute.xlu0 %1594
    %1596 = vrot.lane.b32.xlu0 %v1591, 8
    %v1597 = vpop.permute.xlu0 %1596
    %v1600 = vsel %vm203, %v1582, %v1595
    %v1601 = vsel %vm203, %v1583, %v1597
    %1602 = vrot.lane.b32.xlu0 %v1564, 122
    %v1603 = vpop.permute.xlu0 %1602
    %1604 = vrot.lane.b32.xlu0 %v1565, 122
    %v1605 = vpop.permute.xlu0 %1604
    %1608 = vrot.lane.b32.xlu0 %v1564, 2
    %v1609 = vpop.permute.xlu0 %1608
    %1610 = vrot.lane.b32.xlu0 %v1565, 2
    %v1611 = vpop.permute.xlu0 %1610
    %v1614 = vsel %vm211, %v1603, %v1609
    %v1615 = vsel %vm211, %v1605, %v1611
    %1616 = vrot.lane.b32.xlu0 %v1564, 114
    %v1617 = vpop.permute.xlu0 %1616
    %1618 = vrot.lane.b32.xlu0 %v1565, 114
    %v1619 = vpop.permute.xlu0 %1618
    %v1622 = vsel %vm211, %v1617, %v1603
    %v1623 = vsel %vm211, %v1619, %v1605
    %1626 = vrot.lane.b32.xlu0 %v1622, 8
    %v1627 = vpop.permute.xlu0 %1626
    %1628 = vrot.lane.b32.xlu0 %v1623, 8
    %v1629 = vpop.permute.xlu0 %1628
    %v1632 = vsel %vm203, %v1614, %v1627
    %v1633 = vsel %vm203, %v1615, %v1629
    %1634 = vrot.lane.b32.xlu0 %v1564, 121
    %v1635 = vpop.permute.xlu0 %1634
    %1636 = vrot.lane.b32.xlu0 %v1565, 121
    %v1637 = vpop.permute.xlu0 %1636
    %1640 = vrot.lane.b32.xlu0 %v1564, 1
    %v1641 = vpop.permute.xlu0 %1640
    %1642 = vrot.lane.b32.xlu0 %v1565, 1
    %v1643 = vpop.permute.xlu0 %1642
    %v1646 = vsel %vm228, %v1635, %v1641
    %v1647 = vsel %vm228, %v1637, %v1643
    %1648 = vrot.lane.b32.xlu0 %v1564, 113
    %v1649 = vpop.permute.xlu0 %1648
    %1650 = vrot.lane.b32.xlu0 %v1565, 113
    %v1651 = vpop.permute.xlu0 %1650
    %v1654 = vsel %vm228, %v1649, %v1635
    %v1655 = vsel %vm228, %v1651, %v1637
    %1658 = vrot.lane.b32.xlu0 %v1654, 8
    %v1659 = vpop.permute.xlu0 %1658
    %1660 = vrot.lane.b32.xlu0 %v1655, 8
    %v1661 = vpop.permute.xlu0 %1660
    %v1664 = vsel %vm203, %v1646, %v1659
    %v1665 = vsel %vm203, %v1647, %v1661
    %1666 = vrot.lane.b32.xlu0 %v1564, 127
    %v1667 = vpop.permute.xlu0 %1666
    %1668 = vrot.lane.b32.xlu0 %v1565, 127
    %v1669 = vpop.permute.xlu0 %1668
    %1672 = vrot.lane.b32.xlu0 %v1564, 7
    %v1673 = vpop.permute.xlu0 %1672
    %1674 = vrot.lane.b32.xlu0 %v1565, 7
    %v1675 = vpop.permute.xlu0 %1674
    %v1678 = vsel %vm245, %v1667, %v1673
    %v1679 = vsel %vm245, %v1669, %v1675
    %1680 = vrot.lane.b32.xlu0 %v1564, 119
    %v1681 = vpop.permute.xlu0 %1680
    %1682 = vrot.lane.b32.xlu0 %v1565, 119
    %v1683 = vpop.permute.xlu0 %1682
    %v1686 = vsel %vm245, %v1681, %v1667
    %v1687 = vsel %vm245, %v1683, %v1669
    %1690 = vrot.lane.b32.xlu0 %v1686, 8
    %v1691 = vpop.permute.xlu0 %1690
    %1692 = vrot.lane.b32.xlu0 %v1687, 8
    %v1693 = vpop.permute.xlu0 %1692
    %v1696 = vsel %vm203, %v1678, %v1691
    %v1697 = vsel %vm203, %v1679, %v1693
    %1698 = vrot.lane.b32.xlu0 %v1564, 126
    %v1699 = vpop.permute.xlu0 %1698
    %1700 = vrot.lane.b32.xlu0 %v1565, 126
    %v1701 = vpop.permute.xlu0 %1700
    %1704 = vrot.lane.b32.xlu0 %v1564, 6
    %v1705 = vpop.permute.xlu0 %1704
    %1706 = vrot.lane.b32.xlu0 %v1565, 6
    %v1707 = vpop.permute.xlu0 %1706
    %v1710 = vsel %vm262, %v1699, %v1705
    %v1711 = vsel %vm262, %v1701, %v1707
    %1712 = vrot.lane.b32.xlu0 %v1564, 118
    %v1713 = vpop.permute.xlu0 %1712
    %1714 = vrot.lane.b32.xlu0 %v1565, 118
    %v1715 = vpop.permute.xlu0 %1714
    %v1718 = vsel %vm262, %v1713, %v1699
    %v1719 = vsel %vm262, %v1715, %v1701
    %1722 = vrot.lane.b32.xlu0 %v1718, 8
    %v1723 = vpop.permute.xlu0 %1722
    %1724 = vrot.lane.b32.xlu0 %v1719, 8
    %v1725 = vpop.permute.xlu0 %1724
    %v1728 = vsel %vm203, %v1710, %v1723
    %v1729 = vsel %vm203, %v1711, %v1725
    %1730 = vrot.lane.b32.xlu0 %v1564, 125
    %v1731 = vpop.permute.xlu0 %1730
    %1732 = vrot.lane.b32.xlu0 %v1565, 125
    %v1733 = vpop.permute.xlu0 %1732
    %1736 = vrot.lane.b32.xlu0 %v1564, 5
    %v1737 = vpop.permute.xlu0 %1736
    %1738 = vrot.lane.b32.xlu0 %v1565, 5
    %v1739 = vpop.permute.xlu0 %1738
    %v1742 = vsel %vm279, %v1731, %v1737
    %v1743 = vsel %vm279, %v1733, %v1739
    %1744 = vrot.lane.b32.xlu0 %v1564, 117
    %v1745 = vpop.permute.xlu0 %1744
    %1746 = vrot.lane.b32.xlu0 %v1565, 117
    %v1747 = vpop.permute.xlu0 %1746
    %v1750 = vsel %vm279, %v1745, %v1731
    %v1751 = vsel %vm279, %v1747, %v1733
    %1754 = vrot.lane.b32.xlu0 %v1750, 8
    %v1755 = vpop.permute.xlu0 %1754
    %1756 = vrot.lane.b32.xlu0 %v1751, 8
    %v1757 = vpop.permute.xlu0 %1756
    %v1760 = vsel %vm203, %v1742, %v1755
    %v1761 = vsel %vm203, %v1743, %v1757
    %1764 = vrot.lane.b32.xlu0 %v1566, 122
    %v1765 = vpop.permute.xlu0 %1764
    %1766 = vrot.lane.b32.xlu0 %v1567, 122
    %v1767 = vpop.permute.xlu0 %1766
    %1770 = vrot.lane.b32.xlu0 %v1566, 2
    %v1771 = vpop.permute.xlu0 %1770
    %1772 = vrot.lane.b32.xlu0 %v1567, 2
    %v1773 = vpop.permute.xlu0 %1772
    %v1776 = vsel %vm211, %v1765, %v1771
    %v1777 = vsel %vm211, %v1767, %v1773
    %1778 = vrot.lane.b32.xlu0 %v1566, 114
    %v1779 = vpop.permute.xlu0 %1778
    %1780 = vrot.lane.b32.xlu0 %v1567, 114
    %v1781 = vpop.permute.xlu0 %1780
    %v1784 = vsel %vm211, %v1779, %v1765
    %v1785 = vsel %vm211, %v1781, %v1767
    %1788 = vrot.lane.b32.xlu0 %v1784, 8
    %v1789 = vpop.permute.xlu0 %1788
    %1790 = vrot.lane.b32.xlu0 %v1785, 8
    %v1791 = vpop.permute.xlu0 %1790
    %v1794 = vsel %vm203, %v1776, %v1789
    %v1795 = vsel %vm203, %v1777, %v1791
    %1796 = vrot.lane.b32.xlu0 %v1566, 121
    %v1797 = vpop.permute.xlu0 %1796
    %1798 = vrot.lane.b32.xlu0 %v1567, 121
    %v1799 = vpop.permute.xlu0 %1798
    %1802 = vrot.lane.b32.xlu0 %v1566, 1
    %v1803 = vpop.permute.xlu0 %1802
    %1804 = vrot.lane.b32.xlu0 %v1567, 1
    %v1805 = vpop.permute.xlu0 %1804
    %v1808 = vsel %vm228, %v1797, %v1803
    %v1809 = vsel %vm228, %v1799, %v1805
    %1810 = vrot.lane.b32.xlu0 %v1566, 113
    %v1811 = vpop.permute.xlu0 %1810
    %1812 = vrot.lane.b32.xlu0 %v1567, 113
    %v1813 = vpop.permute.xlu0 %1812
    %v1816 = vsel %vm228, %v1811, %v1797
    %v1817 = vsel %vm228, %v1813, %v1799
    %1820 = vrot.lane.b32.xlu0 %v1816, 8
    %v1821 = vpop.permute.xlu0 %1820
    %1822 = vrot.lane.b32.xlu0 %v1817, 8
    %v1823 = vpop.permute.xlu0 %1822
    %v1826 = vsel %vm203, %v1808, %v1821
    %v1827 = vsel %vm203, %v1809, %v1823
    %1828 = vrot.lane.b32.xlu0 %v1566, 127
    %v1829 = vpop.permute.xlu0 %1828
    %1830 = vrot.lane.b32.xlu0 %v1567, 127
    %v1831 = vpop.permute.xlu0 %1830
    %1834 = vrot.lane.b32.xlu0 %v1566, 7
    %v1835 = vpop.permute.xlu0 %1834
    %1836 = vrot.lane.b32.xlu0 %v1567, 7
    %v1837 = vpop.permute.xlu0 %1836
    %v1840 = vsel %vm245, %v1829, %v1835
    %v1841 = vsel %vm245, %v1831, %v1837
    %1842 = vrot.lane.b32.xlu0 %v1566, 119
    %v1843 = vpop.permute.xlu0 %1842
    %1844 = vrot.lane.b32.xlu0 %v1567, 119
    %v1845 = vpop.permute.xlu0 %1844
    %v1848 = vsel %vm245, %v1843, %v1829
    %v1849 = vsel %vm245, %v1845, %v1831
    %1852 = vrot.lane.b32.xlu0 %v1848, 8
    %v1853 = vpop.permute.xlu0 %1852
    %1854 = vrot.lane.b32.xlu0 %v1849, 8
    %v1855 = vpop.permute.xlu0 %1854
    %v1858 = vsel %vm203, %v1840, %v1853
    %v1859 = vsel %vm203, %v1841, %v1855
    %v1860 = vld [vmem:[%s25] sm:$0xff]
    %v1861 = vld [vmem:[%s25 + $0x8] sm:$0xff]
    %v1862 = vld [vmem:[%s25 + $0x10] sm:$0xff]
    %v1863 = vld [vmem:[%s25 + $0x18] sm:$0xff]
    %v1864 = vld [vmem:[%s25 + $0x20] sm:$0xff]
    %v1865 = vld [vmem:[%s25 + $0x28] sm:$0xff]
    %v1866 = vld [vmem:[%s25 + $0x30] sm:$0xff]
    %v1867 = vld [vmem:[%s25 + $0x38] sm:$0xff]
    %v1868 = vld [vmem:[%s27] sm:$0xff]
    %v1869 = vld [vmem:[%s27 + $0x8] sm:$0xff]
    %v1870 = vld [vmem:[%s27 + $0x10] sm:$0xff]
    %v1871 = vld [vmem:[%s27 + $0x18] sm:$0xff]
    %1873 = vset.pattern.permute.xlu0 0
    %1874 = vperm.xlu0 %1873, %v1868
    %v1875 = vpop.permute.xlu0 %1874
    %1878 = vset.pattern.permute.xlu0 0
    %1879 = vperm.xlu0 %1878, %v1869
    %v1880 = vpop.permute.xlu0 %1879
    %1883 = vset.pattern.permute.xlu0 0
    %1884 = vperm.xlu0 %1883, %v1870
    %v1885 = vpop.permute.xlu0 %1884
    %1888 = vset.pattern.permute.xlu0 0
    %1889 = vperm.xlu0 %1888, %v1871
    %v1890 = vpop.permute.xlu0 %1889
    %vm1892 = vcmask 392192
    %v1894 = vsel %vm1892, %v1861, 0
    %v1897 = vsel %vm1892, %v1863, 0
    %v1900 = vsel %vm1892, %v1865, 0
    %v1903 = vsel %vm1892, %v1867, 0
    %1905 = vmatpush.msra.mxu0 %v1795
    %1906 = vmatpush.msra.mxu0 %v1794
    %1907 = vmatpush.msra.mxu0 %v1761
    %1908 = vmatpush.msra.mxu0 %v1760
    %1909 = vmatpush.msra.mxu0 %v1729
    %1910 = vmatpush.msra.mxu0 %v1728
    %1911 = vmatpush.msra.mxu0 %v1697
    %1912 = vmatpush.msra.mxu0 %v1696
    %1913 = vmatpush.msra.mxu0 %v1565
    %1914 = vmatpush.msra.mxu0 %v1564
    %1915 = vmatpush.msra.mxu0 %v1665
    %1916 = vmatpush.msra.mxu0 %v1664
    %1917 = vmatpush.msra.mxu0 %v1633
    %1918 = vmatpush.msra.mxu0 %v1632
    %1919 = vmatpush.msra.mxu0 %v1601
    %1920 = vmatpush.msra.mxu0 %v1600
    %1921 = vmatmul.f32.gmra.mxu0 %v1860
    %v1922 = vpop.f32.mrf.mxu0
    %v1923 = vadd.f32 %v1875, %v1922
    %1924 = vmatmul.f32.gmra.mxu0 %v1862
    %v1925 = vpop.f32.mrf.mxu0
    %v1926 = vadd.f32 %v1880, %v1925
    %1927 = vmatmul.f32.gmra.mxu0 %v1864
    %v1928 = vpop.f32.mrf.mxu0
    %v1929 = vadd.f32 %v1885, %v1928
    %1930 = vmatmul.f32.gmra.mxu0 %v1866
    %v1931 = vpop.f32.mrf.mxu0
    %v1932 = vadd.f32 %v1890, %v1931
    %1933 = vdwg.mxu0
    %1934 = vmatpush.msra.mxu0 0.0
    %1935 = vmatpush.msra.mxu0 0.0
    %1936 = vmatpush.msra.mxu0 0.0
    %1937 = vmatpush.msra.mxu0 0.0
    %1938 = vmatpush.msra.mxu0 0.0
    %1939 = vmatpush.msra.mxu0 0.0
    %1940 = vmatpush.msra.mxu0 0.0
    %1941 = vmatpush.msra.mxu0 0.0
    %1942 = vmatpush.msra.mxu0 0.0
    %1943 = vmatpush.msra.mxu0 0.0
    %1944 = vmatpush.msra.mxu0 %v1859
    %1945 = vmatpush.msra.mxu0 %v1858
    %1946 = vmatpush.msra.mxu0 %v1567
    %1947 = vmatpush.msra.mxu0 %v1566
    %1948 = vmatpush.msra.mxu0 %v1827
    %1949 = vmatpush.msra.mxu0 %v1826
    %1950 = vmatmul.f32.gmra.mxu0 %v1894
    %v1951 = vpop.f32.mrf.mxu0
    %v1952 = vadd.f32 %v1923, %v1951
    %1953 = vmatmul.f32.gmra.mxu0 %v1897
    %v1954 = vpop.f32.mrf.mxu0
    %v1955 = vadd.f32 %v1926, %v1954
    %1956 = vmatmul.f32.gmra.mxu0 %v1900
    %v1957 = vpop.f32.mrf.mxu0
    %v1958 = vadd.f32 %v1929, %v1957
    %1959 = vmatmul.f32.gmra.mxu0 %v1903
    %v1960 = vpop.f32.mrf.mxu0
    %v1961 = vadd.f32 %v1932, %v1960
    %1962 = vdwg.mxu0
    %v1963 = vmax.f32 %v1952, 0.0
    %v1964 = vmax.f32 %v1955, 0.0
    %v1965 = vmax.f32 %v1958, 0.0
    %v1966 = vmax.f32 %v1961, 0.0
    %v1967 = vsel %vm427, %v1963, 0.0
    %1968 = vadd.xlane.f32.xlu0 %v1967
    %v1969 = vpop.xlane.xlu0 %1968
    %v1970 = vsel %vm427, %v1964, 0.0
    %1971 = vadd.xlane.f32.xlu0 %v1970
    %v1972 = vpop.xlane.xlu0 %1971
    %v1973 = vsel %vm427, %v1965, 0.0
    %1974 = vadd.xlane.f32.xlu0 %v1973
    %v1975 = vpop.xlane.xlu0 %1974
    %v1976 = vsel %vm427, %v1966, 0.0
    %1977 = vadd.xlane.f32.xlu0 %v1976
    %v1978 = vpop.xlane.xlu0 %1977
    %v1979 = vadd.f32 %v1969, 0.0
    %v1980 = vadd.f32 %v1972, 0.0
    %v1981 = vadd.f32 %v1975, 0.0
    %v1982 = vadd.f32 %v1978, 0.0
    %v1983 = vmul.f32 %v1979, 0.0625
    %v1984 = vmul.f32 %v1980, 0.0625
    %v1985 = vmul.f32 %v1981, 0.0625
    %v1986 = vmul.f32 %v1982, 0.0625
    %v1987 = vsub.f32 %v1963, %v1983
    %v1988 = vsub.f32 %v1964, %v1984
    %v1989 = vsub.f32 %v1965, %v1985
    %v1990 = vsub.f32 %v1966, %v1986
    %v1991 = vmul.f32 %v1987, %v1987
    %v1992 = vmul.f32 %v1988, %v1988
    %v1993 = vmul.f32 %v1989, %v1989
    %v1994 = vmul.f32 %v1990, %v1990
    %v1995 = vsel %vm427, %v1991, 0.0
    %1996 = vadd.xlane.f32.xlu0 %v1995
    %v1997 = vpop.xlane.xlu0 %1996
    %v1998 = vsel %vm427, %v1992, 0.0
    %1999 = vadd.xlane.f32.xlu0 %v1998
    %v2000 = vpop.xlane.xlu0 %1999
    %v2001 = vsel %vm427, %v1993, 0.0
    %2002 = vadd.xlane.f32.xlu0 %v2001
    %v2003 = vpop.xlane.xlu0 %2002
    %v2004 = vsel %vm427, %v1994, 0.0
    %2005 = vadd.xlane.f32.xlu0 %v2004
    %v2006 = vpop.xlane.xlu0 %2005
    %v2007 = vadd.f32 %v1997, 0.0
    %v2008 = vadd.f32 %v2000, 0.0
    %v2009 = vadd.f32 %v2003, 0.0
    %v2010 = vadd.f32 %v2006, 0.0
    %v2011 = vmul.f32 %v2007, 0.0625
    %v2012 = vmul.f32 %v2008, 0.0625
    %v2013 = vmul.f32 %v2009, 0.0625
    %v2014 = vmul.f32 %v2010, 0.0625
    %v2015 = vadd.f32 %v2011, 1e-05
    %v2016 = vadd.f32 %v2012, 1e-05
    %v2017 = vadd.f32 %v2013, 1e-05
    %v2018 = vadd.f32 %v2014, 1e-05
    %v2019 = vrsqrt.pop %v2015
    %v2020 = vmul.f32 %v2019, %v2015
    %v2021 = vmul.f32 %v2020, %v2019
    %v2022 = vmul.f32 0.5, %v2021
    %v2023 = vsub.f32 1.5, %v2022
    %v2024 = vmul.f32 %v2019, %v2023
    %vm2025 = vweird.f32 %v2015
    %vm2026 = vweird.f32 %v2019
    %vm2027 = vmor %vm2025, %vm2026
    %v2028 = vsel %vm2027, %v2019, %v2024
    %v2029 = vrsqrt.pop %v2016
    %v2030 = vmul.f32 %v2029, %v2016
    %v2031 = vmul.f32 %v2030, %v2029
    %v2032 = vmul.f32 0.5, %v2031
    %v2033 = vsub.f32 1.5, %v2032
    %v2034 = vmul.f32 %v2029, %v2033
    %vm2035 = vweird.f32 %v2016
    %vm2036 = vweird.f32 %v2029
    %vm2037 = vmor %vm2035, %vm2036
    %v2038 = vsel %vm2037, %v2029, %v2034
    %v2039 = vrsqrt.pop %v2017
    %v2040 = vmul.f32 %v2039, %v2017
    %v2041 = vmul.f32 %v2040, %v2039
    %v2042 = vmul.f32 0.5, %v2041
    %v2043 = vsub.f32 1.5, %v2042
    %v2044 = vmul.f32 %v2039, %v2043
    %vm2045 = vweird.f32 %v2017
    %vm2046 = vweird.f32 %v2039
    %vm2047 = vmor %vm2045, %vm2046
    %v2048 = vsel %vm2047, %v2039, %v2044
    %v2049 = vrsqrt.pop %v2018
    %v2050 = vmul.f32 %v2049, %v2018
    %v2051 = vmul.f32 %v2050, %v2049
    %v2052 = vmul.f32 0.5, %v2051
    %v2053 = vsub.f32 1.5, %v2052
    %v2054 = vmul.f32 %v2049, %v2053
    %vm2055 = vweird.f32 %v2018
    %vm2056 = vweird.f32 %v2049
    %vm2057 = vmor %vm2055, %vm2056
    %v2058 = vsel %vm2057, %v2049, %v2054
    %v2059 = vmul.f32 %v1987, %v2028
    %v2060 = vmul.f32 %v1988, %v2038
    %v2061 = vmul.f32 %v1989, %v2048
    %v2062 = vmul.f32 %v1990, %v2058
    %v2063 = vld [vmem:[%s29] sm:$0xff]
    %v2064 = vld [vmem:[%s29 + $0x8] sm:$0xff]
    %v2065 = vld [vmem:[%s29 + $0x10] sm:$0xff]
    %v2066 = vld [vmem:[%s29 + $0x18] sm:$0xff]
    %2068 = vset.pattern.permute.xlu0 0
    %2069 = vperm.xlu0 %2068, %v2063
    %v2070 = vpop.permute.xlu0 %2069
    %2073 = vset.pattern.permute.xlu0 0
    %2074 = vperm.xlu0 %2073, %v2064
    %v2075 = vpop.permute.xlu0 %2074
    %2078 = vset.pattern.permute.xlu0 0
    %2079 = vperm.xlu0 %2078, %v2065
    %v2080 = vpop.permute.xlu0 %2079
    %2083 = vset.pattern.permute.xlu0 0
    %2084 = vperm.xlu0 %2083, %v2066
    %v2085 = vpop.permute.xlu0 %2084
    %v2087 = vmul.f32 %v2059, %v2070
    %v2088 = vmul.f32 %v2060, %v2075
    %v2089 = vmul.f32 %v2061, %v2080
    %v2090 = vmul.f32 %v2062, %v2085
    %v2091 = vld [vmem:[%s31] sm:$0xff]
    %v2092 = vld [vmem:[%s31 + $0x8] sm:$0xff]
    %v2093 = vld [vmem:[%s31 + $0x10] sm:$0xff]
    %v2094 = vld [vmem:[%s31 + $0x18] sm:$0xff]
    %2096 = vset.pattern.permute.xlu0 0
    %2097 = vperm.xlu0 %2096, %v2091
    %v2098 = vpop.permute.xlu0 %2097
    %2101 = vset.pattern.permute.xlu0 0
    %2102 = vperm.xlu0 %2101, %v2092
    %v2103 = vpop.permute.xlu0 %2102
    %2106 = vset.pattern.permute.xlu0 0
    %2107 = vperm.xlu0 %2106, %v2093
    %v2108 = vpop.permute.xlu0 %2107
    %2111 = vset.pattern.permute.xlu0 0
    %2112 = vperm.xlu0 %2111, %v2094
    %v2113 = vpop.permute.xlu0 %2112
    %v2115 = vadd.f32 %v2087, %v2098
    %v2116 = vadd.f32 %v2088, %v2103
    %v2117 = vadd.f32 %v2089, %v2108
    %v2118 = vadd.f32 %v2090, %v2113
    %2123 = vrot.lane.b32.xlu0 %v2115, 126
    %v2124 = vpop.permute.xlu0 %2123
    %2125 = vrot.lane.b32.xlu0 %v2116, 126
    %v2126 = vpop.permute.xlu0 %2125
    %2127 = vrot.lane.b32.xlu0 %v2117, 126
    %v2128 = vpop.permute.xlu0 %2127
    %2129 = vrot.lane.b32.xlu0 %v2118, 126
    %v2130 = vpop.permute.xlu0 %2129
    %v2135 = vsel %vm262, %v2124, 0.0
    %v2136 = vsel %vm262, %v2126, 0.0
    %v2137 = vsel %vm262, %v2128, 0.0
    %v2138 = vsel %vm262, %v2130, 0.0
    %2139 = vrot.lane.b32.xlu0 %v2115, 118
    %v2140 = vpop.permute.xlu0 %2139
    %2141 = vrot.lane.b32.xlu0 %v2116, 118
    %v2142 = vpop.permute.xlu0 %2141
    %2143 = vrot.lane.b32.xlu0 %v2117, 118
    %v2144 = vpop.permute.xlu0 %2143
    %2145 = vrot.lane.b32.xlu0 %v2118, 118
    %v2146 = vpop.permute.xlu0 %2145
    %v2151 = vsel %vm262, %v2140, 0.0
    %v2152 = vsel %vm262, %v2142, 0.0
    %v2153 = vsel %vm262, %v2144, 0.0
    %v2154 = vsel %vm262, %v2146, 0.0
    %2159 = vrot.lane.b32.xlu0 %v2151, 8
    %v2160 = vpop.permute.xlu0 %2159
    %2161 = vrot.lane.b32.xlu0 %v2152, 8
    %v2162 = vpop.permute.xlu0 %2161
    %2163 = vrot.lane.b32.xlu0 %v2153, 8
    %v2164 = vpop.permute.xlu0 %2163
    %2165 = vrot.lane.b32.xlu0 %v2154, 8
    %v2166 = vpop.permute.xlu0 %2165
    %v2171 = vsel %vm203, %v2135, %v2160
    %v2172 = vsel %vm203, %v2136, %v2162
    %v2173 = vsel %vm203, %v2137, %v2164
    %v2174 = vsel %vm203, %v2138, %v2166
    %2175 = vrot.lane.b32.xlu0 %v2115, 127
    %v2176 = vpop.permute.xlu0 %2175
    %2177 = vrot.lane.b32.xlu0 %v2116, 127
    %v2178 = vpop.permute.xlu0 %2177
    %2179 = vrot.lane.b32.xlu0 %v2117, 127
    %v2180 = vpop.permute.xlu0 %2179
    %2181 = vrot.lane.b32.xlu0 %v2118, 127
    %v2182 = vpop.permute.xlu0 %2181
    %v2187 = vsel %vm245, %v2176, 0.0
    %v2188 = vsel %vm245, %v2178, 0.0
    %v2189 = vsel %vm245, %v2180, 0.0
    %v2190 = vsel %vm245, %v2182, 0.0
    %2191 = vrot.lane.b32.xlu0 %v2115, 119
    %v2192 = vpop.permute.xlu0 %2191
    %2193 = vrot.lane.b32.xlu0 %v2116, 119
    %v2194 = vpop.permute.xlu0 %2193
    %2195 = vrot.lane.b32.xlu0 %v2117, 119
    %v2196 = vpop.permute.xlu0 %2195
    %2197 = vrot.lane.b32.xlu0 %v2118, 119
    %v2198 = vpop.permute.xlu0 %2197
    %v2203 = vsel %vm245, %v2192, 0.0
    %v2204 = vsel %vm245, %v2194, 0.0
    %v2205 = vsel %vm245, %v2196, 0.0
    %v2206 = vsel %vm245, %v2198, 0.0
    %2211 = vrot.lane.b32.xlu0 %v2203, 8
    %v2212 = vpop.permute.xlu0 %2211
    %2213 = vrot.lane.b32.xlu0 %v2204, 8
    %v2214 = vpop.permute.xlu0 %2213
    %2215 = vrot.lane.b32.xlu0 %v2205, 8
    %v2216 = vpop.permute.xlu0 %2215
    %2217 = vrot.lane.b32.xlu0 %v2206, 8
    %v2218 = vpop.permute.xlu0 %2217
    %v2223 = vsel %vm203, %v2187, %v2212
    %v2224 = vsel %vm203, %v2188, %v2214
    %v2225 = vsel %vm203, %v2189, %v2216
    %v2226 = vsel %vm203, %v2190, %v2218
    %2227 = vrot.lane.b32.xlu0 %v2115, 1
    %v2228 = vpop.permute.xlu0 %2227
    %2229 = vrot.lane.b32.xlu0 %v2116, 1
    %v2230 = vpop.permute.xlu0 %2229
    %2231 = vrot.lane.b32.xlu0 %v2117, 1
    %v2232 = vpop.permute.xlu0 %2231
    %2233 = vrot.lane.b32.xlu0 %v2118, 1
    %v2234 = vpop.permute.xlu0 %2233
    %v2239 = vsel %vm228, 0.0, %v2228
    %v2240 = vsel %vm228, 0.0, %v2230
    %v2241 = vsel %vm228, 0.0, %v2232
    %v2242 = vsel %vm228, 0.0, %v2234
    %2243 = vrot.lane.b32.xlu0 %v2115, 121
    %v2244 = vpop.permute.xlu0 %2243
    %2245 = vrot.lane.b32.xlu0 %v2116, 121
    %v2246 = vpop.permute.xlu0 %2245
    %2247 = vrot.lane.b32.xlu0 %v2117, 121
    %v2248 = vpop.permute.xlu0 %2247
    %2249 = vrot.lane.b32.xlu0 %v2118, 121
    %v2250 = vpop.permute.xlu0 %2249
    %v2255 = vsel %vm228, 0.0, %v2244
    %v2256 = vsel %vm228, 0.0, %v2246
    %v2257 = vsel %vm228, 0.0, %v2248
    %v2258 = vsel %vm228, 0.0, %v2250
    %2263 = vrot.lane.b32.xlu0 %v2255, 8
    %v2264 = vpop.permute.xlu0 %2263
    %2265 = vrot.lane.b32.xlu0 %v2256, 8
    %v2266 = vpop.permute.xlu0 %2265
    %2267 = vrot.lane.b32.xlu0 %v2257, 8
    %v2268 = vpop.permute.xlu0 %2267
    %2269 = vrot.lane.b32.xlu0 %v2258, 8
    %v2270 = vpop.permute.xlu0 %2269
    %v2275 = vsel %vm203, %v2239, %v2264
    %v2276 = vsel %vm203, %v2240, %v2266
    %v2277 = vsel %vm203, %v2241, %v2268
    %v2278 = vsel %vm203, %v2242, %v2270
    %2279 = vrot.lane.b32.xlu0 %v2115, 2
    %v2280 = vpop.permute.xlu0 %2279
    %2281 = vrot.lane.b32.xlu0 %v2116, 2
    %v2282 = vpop.permute.xlu0 %2281
    %2283 = vrot.lane.b32.xlu0 %v2117, 2
    %v2284 = vpop.permute.xlu0 %2283
    %2285 = vrot.lane.b32.xlu0 %v2118, 2
    %v2286 = vpop.permute.xlu0 %2285
    %v2291 = vsel %vm211, 0.0, %v2280
    %v2292 = vsel %vm211, 0.0, %v2282
    %v2293 = vsel %vm211, 0.0, %v2284
    %v2294 = vsel %vm211, 0.0, %v2286
    %2295 = vrot.lane.b32.xlu0 %v2115, 122
    %v2296 = vpop.permute.xlu0 %2295
    %2297 = vrot.lane.b32.xlu0 %v2116, 122
    %v2298 = vpop.permute.xlu0 %2297
    %2299 = vrot.lane.b32.xlu0 %v2117, 122
    %v2300 = vpop.permute.xlu0 %2299
    %2301 = vrot.lane.b32.xlu0 %v2118, 122
    %v2302 = vpop.permute.xlu0 %2301
    %v2307 = vsel %vm211, 0.0, %v2296
    %v2308 = vsel %vm211, 0.0, %v2298
    %v2309 = vsel %vm211, 0.0, %v2300
    %v2310 = vsel %vm211, 0.0, %v2302
    %2315 = vrot.lane.b32.xlu0 %v2307, 8
    %v2316 = vpop.permute.xlu0 %2315
    %2317 = vrot.lane.b32.xlu0 %v2308, 8
    %v2318 = vpop.permute.xlu0 %2317
    %2319 = vrot.lane.b32.xlu0 %v2309, 8
    %v2320 = vpop.permute.xlu0 %2319
    %2321 = vrot.lane.b32.xlu0 %v2310, 8
    %v2322 = vpop.permute.xlu0 %2321
    %v2327 = vsel %vm203, %v2291, %v2316
    %v2328 = vsel %vm203, %v2292, %v2318
    %v2329 = vsel %vm203, %v2293, %v2320
    %v2330 = vsel %vm203, %v2294, %v2322
    %v2331 = vld [vmem:[#allocation4] sm:$0xff]
    %v2332 = vld [vmem:[#allocation4 + $0x8] sm:$0xff]
    %v2333 = vld [vmem:[#allocation4 + $0x10] sm:$0xff]
    %v2334 = vld [vmem:[#allocation4 + $0x18] sm:$0xff]
    %v2335 = vld [vmem:[#allocation4 + $0x20] sm:$0xff]
    %v2336 = vld [vmem:[#allocation4 + $0x28] sm:$0xff]
    %v2337 = vld [vmem:[#allocation4 + $0x30] sm:$0xff]
    %v2338 = vld [vmem:[#allocation4 + $0x38] sm:$0xff]
    %v2339 = vld [vmem:[#allocation4 + $0x40] sm:$0xff]
    %v2340 = vld [vmem:[#allocation4 + $0x48] sm:$0xff]
    %v2341 = vld [vmem:[#allocation4 + $0x50] sm:$0xff]
    %v2342 = vld [vmem:[#allocation4 + $0x58] sm:$0xff]
    %v2343 = vld [vmem:[#allocation4 + $0x60] sm:$0xff]
    %v2344 = vld [vmem:[#allocation4 + $0x68] sm:$0xff]
    %v2345 = vld [vmem:[#allocation4 + $0x70] sm:$0xff]
    %v2346 = vld [vmem:[#allocation4 + $0x78] sm:$0xff]
    %v2348 = vsel %vm1481, %v2332, 0
    %v2351 = vsel %vm1481, %v2334, 0
    %v2354 = vsel %vm1481, %v2336, 0
    %v2357 = vsel %vm1481, %v2338, 0
    %v2360 = vsel %vm1481, %v2340, 0
    %v2363 = vsel %vm1481, %v2342, 0
    %v2366 = vsel %vm1481, %v2344, 0
    %v2369 = vsel %vm1481, %v2346, 0
    %2371 = vmatpush.msra.mxu0 %v2278
    %2372 = vmatpush.msra.mxu0 %v2277
    %2373 = vmatpush.msra.mxu0 %v2276
    %2374 = vmatpush.msra.mxu0 %v2275
    %2375 = vmatpush.msra.mxu0 %v2118
    %2376 = vmatpush.msra.mxu0 %v2117
    %2377 = vmatpush.msra.mxu0 %v2116
    %2378 = vmatpush.msra.mxu0 %v2115
    %2379 = vmatpush.msra.mxu0 %v2226
    %2380 = vmatpush.msra.mxu0 %v2225
    %2381 = vmatpush.msra.mxu0 %v2224
    %2382 = vmatpush.msra.mxu0 %v2223
    %2383 = vmatpush.msra.mxu0 %v2174
    %2384 = vmatpush.msra.mxu0 %v2173
    %2385 = vmatpush.msra.mxu0 %v2172
    %2386 = vmatpush.msra.mxu0 %v2171
    %2387 = vmatmul.f32.gmra.mxu0 %v2331
    %v2388 = vpop.f32.mrf.mxu0
    %v2389 = vadd.f32 0.0, %v2388
    %2390 = vmatmul.f32.gmra.mxu0 %v2333
    %v2391 = vpop.f32.mrf.mxu0
    %v2392 = vadd.f32 0.0, %v2391
    %2393 = vmatmul.f32.gmra.mxu0 %v2335
    %v2394 = vpop.f32.mrf.mxu0
    %v2395 = vadd.f32 0.0, %v2394
    %2396 = vmatmul.f32.gmra.mxu0 %v2337
    %v2397 = vpop.f32.mrf.mxu0
    %v2398 = vadd.f32 0.0, %v2397
    %2399 = vmatmul.f32.gmra.mxu0 %v2339
    %v2400 = vpop.f32.mrf.mxu0
    %v2401 = vadd.f32 0.0, %v2400
    %2402 = vmatmul.f32.gmra.mxu0 %v2341
    %v2403 = vpop.f32.mrf.mxu0
    %v2404 = vadd.f32 0.0, %v2403
    %2405 = vmatmul.f32.gmra.mxu0 %v2343
    %v2406 = vpop.f32.mrf.mxu0
    %v2407 = vadd.f32 0.0, %v2406
    %2408 = vmatmul.f32.gmra.mxu0 %v2345
    %v2409 = vpop.f32.mrf.mxu0
    %v2410 = vadd.f32 0.0, %v2409
    %2411 = vdwg.mxu0
    %2412 = vmatpush.msra.mxu0 0.0
    %2413 = vmatpush.msra.mxu0 0.0
    %2414 = vmatpush.msra.mxu0 0.0
    %2415 = vmatpush.msra.mxu0 0.0
    %2416 = vmatpush.msra.mxu0 0.0
    %2417 = vmatpush.msra.mxu0 0.0
    %2418 = vmatpush.msra.mxu0 0.0
    %2419 = vmatpush.msra.mxu0 0.0
    %2420 = vmatpush.msra.mxu0 0.0
    %2421 = vmatpush.msra.mxu0 0.0
    %2422 = vmatpush.msra.mxu0 0.0
    %2423 = vmatpush.msra.mxu0 0.0
    %2424 = vmatpush.msra.mxu0 %v2330
    %2425 = vmatpush.msra.mxu0 %v2329
    %2426 = vmatpush.msra.mxu0 %v2328
    %2427 = vmatpush.msra.mxu0 %v2327
    %2428 = vmatmul.f32.gmra.mxu0 %v2348
    %v2429 = vpop.f32.mrf.mxu0
    %v2430 = vadd.f32 %v2389, %v2429
    %2431 = vmatmul.f32.gmra.mxu0 %v2351
    %v2432 = vpop.f32.mrf.mxu0
    %v2433 = vadd.f32 %v2392, %v2432
    %2434 = vmatmul.f32.gmra.mxu0 %v2354
    %v2435 = vpop.f32.mrf.mxu0
    %v2436 = vadd.f32 %v2395, %v2435
    %2437 = vmatmul.f32.gmra.mxu0 %v2357
    %v2438 = vpop.f32.mrf.mxu0
    %v2439 = vadd.f32 %v2398, %v2438
    %2440 = vmatmul.f32.gmra.mxu0 %v2360
    %v2441 = vpop.f32.mrf.mxu0
    %v2442 = vadd.f32 %v2401, %v2441
    %2443 = vmatmul.f32.gmra.mxu0 %v2363
    %v2444 = vpop.f32.mrf.mxu0
    %v2445 = vadd.f32 %v2404, %v2444
    %2446 = vmatmul.f32.gmra.mxu0 %v2366
    %v2447 = vpop.f32.mrf.mxu0
    %v2448 = vadd.f32 %v2407, %v2447
    %2449 = vmatmul.f32.gmra.mxu0 %v2369
    %v2450 = vpop.f32.mrf.mxu0
    %v2451 = vadd.f32 %v2410, %v2450
    %2452 = vdwg.mxu0
    %v2453 = vld [vmem:[%s35] sm:$0xff]
    %v2454 = vld [vmem:[%s35 + $0x8] sm:$0xff]
    %v2455 = vld [vmem:[%s35 + $0x10] sm:$0xff]
    %v2456 = vld [vmem:[%s35 + $0x18] sm:$0xff]
    %2458 = vset.pattern.permute.xlu0 0
    %2459 = vperm.xlu0 %2458, %v2453
    %v2460 = vpop.permute.xlu0 %2459
    %2463 = vset.pattern.permute.xlu0 0
    %2464 = vperm.xlu0 %2463, %v2454
    %v2465 = vpop.permute.xlu0 %2464
    %2468 = vset.pattern.permute.xlu0 0
    %2469 = vperm.xlu0 %2468, %v2455
    %v2470 = vpop.permute.xlu0 %2469
    %2473 = vset.pattern.permute.xlu0 0
    %2474 = vperm.xlu0 %2473, %v2456
    %v2475 = vpop.permute.xlu0 %2474
    %v2477 = vadd.f32 %v2430, %v2460
    %v2478 = vadd.f32 %v2433, %v2465
    %v2479 = vadd.f32 %v2436, %v2470
    %v2480 = vadd.f32 %v2439, %v2475
    %v2481 = vmax.f32 %v2477, 0.0
    %v2482 = vmax.f32 %v2478, 0.0
    %v2483 = vmax.f32 %v2479, 0.0
    %v2484 = vmax.f32 %v2480, 0.0
    %v2485 = vadd.f32 %v2442, %v2460
    %v2486 = vadd.f32 %v2445, %v2465
    %v2487 = vadd.f32 %v2448, %v2470
    %v2488 = vadd.f32 %v2451, %v2475
    %v2489 = vmax.f32 %v2485, 0.0
    %v2490 = vmax.f32 %v2486, 0.0
    %v2491 = vmax.f32 %v2487, 0.0
    %v2492 = vmax.f32 %v2488, 0.0
    %v2493 = vsel %vm427, %v2481, 0.0
    %2494 = vadd.xlane.f32.xlu0 %v2493
    %v2495 = vpop.xlane.xlu0 %2494
    %v2496 = vsel %vm427, %v2482, 0.0
    %2497 = vadd.xlane.f32.xlu0 %v2496
    %v2498 = vpop.xlane.xlu0 %2497
    %v2499 = vsel %vm427, %v2483, 0.0
    %2500 = vadd.xlane.f32.xlu0 %v2499
    %v2501 = vpop.xlane.xlu0 %2500
    %v2502 = vsel %vm427, %v2484, 0.0
    %2503 = vadd.xlane.f32.xlu0 %v2502
    %v2504 = vpop.xlane.xlu0 %2503
    %v2505 = vadd.f32 %v2495, 0.0
    %v2506 = vadd.f32 %v2498, 0.0
    %v2507 = vadd.f32 %v2501, 0.0
    %v2508 = vadd.f32 %v2504, 0.0
    %v2509 = vsel %vm427, %v2489, 0.0
    %2510 = vadd.xlane.f32.xlu0 %v2509
    %v2511 = vpop.xlane.xlu0 %2510
    %v2512 = vsel %vm427, %v2490, 0.0
    %2513 = vadd.xlane.f32.xlu0 %v2512
    %v2514 = vpop.xlane.xlu0 %2513
    %v2515 = vsel %vm427, %v2491, 0.0
    %2516 = vadd.xlane.f32.xlu0 %v2515
    %v2517 = vpop.xlane.xlu0 %2516
    %v2518 = vsel %vm427, %v2492, 0.0
    %2519 = vadd.xlane.f32.xlu0 %v2518
    %v2520 = vpop.xlane.xlu0 %2519
    %v2521 = vadd.f32 %v2505, %v2511
    %v2522 = vadd.f32 %v2506, %v2514
    %v2523 = vadd.f32 %v2507, %v2517
    %v2524 = vadd.f32 %v2508, %v2520
    %v2525 = vmul.f32 %v2521, 0.03125
    %v2526 = vmul.f32 %v2522, 0.03125
    %v2527 = vmul.f32 %v2523, 0.03125
    %v2528 = vmul.f32 %v2524, 0.03125
    %v2529 = vsub.f32 %v2481, %v2525
    %v2530 = vsub.f32 %v2482, %v2526
    %v2531 = vsub.f32 %v2483, %v2527
    %v2532 = vsub.f32 %v2484, %v2528
    %v2533 = vmul.f32 %v2529, %v2529
    %v2534 = vmul.f32 %v2530, %v2530
    %v2535 = vmul.f32 %v2531, %v2531
    %v2536 = vmul.f32 %v2532, %v2532
    %v2537 = vsel %vm427, %v2533, 0.0
    %2538 = vadd.xlane.f32.xlu0 %v2537
    %v2539 = vpop.xlane.xlu0 %2538
    %v2540 = vsel %vm427, %v2534, 0.0
    %2541 = vadd.xlane.f32.xlu0 %v2540
    %v2542 = vpop.xlane.xlu0 %2541
    %v2543 = vsel %vm427, %v2535, 0.0
    %2544 = vadd.xlane.f32.xlu0 %v2543
    %v2545 = vpop.xlane.xlu0 %2544
    %v2546 = vsel %vm427, %v2536, 0.0
    %2547 = vadd.xlane.f32.xlu0 %v2546
    %v2548 = vpop.xlane.xlu0 %2547
    %v2549 = vadd.f32 %v2539, 0.0
    %v2550 = vadd.f32 %v2542, 0.0
    %v2551 = vadd.f32 %v2545, 0.0
    %v2552 = vadd.f32 %v2548, 0.0
    %v2553 = vsub.f32 %v2489, %v2525
    %v2554 = vsub.f32 %v2490, %v2526
    %v2555 = vsub.f32 %v2491, %v2527
    %v2556 = vsub.f32 %v2492, %v2528
    %v2557 = vmul.f32 %v2553, %v2553
    %v2558 = vmul.f32 %v2554, %v2554
    %v2559 = vmul.f32 %v2555, %v2555
    %v2560 = vmul.f32 %v2556, %v2556
    %v2561 = vsel %vm427, %v2557, 0.0
    %2562 = vadd.xlane.f32.xlu0 %v2561
    %v2563 = vpop.xlane.xlu0 %2562
    %v2564 = vsel %vm427, %v2558, 0.0
    %2565 = vadd.xlane.f32.xlu0 %v2564
    %v2566 = vpop.xlane.xlu0 %2565
    %v2567 = vsel %vm427, %v2559, 0.0
    %2568 = vadd.xlane.f32.xlu0 %v2567
    %v2569 = vpop.xlane.xlu0 %2568
    %v2570 = vsel %vm427, %v2560, 0.0
    %2571 = vadd.xlane.f32.xlu0 %v2570
    %v2572 = vpop.xlane.xlu0 %2571
    %v2573 = vadd.f32 %v2549, %v2563
    %v2574 = vadd.f32 %v2550, %v2566
    %v2575 = vadd.f32 %v2551, %v2569
    %v2576 = vadd.f32 %v2552, %v2572
    %v2577 = vmul.f32 %v2573, 0.03125
    %v2578 = vmul.f32 %v2574, 0.03125
    %v2579 = vmul.f32 %v2575, 0.03125
    %v2580 = vmul.f32 %v2576, 0.03125
    %v2581 = vadd.f32 %v2577, 1e-05
    %v2582 = vadd.f32 %v2578, 1e-05
    %v2583 = vadd.f32 %v2579, 1e-05
    %v2584 = vadd.f32 %v2580, 1e-05
    %v2585 = vrsqrt.pop %v2581
    %v2586 = vmul.f32 %v2585, %v2581
    %v2587 = vmul.f32 %v2586, %v2585
    %v2588 = vmul.f32 0.5, %v2587
    %v2589 = vsub.f32 1.5, %v2588
    %v2590 = vmul.f32 %v2585, %v2589
    %vm2591 = vweird.f32 %v2581
    %vm2592 = vweird.f32 %v2585
    %vm2593 = vmor %vm2591, %vm2592
    %v2594 = vsel %vm2593, %v2585, %v2590
    %v2595 = vrsqrt.pop %v2582
    %v2596 = vmul.f32 %v2595, %v2582
    %v2597 = vmul.f32 %v2596, %v2595
    %v2598 = vmul.f32 0.5, %v2597
    %v2599 = vsub.f32 1.5, %v2598
    %v2600 = vmul.f32 %v2595, %v2599
    %vm2601 = vweird.f32 %v2582
    %vm2602 = vweird.f32 %v2595
    %vm2603 = vmor %vm2601, %vm2602
    %v2604 = vsel %vm2603, %v2595, %v2600
    %v2605 = vrsqrt.pop %v2583
    %v2606 = vmul.f32 %v2605, %v2583
    %v2607 = vmul.f32 %v2606, %v2605
    %v2608 = vmul.f32 0.5, %v2607
    %v2609 = vsub.f32 1.5, %v2608
    %v2610 = vmul.f32 %v2605, %v2609
    %vm2611 = vweird.f32 %v2583
    %vm2612 = vweird.f32 %v2605
    %vm2613 = vmor %vm2611, %vm2612
    %v2614 = vsel %vm2613, %v2605, %v2610
    %v2615 = vrsqrt.pop %v2584
    %v2616 = vmul.f32 %v2615, %v2584
    %v2617 = vmul.f32 %v2616, %v2615
    %v2618 = vmul.f32 0.5, %v2617
    %v2619 = vsub.f32 1.5, %v2618
    %v2620 = vmul.f32 %v2615, %v2619
    %vm2621 = vweird.f32 %v2584
    %vm2622 = vweird.f32 %v2615
    %vm2623 = vmor %vm2621, %vm2622
    %v2624 = vsel %vm2623, %v2615, %v2620
    %v2625 = vmul.f32 %v2529, %v2594
    %v2626 = vmul.f32 %v2530, %v2604
    %v2627 = vmul.f32 %v2531, %v2614
    %v2628 = vmul.f32 %v2532, %v2624
    %v2629 = vld [vmem:[%s37] sm:$0xff]
    %v2630 = vld [vmem:[%s37 + $0x8] sm:$0xff]
    %v2631 = vld [vmem:[%s37 + $0x10] sm:$0xff]
    %v2632 = vld [vmem:[%s37 + $0x18] sm:$0xff]
    %2634 = vset.pattern.permute.xlu0 0
    %2635 = vperm.xlu0 %2634, %v2629
    %v2636 = vpop.permute.xlu0 %2635
    %2639 = vset.pattern.permute.xlu0 0
    %2640 = vperm.xlu0 %2639, %v2630
    %v2641 = vpop.permute.xlu0 %2640
    %2644 = vset.pattern.permute.xlu0 0
    %2645 = vperm.xlu0 %2644, %v2631
    %v2646 = vpop.permute.xlu0 %2645
    %2649 = vset.pattern.permute.xlu0 0
    %2650 = vperm.xlu0 %2649, %v2632
    %v2651 = vpop.permute.xlu0 %2650
    %v2653 = vmul.f32 %v2625, %v2636
    %v2654 = vmul.f32 %v2626, %v2641
    %v2655 = vmul.f32 %v2627, %v2646
    %v2656 = vmul.f32 %v2628, %v2651
    %v2657 = vld [vmem:[%s39] sm:$0xff]
    %v2658 = vld [vmem:[%s39 + $0x8] sm:$0xff]
    %v2659 = vld [vmem:[%s39 + $0x10] sm:$0xff]
    %v2660 = vld [vmem:[%s39 + $0x18] sm:$0xff]
    %2662 = vset.pattern.permute.xlu0 0
    %2663 = vperm.xlu0 %2662, %v2657
    %v2664 = vpop.permute.xlu0 %2663
    %2667 = vset.pattern.permute.xlu0 0
    %2668 = vperm.xlu0 %2667, %v2658
    %v2669 = vpop.permute.xlu0 %2668
    %2672 = vset.pattern.permute.xlu0 0
    %2673 = vperm.xlu0 %2672, %v2659
    %v2674 = vpop.permute.xlu0 %2673
    %2677 = vset.pattern.permute.xlu0 0
    %2678 = vperm.xlu0 %2677, %v2660
    %v2679 = vpop.permute.xlu0 %2678
    %v2681 = vadd.f32 %v2653, %v2664
    %v2682 = vadd.f32 %v2654, %v2669
    %v2683 = vadd.f32 %v2655, %v2674
    %v2684 = vadd.f32 %v2656, %v2679
    %v2685 = vmul.f32 %v2553, %v2594
    %v2686 = vmul.f32 %v2554, %v2604
    %v2687 = vmul.f32 %v2555, %v2614
    %v2688 = vmul.f32 %v2556, %v2624
    %v2689 = vmul.f32 %v2685, %v2636
    %v2690 = vmul.f32 %v2686, %v2641
    %v2691 = vmul.f32 %v2687, %v2646
    %v2692 = vmul.f32 %v2688, %v2651
    %v2693 = vadd.f32 %v2689, %v2664
    %v2694 = vadd.f32 %v2690, %v2669
    %v2695 = vadd.f32 %v2691, %v2674
    %v2696 = vadd.f32 %v2692, %v2679
    %2701 = vrot.lane.b32.xlu0 %v2681, 127
    %v2702 = vpop.permute.xlu0 %2701
    %2703 = vrot.lane.b32.xlu0 %v2682, 127
    %v2704 = vpop.permute.xlu0 %2703
    %2705 = vrot.lane.b32.xlu0 %v2683, 127
    %v2706 = vpop.permute.xlu0 %2705
    %2707 = vrot.lane.b32.xlu0 %v2684, 127
    %v2708 = vpop.permute.xlu0 %2707
    %v2713 = vsel %vm245, %v2702, 0.0
    %v2714 = vsel %vm245, %v2704, 0.0
    %v2715 = vsel %vm245, %v2706, 0.0
    %v2716 = vsel %vm245, %v2708, 0.0
    %2717 = vrot.lane.b32.xlu0 %v2681, 119
    %v2718 = vpop.permute.xlu0 %2717
    %2719 = vrot.lane.b32.xlu0 %v2682, 119
    %v2720 = vpop.permute.xlu0 %2719
    %2721 = vrot.lane.b32.xlu0 %v2683, 119
    %v2722 = vpop.permute.xlu0 %2721
    %2723 = vrot.lane.b32.xlu0 %v2684, 119
    %v2724 = vpop.permute.xlu0 %2723
    %v2729 = vsel %vm245, %v2718, 0.0
    %v2730 = vsel %vm245, %v2720, 0.0
    %v2731 = vsel %vm245, %v2722, 0.0
    %v2732 = vsel %vm245, %v2724, 0.0
    %2737 = vrot.lane.b32.xlu0 %v2729, 8
    %v2738 = vpop.permute.xlu0 %2737
    %2739 = vrot.lane.b32.xlu0 %v2730, 8
    %v2740 = vpop.permute.xlu0 %2739
    %2741 = vrot.lane.b32.xlu0 %v2731, 8
    %v2742 = vpop.permute.xlu0 %2741
    %2743 = vrot.lane.b32.xlu0 %v2732, 8
    %v2744 = vpop.permute.xlu0 %2743
    %v2749 = vsel %vm203, %v2713, %v2738
    %v2750 = vsel %vm203, %v2714, %v2740
    %v2751 = vsel %vm203, %v2715, %v2742
    %v2752 = vsel %vm203, %v2716, %v2744
    %2757 = vrot.lane.b32.xlu0 %v2693, 1
    %v2758 = vpop.permute.xlu0 %2757
    %2759 = vrot.lane.b32.xlu0 %v2694, 1
    %v2760 = vpop.permute.xlu0 %2759
    %2761 = vrot.lane.b32.xlu0 %v2695, 1
    %v2762 = vpop.permute.xlu0 %2761
    %2763 = vrot.lane.b32.xlu0 %v2696, 1
    %v2764 = vpop.permute.xlu0 %2763
    %v2769 = vsel %vm228, 0.0, %v2758
    %v2770 = vsel %vm228, 0.0, %v2760
    %v2771 = vsel %vm228, 0.0, %v2762
    %v2772 = vsel %vm228, 0.0, %v2764
    %2773 = vrot.lane.b32.xlu0 %v2693, 121
    %v2774 = vpop.permute.xlu0 %2773
    %2775 = vrot.lane.b32.xlu0 %v2694, 121
    %v2776 = vpop.permute.xlu0 %2775
    %2777 = vrot.lane.b32.xlu0 %v2695, 121
    %v2778 = vpop.permute.xlu0 %2777
    %2779 = vrot.lane.b32.xlu0 %v2696, 121
    %v2780 = vpop.permute.xlu0 %2779
    %v2785 = vsel %vm228, 0.0, %v2774
    %v2786 = vsel %vm228, 0.0, %v2776
    %v2787 = vsel %vm228, 0.0, %v2778
    %v2788 = vsel %vm228, 0.0, %v2780
    %2793 = vrot.lane.b32.xlu0 %v2785, 8
    %v2794 = vpop.permute.xlu0 %2793
    %2795 = vrot.lane.b32.xlu0 %v2786, 8
    %v2796 = vpop.permute.xlu0 %2795
    %2797 = vrot.lane.b32.xlu0 %v2787, 8
    %v2798 = vpop.permute.xlu0 %2797
    %2799 = vrot.lane.b32.xlu0 %v2788, 8
    %v2800 = vpop.permute.xlu0 %2799
    %v2805 = vsel %vm203, %v2769, %v2794
    %v2806 = vsel %vm203, %v2770, %v2796
    %v2807 = vsel %vm203, %v2771, %v2798
    %v2808 = vsel %vm203, %v2772, %v2800
    %v2809 = vld [vmem:[%s41] sm:$0xff]
    %v2810 = vld [vmem:[%s41 + $0x8] sm:$0xff]
    %v2811 = vld [vmem:[%s41 + $0x10] sm:$0xff]
    %v2812 = vld [vmem:[%s41 + $0x18] sm:$0xff]
    %2813 = vmatpush.msra.mxu0 %v2696
    %2814 = vmatpush.msra.mxu0 %v2695
    %2815 = vmatpush.msra.mxu0 %v2694
    %2816 = vmatpush.msra.mxu0 %v2693
    %2817 = vmatpush.msra.mxu0 %v2808
    %2818 = vmatpush.msra.mxu0 %v2807
    %2819 = vmatpush.msra.mxu0 %v2806
    %2820 = vmatpush.msra.mxu0 %v2805
    %2821 = vmatpush.msra.mxu0 %v2752
    %2822 = vmatpush.msra.mxu0 %v2751
    %2823 = vmatpush.msra.mxu0 %v2750
    %2824 = vmatpush.msra.mxu0 %v2749
    %2825 = vmatpush.msra.mxu0 %v2684
    %2826 = vmatpush.msra.mxu0 %v2683
    %2827 = vmatpush.msra.mxu0 %v2682
    %2828 = vmatpush.msra.mxu0 %v2681
    %2829 = vmatmul.f32.gmra.mxu0 %v2809
    %v2830 = vpop.f32.mrf.mxu0
    %v2831 = vadd.f32 0.0, %v2830
    %2832 = vmatmul.f32.gmra.mxu0 %v2810
    %v2833 = vpop.f32.mrf.mxu0
    %v2834 = vadd.f32 0.0, %v2833
    %2835 = vmatmul.f32.gmra.mxu0 %v2811
    %v2836 = vpop.f32.mrf.mxu0
    %v2837 = vadd.f32 0.0, %v2836
    %2838 = vmatmul.f32.gmra.mxu0 %v2812
    %v2839 = vpop.f32.mrf.mxu0
    %v2840 = vadd.f32 0.0, %v2839
    %2841 = vdwg.mxu0
    %v2842 = vld [vmem:[%s43] sm:$0xff]
    %v2843 = vld [vmem:[%s43 + $0x8] sm:$0xff]
    %2845 = vset.pattern.permute.xlu0 0
    %2846 = vperm.xlu0 %2845, %v2842
    %v2847 = vpop.permute.xlu0 %2846
    %2850 = vset.pattern.permute.xlu0 0
    %2851 = vperm.xlu0 %2850, %v2843
    %v2852 = vpop.permute.xlu0 %2851
    %v2854 = vadd.f32 %v2831, %v2847
    %v2855 = vadd.f32 %v2834, %v2852
    %v2856 = vadd.f32 %v2837, %v2847
    %v2857 = vadd.f32 %v2840, %v2852
    %v2858 = vadd.f32 %v2854, %v1564
    %v2859 = vadd.f32 %v2855, %v1565
    %v2860 = vadd.f32 %v2856, %v1566
    %v2861 = vadd.f32 %v2857, %v1567
    %2864 = vrot.lane.b32.xlu0 %v2858, 123
    %v2865 = vpop.permute.xlu0 %2864
    %2866 = vrot.lane.b32.xlu0 %v2859, 123
    %v2867 = vpop.permute.xlu0 %2866
    %2870 = vrot.lane.b32.xlu0 %v2858, 3
    %v2871 = vpop.permute.xlu0 %2870
    %2872 = vrot.lane.b32.xlu0 %v2859, 3
    %v2873 = vpop.permute.xlu0 %2872
    %v2876 = vsel %vm193, %v2865, %v2871
    %v2877 = vsel %vm193, %v2867, %v2873
    %2878 = vrot.lane.b32.xlu0 %v2858, 115
    %v2879 = vpop.permute.xlu0 %2878
    %2880 = vrot.lane.b32.xlu0 %v2859, 115
    %v2881 = vpop.permute.xlu0 %2880
    %v2884 = vsel %vm193, %v2879, %v2865
    %v2885 = vsel %vm193, %v2881, %v2867
    %2888 = vrot.lane.b32.xlu0 %v2884, 8
    %v2889 = vpop.permute.xlu0 %2888
    %2890 = vrot.lane.b32.xlu0 %v2885, 8
    %v2891 = vpop.permute.xlu0 %2890
    %v2894 = vsel %vm203, %v2876, %v2889
    %v2895 = vsel %vm203, %v2877, %v2891
    %2896 = vrot.lane.b32.xlu0 %v2858, 122
    %v2897 = vpop.permute.xlu0 %2896
    %2898 = vrot.lane.b32.xlu0 %v2859, 122
    %v2899 = vpop.permute.xlu0 %2898
    %2902 = vrot.lane.b32.xlu0 %v2858, 2
    %v2903 = vpop.permute.xlu0 %2902
    %2904 = vrot.lane.b32.xlu0 %v2859, 2
    %v2905 = vpop.permute.xlu0 %2904
    %v2908 = vsel %vm211, %v2897, %v2903
    %v2909 = vsel %vm211, %v2899, %v2905
    %2910 = vrot.lane.b32.xlu0 %v2858, 114
    %v2911 = vpop.permute.xlu0 %2910
    %2912 = vrot.lane.b32.xlu0 %v2859, 114
    %v2913 = vpop.permute.xlu0 %2912
    %v2916 = vsel %vm211, %v2911, %v2897
    %v2917 = vsel %vm211, %v2913, %v2899
    %2920 = vrot.lane.b32.xlu0 %v2916, 8
    %v2921 = vpop.permute.xlu0 %2920
    %2922 = vrot.lane.b32.xlu0 %v2917, 8
    %v2923 = vpop.permute.xlu0 %2922
    %v2926 = vsel %vm203, %v2908, %v2921
    %v2927 = vsel %vm203, %v2909, %v2923
    %2928 = vrot.lane.b32.xlu0 %v2858, 121
    %v2929 = vpop.permute.xlu0 %2928
    %2930 = vrot.lane.b32.xlu0 %v2859, 121
    %v2931 = vpop.permute.xlu0 %2930
    %2934 = vrot.lane.b32.xlu0 %v2858, 1
    %v2935 = vpop.permute.xlu0 %2934
    %2936 = vrot.lane.b32.xlu0 %v2859, 1
    %v2937 = vpop.permute.xlu0 %2936
    %v2940 = vsel %vm228, %v2929, %v2935
    %v2941 = vsel %vm228, %v2931, %v2937
    %2942 = vrot.lane.b32.xlu0 %v2858, 113
    %v2943 = vpop.permute.xlu0 %2942
    %2944 = vrot.lane.b32.xlu0 %v2859, 113
    %v2945 = vpop.permute.xlu0 %2944
    %v2948 = vsel %vm228, %v2943, %v2929
    %v2949 = vsel %vm228, %v2945, %v2931
    %2952 = vrot.lane.b32.xlu0 %v2948, 8
    %v2953 = vpop.permute.xlu0 %2952
    %2954 = vrot.lane.b32.xlu0 %v2949, 8
    %v2955 = vpop.permute.xlu0 %2954
    %v2958 = vsel %vm203, %v2940, %v2953
    %v2959 = vsel %vm203, %v2941, %v2955
    %2960 = vrot.lane.b32.xlu0 %v2858, 127
    %v2961 = vpop.permute.xlu0 %2960
    %2962 = vrot.lane.b32.xlu0 %v2859, 127
    %v2963 = vpop.permute.xlu0 %2962
    %2966 = vrot.lane.b32.xlu0 %v2858, 7
    %v2967 = vpop.permute.xlu0 %2966
    %2968 = vrot.lane.b32.xlu0 %v2859, 7
    %v2969 = vpop.permute.xlu0 %2968
    %v2972 = vsel %vm245, %v2961, %v2967
    %v2973 = vsel %vm245, %v2963, %v2969
    %2974 = vrot.lane.b32.xlu0 %v2858, 119
    %v2975 = vpop.permute.xlu0 %2974
    %2976 = vrot.lane.b32.xlu0 %v2859, 119
    %v2977 = vpop.permute.xlu0 %2976
    %v2980 = vsel %vm245, %v2975, %v2961
    %v2981 = vsel %vm245, %v2977, %v2963
    %2984 = vrot.lane.b32.xlu0 %v2980, 8
    %v2985 = vpop.permute.xlu0 %2984
    %2986 = vrot.lane.b32.xlu0 %v2981, 8
    %v2987 = vpop.permute.xlu0 %2986
    %v2990 = vsel %vm203, %v2972, %v2985
    %v2991 = vsel %vm203, %v2973, %v2987
    %2992 = vrot.lane.b32.xlu0 %v2858, 126
    %v2993 = vpop.permute.xlu0 %2992
    %2994 = vrot.lane.b32.xlu0 %v2859, 126
    %v2995 = vpop.permute.xlu0 %2994
    %2998 = vrot.lane.b32.xlu0 %v2858, 6
    %v2999 = vpop.permute.xlu0 %2998
    %3000 = vrot.lane.b32.xlu0 %v2859, 6
    %v3001 = vpop.permute.xlu0 %3000
    %v3004 = vsel %vm262, %v2993, %v2999
    %v3005 = vsel %vm262, %v2995, %v3001
    %3006 = vrot.lane.b32.xlu0 %v2858, 118
    %v3007 = vpop.permute.xlu0 %3006
    %3008 = vrot.lane.b32.xlu0 %v2859, 118
    %v3009 = vpop.permute.xlu0 %3008
    %v3012 = vsel %vm262, %v3007, %v2993
    %v3013 = vsel %vm262, %v3009, %v2995
    %3016 = vrot.lane.b32.xlu0 %v3012, 8
    %v3017 = vpop.permute.xlu0 %3016
    %3018 = vrot.lane.b32.xlu0 %v3013, 8
    %v3019 = vpop.permute.xlu0 %3018
    %v3022 = vsel %vm203, %v3004, %v3017
    %v3023 = vsel %vm203, %v3005, %v3019
    %3024 = vrot.lane.b32.xlu0 %v2858, 125
    %v3025 = vpop.permute.xlu0 %3024
    %3026 = vrot.lane.b32.xlu0 %v2859, 125
    %v3027 = vpop.permute.xlu0 %3026
    %3030 = vrot.lane.b32.xlu0 %v2858, 5
    %v3031 = vpop.permute.xlu0 %3030
    %3032 = vrot.lane.b32.xlu0 %v2859, 5
    %v3033 = vpop.permute.xlu0 %3032
    %v3036 = vsel %vm279, %v3025, %v3031
    %v3037 = vsel %vm279, %v3027, %v3033
    %3038 = vrot.lane.b32.xlu0 %v2858, 117
    %v3039 = vpop.permute.xlu0 %3038
    %3040 = vrot.lane.b32.xlu0 %v2859, 117
    %v3041 = vpop.permute.xlu0 %3040
    %v3044 = vsel %vm279, %v3039, %v3025
    %v3045 = vsel %vm279, %v3041, %v3027
    %3048 = vrot.lane.b32.xlu0 %v3044, 8
    %v3049 = vpop.permute.xlu0 %3048
    %3050 = vrot.lane.b32.xlu0 %v3045, 8
    %v3051 = vpop.permute.xlu0 %3050
    %v3054 = vsel %vm203, %v3036, %v3049
    %v3055 = vsel %vm203, %v3037, %v3051
    %3058 = vrot.lane.b32.xlu0 %v2860, 122
    %v3059 = vpop.permute.xlu0 %3058
    %3060 = vrot.lane.b32.xlu0 %v2861, 122
    %v3061 = vpop.permute.xlu0 %3060
    %3064 = vrot.lane.b32.xlu0 %v2860, 2
    %v3065 = vpop.permute.xlu0 %3064
    %3066 = vrot.lane.b32.xlu0 %v2861, 2
    %v3067 = vpop.permute.xlu0 %3066
    %v3070 = vsel %vm211, %v3059, %v3065
    %v3071 = vsel %vm211, %v3061, %v3067
    %3072 = vrot.lane.b32.xlu0 %v2860, 114
    %v3073 = vpop.permute.xlu0 %3072
    %3074 = vrot.lane.b32.xlu0 %v2861, 114
    %v3075 = vpop.permute.xlu0 %3074
    %v3078 = vsel %vm211, %v3073, %v3059
    %v3079 = vsel %vm211, %v3075, %v3061
    %3082 = vrot.lane.b32.xlu0 %v3078, 8
    %v3083 = vpop.permute.xlu0 %3082
    %3084 = vrot.lane.b32.xlu0 %v3079, 8
    %v3085 = vpop.permute.xlu0 %3084
    %v3088 = vsel %vm203, %v3070, %v3083
    %v3089 = vsel %vm203, %v3071, %v3085
    %3090 = vrot.lane.b32.xlu0 %v2860, 121
    %v3091 = vpop.permute.xlu0 %3090
    %3092 = vrot.lane.b32.xlu0 %v2861, 121
    %v3093 = vpop.permute.xlu0 %3092
    %3096 = vrot.lane.b32.xlu0 %v2860, 1
    %v3097 = vpop.permute.xlu0 %3096
    %3098 = vrot.lane.b32.xlu0 %v2861, 1
    %v3099 = vpop.permute.xlu0 %3098
    %v3102 = vsel %vm228, %v3091, %v3097
    %v3103 = vsel %vm228, %v3093, %v3099
    %3104 = vrot.lane.b32.xlu0 %v2860, 113
    %v3105 = vpop.permute.xlu0 %3104
    %3106 = vrot.lane.b32.xlu0 %v2861, 113
    %v3107 = vpop.permute.xlu0 %3106
    %v3110 = vsel %vm228, %v3105, %v3091
    %v3111 = vsel %vm228, %v3107, %v3093
    %3114 = vrot.lane.b32.xlu0 %v3110, 8
    %v3115 = vpop.permute.xlu0 %3114
    %3116 = vrot.lane.b32.xlu0 %v3111, 8
    %v3117 = vpop.permute.xlu0 %3116
    %v3120 = vsel %vm203, %v3102, %v3115
    %v3121 = vsel %vm203, %v3103, %v3117
    %3122 = vrot.lane.b32.xlu0 %v2860, 127
    %v3123 = vpop.permute.xlu0 %3122
    %3124 = vrot.lane.b32.xlu0 %v2861, 127
    %v3125 = vpop.permute.xlu0 %3124
    %3128 = vrot.lane.b32.xlu0 %v2860, 7
    %v3129 = vpop.permute.xlu0 %3128
    %3130 = vrot.lane.b32.xlu0 %v2861, 7
    %v3131 = vpop.permute.xlu0 %3130
    %v3134 = vsel %vm245, %v3123, %v3129
    %v3135 = vsel %vm245, %v3125, %v3131
    %3136 = vrot.lane.b32.xlu0 %v2860, 119
    %v3137 = vpop.permute.xlu0 %3136
    %3138 = vrot.lane.b32.xlu0 %v2861, 119
    %v3139 = vpop.permute.xlu0 %3138
    %v3142 = vsel %vm245, %v3137, %v3123
    %v3143 = vsel %vm245, %v3139, %v3125
    %3146 = vrot.lane.b32.xlu0 %v3142, 8
    %v3147 = vpop.permute.xlu0 %3146
    %3148 = vrot.lane.b32.xlu0 %v3143, 8
    %v3149 = vpop.permute.xlu0 %3148
    %v3152 = vsel %vm203, %v3134, %v3147
    %v3153 = vsel %vm203, %v3135, %v3149
    %v3154 = vld [vmem:[%s45] sm:$0xff]
    %v3155 = vld [vmem:[%s45 + $0x8] sm:$0xff]
    %v3156 = vld [vmem:[%s45 + $0x10] sm:$0xff]
    %v3157 = vld [vmem:[%s45 + $0x18] sm:$0xff]
    %v3158 = vld [vmem:[%s45 + $0x20] sm:$0xff]
    %v3159 = vld [vmem:[%s45 + $0x28] sm:$0xff]
    %v3160 = vld [vmem:[%s45 + $0x30] sm:$0xff]
    %v3161 = vld [vmem:[%s45 + $0x38] sm:$0xff]
    %v3162 = vld [vmem:[%s47] sm:$0xff]
    %v3163 = vld [vmem:[%s47 + $0x8] sm:$0xff]
    %v3164 = vld [vmem:[%s47 + $0x10] sm:$0xff]
    %v3165 = vld [vmem:[%s47 + $0x18] sm:$0xff]
    %3167 = vset.pattern.permute.xlu0 0
    %3168 = vperm.xlu0 %3167, %v3162
    %v3169 = vpop.permute.xlu0 %3168
    %3172 = vset.pattern.permute.xlu0 0
    %3173 = vperm.xlu0 %3172, %v3163
    %v3174 = vpop.permute.xlu0 %3173
    %3177 = vset.pattern.permute.xlu0 0
    %3178 = vperm.xlu0 %3177, %v3164
    %v3179 = vpop.permute.xlu0 %3178
    %3182 = vset.pattern.permute.xlu0 0
    %3183 = vperm.xlu0 %3182, %v3165
    %v3184 = vpop.permute.xlu0 %3183
    %v3187 = vsel %vm1892, %v3155, 0
    %v3190 = vsel %vm1892, %v3157, 0
    %v3193 = vsel %vm1892, %v3159, 0
    %v3196 = vsel %vm1892, %v3161, 0
    %3198 = vmatpush.msra.mxu0 %v3089
    %3199 = vmatpush.msra.mxu0 %v3088
    %3200 = vmatpush.msra.mxu0 %v3055
    %3201 = vmatpush.msra.mxu0 %v3054
    %3202 = vmatpush.msra.mxu0 %v3023
    %3203 = vmatpush.msra.mxu0 %v3022
    %3204 = vmatpush.msra.mxu0 %v2991
    %3205 = vmatpush.msra.mxu0 %v2990
    %3206 = vmatpush.msra.mxu0 %v2859
    %3207 = vmatpush.msra.mxu0 %v2858
    %3208 = vmatpush.msra.mxu0 %v2959
    %3209 = vmatpush.msra.mxu0 %v2958
    %3210 = vmatpush.msra.mxu0 %v2927
    %3211 = vmatpush.msra.mxu0 %v2926
    %3212 = vmatpush.msra.mxu0 %v2895
    %3213 = vmatpush.msra.mxu0 %v2894
    %3214 = vmatmul.f32.gmra.mxu0 %v3154
    %v3215 = vpop.f32.mrf.mxu0
    %v3216 = vadd.f32 %v3169, %v3215
    %3217 = vmatmul.f32.gmra.mxu0 %v3156
    %v3218 = vpop.f32.mrf.mxu0
    %v3219 = vadd.f32 %v3174, %v3218
    %3220 = vmatmul.f32.gmra.mxu0 %v3158
    %v3221 = vpop.f32.mrf.mxu0
    %v3222 = vadd.f32 %v3179, %v3221
    %3223 = vmatmul.f32.gmra.mxu0 %v3160
    %v3224 = vpop.f32.mrf.mxu0
    %v3225 = vadd.f32 %v3184, %v3224
    %3226 = vdwg.mxu0
    %3227 = vmatpush.msra.mxu0 0.0
    %3228 = vmatpush.msra.mxu0 0.0
    %3229 = vmatpush.msra.mxu0 0.0
    %3230 = vmatpush.msra.mxu0 0.0
    %3231 = vmatpush.msra.mxu0 0.0
    %3232 = vmatpush.msra.mxu0 0.0
    %3233 = vmatpush.msra.mxu0 0.0
    %3234 = vmatpush.msra.mxu0 0.0
    %3235 = vmatpush.msra.mxu0 0.0
    %3236 = vmatpush.msra.mxu0 0.0
    %3237 = vmatpush.msra.mxu0 %v3153
    %3238 = vmatpush.msra.mxu0 %v3152
    %3239 = vmatpush.msra.mxu0 %v2861
    %3240 = vmatpush.msra.mxu0 %v2860
    %3241 = vmatpush.msra.mxu0 %v3121
    %3242 = vmatpush.msra.mxu0 %v3120
    %3243 = vmatmul.f32.gmra.mxu0 %v3187
    %v3244 = vpop.f32.mrf.mxu0
    %v3245 = vadd.f32 %v3216, %v3244
    %3246 = vmatmul.f32.gmra.mxu0 %v3190
    %v3247 = vpop.f32.mrf.mxu0
    %v3248 = vadd.f32 %v3219, %v3247
    %3249 = vmatmul.f32.gmra.mxu0 %v3193
    %v3250 = vpop.f32.mrf.mxu0
    %v3251 = vadd.f32 %v3222, %v3250
    %3252 = vmatmul.f32.gmra.mxu0 %v3196
    %v3253 = vpop.f32.mrf.mxu0
    %v3254 = vadd.f32 %v3225, %v3253
    %3255 = vdwg.mxu0
    %v3256 = vmax.f32 %v3245, 0.0
    %v3257 = vmax.f32 %v3248, 0.0
    %v3258 = vmax.f32 %v3251, 0.0
    %v3259 = vmax.f32 %v3254, 0.0
    %v3260 = vsel %vm427, %v3256, 0.0
    %3261 = vadd.xlane.f32.xlu0 %v3260
    %v3262 = vpop.xlane.xlu0 %3261
    %v3263 = vsel %vm427, %v3257, 0.0
    %3264 = vadd.xlane.f32.xlu0 %v3263
    %v3265 = vpop.xlane.xlu0 %3264
    %v3266 = vsel %vm427, %v3258, 0.0
    %3267 = vadd.xlane.f32.xlu0 %v3266
    %v3268 = vpop.xlane.xlu0 %3267
    %v3269 = vsel %vm427, %v3259, 0.0
    %3270 = vadd.xlane.f32.xlu0 %v3269
    %v3271 = vpop.xlane.xlu0 %3270
    %v3272 = vadd.f32 %v3262, 0.0
    %v3273 = vadd.f32 %v3265, 0.0
    %v3274 = vadd.f32 %v3268, 0.0
    %v3275 = vadd.f32 %v3271, 0.0
    %v3276 = vmul.f32 %v3272, 0.0625
    %v3277 = vmul.f32 %v3273, 0.0625
    %v3278 = vmul.f32 %v3274, 0.0625
    %v3279 = vmul.f32 %v3275, 0.0625
    %v3280 = vsub.f32 %v3256, %v3276
    %v3281 = vsub.f32 %v3257, %v3277
    %v3282 = vsub.f32 %v3258, %v3278
    %v3283 = vsub.f32 %v3259, %v3279
    %v3284 = vmul.f32 %v3280, %v3280
    %v3285 = vmul.f32 %v3281, %v3281
    %v3286 = vmul.f32 %v3282, %v3282
    %v3287 = vmul.f32 %v3283, %v3283
    %v3288 = vsel %vm427, %v3284, 0.0
    %3289 = vadd.xlane.f32.xlu0 %v3288
    %v3290 = vpop.xlane.xlu0 %3289
    %v3291 = vsel %vm427, %v3285, 0.0
    %3292 = vadd.xlane.f32.xlu0 %v3291
    %v3293 = vpop.xlane.xlu0 %3292
    %v3294 = vsel %vm427, %v3286, 0.0
    %3295 = vadd.xlane.f32.xlu0 %v3294
    %v3296 = vpop.xlane.xlu0 %3295
    %v3297 = vsel %vm427, %v3287, 0.0
    %3298 = vadd.xlane.f32.xlu0 %v3297
    %v3299 = vpop.xlane.xlu0 %3298
    %v3300 = vadd.f32 %v3290, 0.0
    %v3301 = vadd.f32 %v3293, 0.0
    %v3302 = vadd.f32 %v3296, 0.0
    %v3303 = vadd.f32 %v3299, 0.0
    %v3304 = vmul.f32 %v3300, 0.0625
    %v3305 = vmul.f32 %v3301, 0.0625
    %v3306 = vmul.f32 %v3302, 0.0625
    %v3307 = vmul.f32 %v3303, 0.0625
    %v3308 = vadd.f32 %v3304, 1e-05
    %v3309 = vadd.f32 %v3305, 1e-05
    %v3310 = vadd.f32 %v3306, 1e-05
    %v3311 = vadd.f32 %v3307, 1e-05
    %v3312 = vrsqrt.pop %v3308
    %v3313 = vmul.f32 %v3312, %v3308
    %v3314 = vmul.f32 %v3313, %v3312
    %v3315 = vmul.f32 0.5, %v3314
    %v3316 = vsub.f32 1.5, %v3315
    %v3317 = vmul.f32 %v3312, %v3316
    %vm3318 = vweird.f32 %v3308
    %vm3319 = vweird.f32 %v3312
    %vm3320 = vmor %vm3318, %vm3319
    %v3321 = vsel %vm3320, %v3312, %v3317
    %v3322 = vrsqrt.pop %v3309
    %v3323 = vmul.f32 %v3322, %v3309
    %v3324 = vmul.f32 %v3323, %v3322
    %v3325 = vmul.f32 0.5, %v3324
    %v3326 = vsub.f32 1.5, %v3325
    %v3327 = vmul.f32 %v3322, %v3326
    %vm3328 = vweird.f32 %v3309
    %vm3329 = vweird.f32 %v3322
    %vm3330 = vmor %vm3328, %vm3329
    %v3331 = vsel %vm3330, %v3322, %v3327
    %v3332 = vrsqrt.pop %v3310
    %v3333 = vmul.f32 %v3332, %v3310
    %v3334 = vmul.f32 %v3333, %v3332
    %v3335 = vmul.f32 0.5, %v3334
    %v3336 = vsub.f32 1.5, %v3335
    %v3337 = vmul.f32 %v3332, %v3336
    %vm3338 = vweird.f32 %v3310
    %vm3339 = vweird.f32 %v3332
    %vm3340 = vmor %vm3338, %vm3339
    %v3341 = vsel %vm3340, %v3332, %v3337
    %v3342 = vrsqrt.pop %v3311
    %v3343 = vmul.f32 %v3342, %v3311
    %v3344 = vmul.f32 %v3343, %v3342
    %v3345 = vmul.f32 0.5, %v3344
    %v3346 = vsub.f32 1.5, %v3345
    %v3347 = vmul.f32 %v3342, %v3346
    %vm3348 = vweird.f32 %v3311
    %vm3349 = vweird.f32 %v3342
    %vm3350 = vmor %vm3348, %vm3349
    %v3351 = vsel %vm3350, %v3342, %v3347
    %v3352 = vmul.f32 %v3280, %v3321
    %v3353 = vmul.f32 %v3281, %v3331
    %v3354 = vmul.f32 %v3282, %v3341
    %v3355 = vmul.f32 %v3283, %v3351
    %v3356 = vld [vmem:[%s49] sm:$0xff]
    %v3357 = vld [vmem:[%s49 + $0x8] sm:$0xff]
    %v3358 = vld [vmem:[%s49 + $0x10] sm:$0xff]
    %v3359 = vld [vmem:[%s49 + $0x18] sm:$0xff]
    %3361 = vset.pattern.permute.xlu0 0
    %3362 = vperm.xlu0 %3361, %v3356
    %v3363 = vpop.permute.xlu0 %3362
    %3366 = vset.pattern.permute.xlu0 0
    %3367 = vperm.xlu0 %3366, %v3357
    %v3368 = vpop.permute.xlu0 %3367
    %3371 = vset.pattern.permute.xlu0 0
    %3372 = vperm.xlu0 %3371, %v3358
    %v3373 = vpop.permute.xlu0 %3372
    %3376 = vset.pattern.permute.xlu0 0
    %3377 = vperm.xlu0 %3376, %v3359
    %v3378 = vpop.permute.xlu0 %3377
    %v3380 = vmul.f32 %v3352, %v3363
    %v3381 = vmul.f32 %v3353, %v3368
    %v3382 = vmul.f32 %v3354, %v3373
    %v3383 = vmul.f32 %v3355, %v3378
    %v3384 = vld [vmem:[%s51] sm:$0xff]
    %v3385 = vld [vmem:[%s51 + $0x8] sm:$0xff]
    %v3386 = vld [vmem:[%s51 + $0x10] sm:$0xff]
    %v3387 = vld [vmem:[%s51 + $0x18] sm:$0xff]
    %3389 = vset.pattern.permute.xlu0 0
    %3390 = vperm.xlu0 %3389, %v3384
    %v3391 = vpop.permute.xlu0 %3390
    %3394 = vset.pattern.permute.xlu0 0
    %3395 = vperm.xlu0 %3394, %v3385
    %v3396 = vpop.permute.xlu0 %3395
    %3399 = vset.pattern.permute.xlu0 0
    %3400 = vperm.xlu0 %3399, %v3386
    %v3401 = vpop.permute.xlu0 %3400
    %3404 = vset.pattern.permute.xlu0 0
    %3405 = vperm.xlu0 %3404, %v3387
    %v3406 = vpop.permute.xlu0 %3405
    %v3408 = vadd.f32 %v3380, %v3391
    %v3409 = vadd.f32 %v3381, %v3396
    %v3410 = vadd.f32 %v3382, %v3401
    %v3411 = vadd.f32 %v3383, %v3406
    %3416 = vrot.lane.b32.xlu0 %v3408, 126
    %v3417 = vpop.permute.xlu0 %3416
    %3418 = vrot.lane.b32.xlu0 %v3409, 126
    %v3419 = vpop.permute.xlu0 %3418
    %3420 = vrot.lane.b32.xlu0 %v3410, 126
    %v3421 = vpop.permute.xlu0 %3420
    %3422 = vrot.lane.b32.xlu0 %v3411, 126
    %v3423 = vpop.permute.xlu0 %3422
    %v3428 = vsel %vm262, %v3417, 0.0
    %v3429 = vsel %vm262, %v3419, 0.0
    %v3430 = vsel %vm262, %v3421, 0.0
    %v3431 = vsel %vm262, %v3423, 0.0
    %3432 = vrot.lane.b32.xlu0 %v3408, 118
    %v3433 = vpop.permute.xlu0 %3432
    %3434 = vrot.lane.b32.xlu0 %v3409, 118
    %v3435 = vpop.permute.xlu0 %3434
    %3436 = vrot.lane.b32.xlu0 %v3410, 118
    %v3437 = vpop.permute.xlu0 %3436
    %3438 = vrot.lane.b32.xlu0 %v3411, 118
    %v3439 = vpop.permute.xlu0 %3438
    %v3444 = vsel %vm262, %v3433, 0.0
    %v3445 = vsel %vm262, %v3435, 0.0
    %v3446 = vsel %vm262, %v3437, 0.0
    %v3447 = vsel %vm262, %v3439, 0.0
    %3452 = vrot.lane.b32.xlu0 %v3444, 8
    %v3453 = vpop.permute.xlu0 %3452
    %3454 = vrot.lane.b32.xlu0 %v3445, 8
    %v3455 = vpop.permute.xlu0 %3454
    %3456 = vrot.lane.b32.xlu0 %v3446, 8
    %v3457 = vpop.permute.xlu0 %3456
    %3458 = vrot.lane.b32.xlu0 %v3447, 8
    %v3459 = vpop.permute.xlu0 %3458
    %v3464 = vsel %vm203, %v3428, %v3453
    %v3465 = vsel %vm203, %v3429, %v3455
    %v3466 = vsel %vm203, %v3430, %v3457
    %v3467 = vsel %vm203, %v3431, %v3459
    %3468 = vrot.lane.b32.xlu0 %v3408, 127
    %v3469 = vpop.permute.xlu0 %3468
    %3470 = vrot.lane.b32.xlu0 %v3409, 127
    %v3471 = vpop.permute.xlu0 %3470
    %3472 = vrot.lane.b32.xlu0 %v3410, 127
    %v3473 = vpop.permute.xlu0 %3472
    %3474 = vrot.lane.b32.xlu0 %v3411, 127
    %v3475 = vpop.permute.xlu0 %3474
    %v3480 = vsel %vm245, %v3469, 0.0
    %v3481 = vsel %vm245, %v3471, 0.0
    %v3482 = vsel %vm245, %v3473, 0.0
    %v3483 = vsel %vm245, %v3475, 0.0
    %3484 = vrot.lane.b32.xlu0 %v3408, 119
    %v3485 = vpop.permute.xlu0 %3484
    %3486 = vrot.lane.b32.xlu0 %v3409, 119
    %v3487 = vpop.permute.xlu0 %3486
    %3488 = vrot.lane.b32.xlu0 %v3410, 119
    %v3489 = vpop.permute.xlu0 %3488
    %3490 = vrot.lane.b32.xlu0 %v3411, 119
    %v3491 = vpop.permute.xlu0 %3490
    %v3496 = vsel %vm245, %v3485, 0.0
    %v3497 = vsel %vm245, %v3487, 0.0
    %v3498 = vsel %vm245, %v3489, 0.0
    %v3499 = vsel %vm245, %v3491, 0.0
    %3504 = vrot.lane.b32.xlu0 %v3496, 8
    %v3505 = vpop.permute.xlu0 %3504
    %3506 = vrot.lane.b32.xlu0 %v3497, 8
    %v3507 = vpop.permute.xlu0 %3506
    %3508 = vrot.lane.b32.xlu0 %v3498, 8
    %v3509 = vpop.permute.xlu0 %3508
    %3510 = vrot.lane.b32.xlu0 %v3499, 8
    %v3511 = vpop.permute.xlu0 %3510
    %v3516 = vsel %vm203, %v3480, %v3505
    %v3517 = vsel %vm203, %v3481, %v3507
    %v3518 = vsel %vm203, %v3482, %v3509
    %v3519 = vsel %vm203, %v3483, %v3511
    %3520 = vrot.lane.b32.xlu0 %v3408, 1
    %v3521 = vpop.permute.xlu0 %3520
    %3522 = vrot.lane.b32.xlu0 %v3409, 1
    %v3523 = vpop.permute.xlu0 %3522
    %3524 = vrot.lane.b32.xlu0 %v3410, 1
    %v3525 = vpop.permute.xlu0 %3524
    %3526 = vrot.lane.b32.xlu0 %v3411, 1
    %v3527 = vpop.permute.xlu0 %3526
    %v3532 = vsel %vm228, 0.0, %v3521
    %v3533 = vsel %vm228, 0.0, %v3523
    %v3534 = vsel %vm228, 0.0, %v3525
    %v3535 = vsel %vm228, 0.0, %v3527
    %3536 = vrot.lane.b32.xlu0 %v3408, 121
    %v3537 = vpop.permute.xlu0 %3536
    %3538 = vrot.lane.b32.xlu0 %v3409, 121
    %v3539 = vpop.permute.xlu0 %3538
    %3540 = vrot.lane.b32.xlu0 %v3410, 121
    %v3541 = vpop.permute.xlu0 %3540
    %3542 = vrot.lane.b32.xlu0 %v3411, 121
    %v3543 = vpop.permute.xlu0 %3542
    %v3548 = vsel %vm228, 0.0, %v3537
    %v3549 = vsel %vm228, 0.0, %v3539
    %v3550 = vsel %vm228, 0.0, %v3541
    %v3551 = vsel %vm228, 0.0, %v3543
    %3556 = vrot.lane.b32.xlu0 %v3548, 8
    %v3557 = vpop.permute.xlu0 %3556
    %3558 = vrot.lane.b32.xlu0 %v3549, 8
    %v3559 = vpop.permute.xlu0 %3558
    %3560 = vrot.lane.b32.xlu0 %v3550, 8
    %v3561 = vpop.permute.xlu0 %3560
    %3562 = vrot.lane.b32.xlu0 %v3551, 8
    %v3563 = vpop.permute.xlu0 %3562
    %v3568 = vsel %vm203, %v3532, %v3557
    %v3569 = vsel %vm203, %v3533, %v3559
    %v3570 = vsel %vm203, %v3534, %v3561
    %v3571 = vsel %vm203, %v3535, %v3563
    %3572 = vrot.lane.b32.xlu0 %v3408, 2
    %v3573 = vpop.permute.xlu0 %3572
    %3574 = vrot.lane.b32.xlu0 %v3409, 2
    %v3575 = vpop.permute.xlu0 %3574
    %3576 = vrot.lane.b32.xlu0 %v3410, 2
    %v3577 = vpop.permute.xlu0 %3576
    %3578 = vrot.lane.b32.xlu0 %v3411, 2
    %v3579 = vpop.permute.xlu0 %3578
    %v3584 = vsel %vm211, 0.0, %v3573
    %v3585 = vsel %vm211, 0.0, %v3575
    %v3586 = vsel %vm211, 0.0, %v3577
    %v3587 = vsel %vm211, 0.0, %v3579
    %3588 = vrot.lane.b32.xlu0 %v3408, 122
    %v3589 = vpop.permute.xlu0 %3588
    %3590 = vrot.lane.b32.xlu0 %v3409, 122
    %v3591 = vpop.permute.xlu0 %3590
    %3592 = vrot.lane.b32.xlu0 %v3410, 122
    %v3593 = vpop.permute.xlu0 %3592
    %3594 = vrot.lane.b32.xlu0 %v3411, 122
    %v3595 = vpop.permute.xlu0 %3594
    %v3600 = vsel %vm211, 0.0, %v3589
    %v3601 = vsel %vm211, 0.0, %v3591
    %v3602 = vsel %vm211, 0.0, %v3593
    %v3603 = vsel %vm211, 0.0, %v3595
    %3608 = vrot.lane.b32.xlu0 %v3600, 8
    %v3609 = vpop.permute.xlu0 %3608
    %3610 = vrot.lane.b32.xlu0 %v3601, 8
    %v3611 = vpop.permute.xlu0 %3610
    %3612 = vrot.lane.b32.xlu0 %v3602, 8
    %v3613 = vpop.permute.xlu0 %3612
    %3614 = vrot.lane.b32.xlu0 %v3603, 8
    %v3615 = vpop.permute.xlu0 %3614
    %v3620 = vsel %vm203, %v3584, %v3609
    %v3621 = vsel %vm203, %v3585, %v3611
    %v3622 = vsel %vm203, %v3586, %v3613
    %v3623 = vsel %vm203, %v3587, %v3615
    %v3624 = vld [vmem:[#allocation6] sm:$0xff]
    %v3625 = vld [vmem:[#allocation6 + $0x8] sm:$0xff]
    %v3626 = vld [vmem:[#allocation6 + $0x10] sm:$0xff]
    %v3627 = vld [vmem:[#allocation6 + $0x18] sm:$0xff]
    %v3628 = vld [vmem:[#allocation6 + $0x20] sm:$0xff]
    %v3629 = vld [vmem:[#allocation6 + $0x28] sm:$0xff]
    %v3630 = vld [vmem:[#allocation6 + $0x30] sm:$0xff]
    %v3631 = vld [vmem:[#allocation6 + $0x38] sm:$0xff]
    %v3632 = vld [vmem:[#allocation6 + $0x40] sm:$0xff]
    %v3633 = vld [vmem:[#allocation6 + $0x48] sm:$0xff]
    %v3634 = vld [vmem:[#allocation6 + $0x50] sm:$0xff]
    %v3635 = vld [vmem:[#allocation6 + $0x58] sm:$0xff]
    %v3636 = vld [vmem:[#allocation6 + $0x60] sm:$0xff]
    %v3637 = vld [vmem:[#allocation6 + $0x68] sm:$0xff]
    %v3638 = vld [vmem:[#allocation6 + $0x70] sm:$0xff]
    %v3639 = vld [vmem:[#allocation6 + $0x78] sm:$0xff]
    %v3641 = vsel %vm1481, %v3625, 0
    %v3644 = vsel %vm1481, %v3627, 0
    %v3647 = vsel %vm1481, %v3629, 0
    %v3650 = vsel %vm1481, %v3631, 0
    %v3653 = vsel %vm1481, %v3633, 0
    %v3656 = vsel %vm1481, %v3635, 0
    %v3659 = vsel %vm1481, %v3637, 0
    %v3662 = vsel %vm1481, %v3639, 0
    %3664 = vmatpush.msra.mxu0 %v3571
    %3665 = vmatpush.msra.mxu0 %v3570
    %3666 = vmatpush.msra.mxu0 %v3569
    %3667 = vmatpush.msra.mxu0 %v3568
    %3668 = vmatpush.msra.mxu0 %v3411
    %3669 = vmatpush.msra.mxu0 %v3410
    %3670 = vmatpush.msra.mxu0 %v3409
    %3671 = vmatpush.msra.mxu0 %v3408
    %3672 = vmatpush.msra.mxu0 %v3519
    %3673 = vmatpush.msra.mxu0 %v3518
    %3674 = vmatpush.msra.mxu0 %v3517
    %3675 = vmatpush.msra.mxu0 %v3516
    %3676 = vmatpush.msra.mxu0 %v3467
    %3677 = vmatpush.msra.mxu0 %v3466
    %3678 = vmatpush.msra.mxu0 %v3465
    %3679 = vmatpush.msra.mxu0 %v3464
    %3680 = vmatmul.f32.gmra.mxu0 %v3624
    %v3681 = vpop.f32.mrf.mxu0
    %v3682 = vadd.f32 0.0, %v3681
    %3683 = vmatmul.f32.gmra.mxu0 %v3626
    %v3684 = vpop.f32.mrf.mxu0
    %v3685 = vadd.f32 0.0, %v3684
    %3686 = vmatmul.f32.gmra.mxu0 %v3628
    %v3687 = vpop.f32.mrf.mxu0
    %v3688 = vadd.f32 0.0, %v3687
    %3689 = vmatmul.f32.gmra.mxu0 %v3630
    %v3690 = vpop.f32.mrf.mxu0
    %v3691 = vadd.f32 0.0, %v3690
    %3692 = vmatmul.f32.gmra.mxu0 %v3632
    %v3693 = vpop.f32.mrf.mxu0
    %v3694 = vadd.f32 0.0, %v3693
    %3695 = vmatmul.f32.gmra.mxu0 %v3634
    %v3696 = vpop.f32.mrf.mxu0
    %v3697 = vadd.f32 0.0, %v3696
    %3698 = vmatmul.f32.gmra.mxu0 %v3636
    %v3699 = vpop.f32.mrf.mxu0
    %v3700 = vadd.f32 0.0, %v3699
    %3701 = vmatmul.f32.gmra.mxu0 %v3638
    %v3702 = vpop.f32.mrf.mxu0
    %v3703 = vadd.f32 0.0, %v3702
    %3704 = vdwg.mxu0
    %3705 = vmatpush.msra.mxu0 0.0
    %3706 = vmatpush.msra.mxu0 0.0
    %3707 = vmatpush.msra.mxu0 0.0
    %3708 = vmatpush.msra.mxu0 0.0
    %3709 = vmatpush.msra.mxu0 0.0
    %3710 = vmatpush.msra.mxu0 0.0
    %3711 = vmatpush.msra.mxu0 0.0
    %3712 = vmatpush.msra.mxu0 0.0
    %3713 = vmatpush.msra.mxu0 0.0
    %3714 = vmatpush.msra.mxu0 0.0
    %3715 = vmatpush.msra.mxu0 0.0
    %3716 = vmatpush.msra.mxu0 0.0
    %3717 = vmatpush.msra.mxu0 %v3623
    %3718 = vmatpush.msra.mxu0 %v3622
    %3719 = vmatpush.msra.mxu0 %v3621
    %3720 = vmatpush.msra.mxu0 %v3620
    %3721 = vmatmul.f32.gmra.mxu0 %v3641
    %v3722 = vpop.f32.mrf.mxu0
    %v3723 = vadd.f32 %v3682, %v3722
    %3724 = vmatmul.f32.gmra.mxu0 %v3644
    %v3725 = vpop.f32.mrf.mxu0
    %v3726 = vadd.f32 %v3685, %v3725
    %3727 = vmatmul.f32.gmra.mxu0 %v3647
    %v3728 = vpop.f32.mrf.mxu0
    %v3729 = vadd.f32 %v3688, %v3728
    %3730 = vmatmul.f32.gmra.mxu0 %v3650
    %v3731 = vpop.f32.mrf.mxu0
    %v3732 = vadd.f32 %v3691, %v3731
    %3733 = vmatmul.f32.gmra.mxu0 %v3653
    %v3734 = vpop.f32.mrf.mxu0
    %v3735 = vadd.f32 %v3694, %v3734
    %3736 = vmatmul.f32.gmra.mxu0 %v3656
    %v3737 = vpop.f32.mrf.mxu0
    %v3738 = vadd.f32 %v3697, %v3737
    %3739 = vmatmul.f32.gmra.mxu0 %v3659
    %v3740 = vpop.f32.mrf.mxu0
    %v3741 = vadd.f32 %v3700, %v3740
    %3742 = vmatmul.f32.gmra.mxu0 %v3662
    %v3743 = vpop.f32.mrf.mxu0
    %v3744 = vadd.f32 %v3703, %v3743
    %3745 = vdwg.mxu0
    %v3746 = vld [vmem:[%s55] sm:$0xff]
    %v3747 = vld [vmem:[%s55 + $0x8] sm:$0xff]
    %v3748 = vld [vmem:[%s55 + $0x10] sm:$0xff]
    %v3749 = vld [vmem:[%s55 + $0x18] sm:$0xff]
    %3751 = vset.pattern.permute.xlu0 0
    %3752 = vperm.xlu0 %3751, %v3746
    %v3753 = vpop.permute.xlu0 %3752
    %3756 = vset.pattern.permute.xlu0 0
    %3757 = vperm.xlu0 %3756, %v3747
    %v3758 = vpop.permute.xlu0 %3757
    %3761 = vset.pattern.permute.xlu0 0
    %3762 = vperm.xlu0 %3761, %v3748
    %v3763 = vpop.permute.xlu0 %3762
    %3766 = vset.pattern.permute.xlu0 0
    %3767 = vperm.xlu0 %3766, %v3749
    %v3768 = vpop.permute.xlu0 %3767
    %v3770 = vadd.f32 %v3723, %v3753
    %v3771 = vadd.f32 %v3726, %v3758
    %v3772 = vadd.f32 %v3729, %v3763
    %v3773 = vadd.f32 %v3732, %v3768
    %v3774 = vmax.f32 %v3770, 0.0
    %v3775 = vmax.f32 %v3771, 0.0
    %v3776 = vmax.f32 %v3772, 0.0
    %v3777 = vmax.f32 %v3773, 0.0
    %v3778 = vadd.f32 %v3735, %v3753
    %v3779 = vadd.f32 %v3738, %v3758
    %v3780 = vadd.f32 %v3741, %v3763
    %v3781 = vadd.f32 %v3744, %v3768
    %v3782 = vmax.f32 %v3778, 0.0
    %v3783 = vmax.f32 %v3779, 0.0
    %v3784 = vmax.f32 %v3780, 0.0
    %v3785 = vmax.f32 %v3781, 0.0
    %v3786 = vsel %vm427, %v3774, 0.0
    %3787 = vadd.xlane.f32.xlu0 %v3786
    %v3788 = vpop.xlane.xlu0 %3787
    %v3789 = vsel %vm427, %v3775, 0.0
    %3790 = vadd.xlane.f32.xlu0 %v3789
    %v3791 = vpop.xlane.xlu0 %3790
    %v3792 = vsel %vm427, %v3776, 0.0
    %3793 = vadd.xlane.f32.xlu0 %v3792
    %v3794 = vpop.xlane.xlu0 %3793
    %v3795 = vsel %vm427, %v3777, 0.0
    %3796 = vadd.xlane.f32.xlu0 %v3795
    %v3797 = vpop.xlane.xlu0 %3796
    %v3798 = vadd.f32 %v3788, 0.0
    %v3799 = vadd.f32 %v3791, 0.0
    %v3800 = vadd.f32 %v3794, 0.0
    %v3801 = vadd.f32 %v3797, 0.0
    %v3802 = vsel %vm427, %v3782, 0.0
    %3803 = vadd.xlane.f32.xlu0 %v3802
    %v3804 = vpop.xlane.xlu0 %3803
    %v3805 = vsel %vm427, %v3783, 0.0
    %3806 = vadd.xlane.f32.xlu0 %v3805
    %v3807 = vpop.xlane.xlu0 %3806
    %v3808 = vsel %vm427, %v3784, 0.0
    %3809 = vadd.xlane.f32.xlu0 %v3808
    %v3810 = vpop.xlane.xlu0 %3809
    %v3811 = vsel %vm427, %v3785, 0.0
    %3812 = vadd.xlane.f32.xlu0 %v3811
    %v3813 = vpop.xlane.xlu0 %3812
    %v3814 = vadd.f32 %v3798, %v3804
    %v3815 = vadd.f32 %v3799, %v3807
    %v3816 = vadd.f32 %v3800, %v3810
    %v3817 = vadd.f32 %v3801, %v3813
    %v3818 = vmul.f32 %v3814, 0.03125
    %v3819 = vmul.f32 %v3815, 0.03125
    %v3820 = vmul.f32 %v3816, 0.03125
    %v3821 = vmul.f32 %v3817, 0.03125
    %v3822 = vsub.f32 %v3774, %v3818
    %v3823 = vsub.f32 %v3775, %v3819
    %v3824 = vsub.f32 %v3776, %v3820
    %v3825 = vsub.f32 %v3777, %v3821
    %v3826 = vmul.f32 %v3822, %v3822
    %v3827 = vmul.f32 %v3823, %v3823
    %v3828 = vmul.f32 %v3824, %v3824
    %v3829 = vmul.f32 %v3825, %v3825
    %v3830 = vsel %vm427, %v3826, 0.0
    %3831 = vadd.xlane.f32.xlu0 %v3830
    %v3832 = vpop.xlane.xlu0 %3831
    %v3833 = vsel %vm427, %v3827, 0.0
    %3834 = vadd.xlane.f32.xlu0 %v3833
    %v3835 = vpop.xlane.xlu0 %3834
    %v3836 = vsel %vm427, %v3828, 0.0
    %3837 = vadd.xlane.f32.xlu0 %v3836
    %v3838 = vpop.xlane.xlu0 %3837
    %v3839 = vsel %vm427, %v3829, 0.0
    %3840 = vadd.xlane.f32.xlu0 %v3839
    %v3841 = vpop.xlane.xlu0 %3840
    %v3842 = vadd.f32 %v3832, 0.0
    %v3843 = vadd.f32 %v3835, 0.0
    %v3844 = vadd.f32 %v3838, 0.0
    %v3845 = vadd.f32 %v3841, 0.0
    %v3846 = vsub.f32 %v3782, %v3818
    %v3847 = vsub.f32 %v3783, %v3819
    %v3848 = vsub.f32 %v3784, %v3820
    %v3849 = vsub.f32 %v3785, %v3821
    %v3850 = vmul.f32 %v3846, %v3846
    %v3851 = vmul.f32 %v3847, %v3847
    %v3852 = vmul.f32 %v3848, %v3848
    %v3853 = vmul.f32 %v3849, %v3849
    %v3854 = vsel %vm427, %v3850, 0.0
    %3855 = vadd.xlane.f32.xlu0 %v3854
    %v3856 = vpop.xlane.xlu0 %3855
    %v3857 = vsel %vm427, %v3851, 0.0
    %3858 = vadd.xlane.f32.xlu0 %v3857
    %v3859 = vpop.xlane.xlu0 %3858
    %v3860 = vsel %vm427, %v3852, 0.0
    %3861 = vadd.xlane.f32.xlu0 %v3860
    %v3862 = vpop.xlane.xlu0 %3861
    %v3863 = vsel %vm427, %v3853, 0.0
    %3864 = vadd.xlane.f32.xlu0 %v3863
    %v3865 = vpop.xlane.xlu0 %3864
    %v3866 = vadd.f32 %v3842, %v3856
    %v3867 = vadd.f32 %v3843, %v3859
    %v3868 = vadd.f32 %v3844, %v3862
    %v3869 = vadd.f32 %v3845, %v3865
    %v3870 = vmul.f32 %v3866, 0.03125
    %v3871 = vmul.f32 %v3867, 0.03125
    %v3872 = vmul.f32 %v3868, 0.03125
    %v3873 = vmul.f32 %v3869, 0.03125
    %v3874 = vadd.f32 %v3870, 1e-05
    %v3875 = vadd.f32 %v3871, 1e-05
    %v3876 = vadd.f32 %v3872, 1e-05
    %v3877 = vadd.f32 %v3873, 1e-05
    %v3878 = vrsqrt.pop %v3874
    %v3879 = vmul.f32 %v3878, %v3874
    %v3880 = vmul.f32 %v3879, %v3878
    %v3881 = vmul.f32 0.5, %v3880
    %v3882 = vsub.f32 1.5, %v3881
    %v3883 = vmul.f32 %v3878, %v3882
    %vm3884 = vweird.f32 %v3874
    %vm3885 = vweird.f32 %v3878
    %vm3886 = vmor %vm3884, %vm3885
    %v3887 = vsel %vm3886, %v3878, %v3883
    %v3888 = vrsqrt.pop %v3875
    %v3889 = vmul.f32 %v3888, %v3875
    %v3890 = vmul.f32 %v3889, %v3888
    %v3891 = vmul.f32 0.5, %v3890
    %v3892 = vsub.f32 1.5, %v3891
    %v3893 = vmul.f32 %v3888, %v3892
    %vm3894 = vweird.f32 %v3875
    %vm3895 = vweird.f32 %v3888
    %vm3896 = vmor %vm3894, %vm3895
    %v3897 = vsel %vm3896, %v3888, %v3893
    %v3898 = vrsqrt.pop %v3876
    %v3899 = vmul.f32 %v3898, %v3876
    %v3900 = vmul.f32 %v3899, %v3898
    %v3901 = vmul.f32 0.5, %v3900
    %v3902 = vsub.f32 1.5, %v3901
    %v3903 = vmul.f32 %v3898, %v3902
    %vm3904 = vweird.f32 %v3876
    %vm3905 = vweird.f32 %v3898
    %vm3906 = vmor %vm3904, %vm3905
    %v3907 = vsel %vm3906, %v3898, %v3903
    %v3908 = vrsqrt.pop %v3877
    %v3909 = vmul.f32 %v3908, %v3877
    %v3910 = vmul.f32 %v3909, %v3908
    %v3911 = vmul.f32 0.5, %v3910
    %v3912 = vsub.f32 1.5, %v3911
    %v3913 = vmul.f32 %v3908, %v3912
    %vm3914 = vweird.f32 %v3877
    %vm3915 = vweird.f32 %v3908
    %vm3916 = vmor %vm3914, %vm3915
    %v3917 = vsel %vm3916, %v3908, %v3913
    %v3918 = vmul.f32 %v3822, %v3887
    %v3919 = vmul.f32 %v3823, %v3897
    %v3920 = vmul.f32 %v3824, %v3907
    %v3921 = vmul.f32 %v3825, %v3917
    %v3922 = vld [vmem:[%s57] sm:$0xff]
    %v3923 = vld [vmem:[%s57 + $0x8] sm:$0xff]
    %v3924 = vld [vmem:[%s57 + $0x10] sm:$0xff]
    %v3925 = vld [vmem:[%s57 + $0x18] sm:$0xff]
    %3927 = vset.pattern.permute.xlu0 0
    %3928 = vperm.xlu0 %3927, %v3922
    %v3929 = vpop.permute.xlu0 %3928
    %3932 = vset.pattern.permute.xlu0 0
    %3933 = vperm.xlu0 %3932, %v3923
    %v3934 = vpop.permute.xlu0 %3933
    %3937 = vset.pattern.permute.xlu0 0
    %3938 = vperm.xlu0 %3937, %v3924
    %v3939 = vpop.permute.xlu0 %3938
    %3942 = vset.pattern.permute.xlu0 0
    %3943 = vperm.xlu0 %3942, %v3925
    %v3944 = vpop.permute.xlu0 %3943
    %v3946 = vmul.f32 %v3918, %v3929
    %v3947 = vmul.f32 %v3919, %v3934
    %v3948 = vmul.f32 %v3920, %v3939
    %v3949 = vmul.f32 %v3921, %v3944
    %v3950 = vld [vmem:[%s59] sm:$0xff]
    %v3951 = vld [vmem:[%s59 + $0x8] sm:$0xff]
    %v3952 = vld [vmem:[%s59 + $0x10] sm:$0xff]
    %v3953 = vld [vmem:[%s59 + $0x18] sm:$0xff]
    %3955 = vset.pattern.permute.xlu0 0
    %3956 = vperm.xlu0 %3955, %v3950
    %v3957 = vpop.permute.xlu0 %3956
    %3960 = vset.pattern.permute.xlu0 0
    %3961 = vperm.xlu0 %3960, %v3951
    %v3962 = vpop.permute.xlu0 %3961
    %3965 = vset.pattern.permute.xlu0 0
    %3966 = vperm.xlu0 %3965, %v3952
    %v3967 = vpop.permute.xlu0 %3966
    %3970 = vset.pattern.permute.xlu0 0
    %3971 = vperm.xlu0 %3970, %v3953
    %v3972 = vpop.permute.xlu0 %3971
    %v3974 = vadd.f32 %v3946, %v3957
    %v3975 = vadd.f32 %v3947, %v3962
    %v3976 = vadd.f32 %v3948, %v3967
    %v3977 = vadd.f32 %v3949, %v3972
    %v3978 = vmul.f32 %v3846, %v3887
    %v3979 = vmul.f32 %v3847, %v3897
    %v3980 = vmul.f32 %v3848, %v3907
    %v3981 = vmul.f32 %v3849, %v3917
    %v3982 = vmul.f32 %v3978, %v3929
    %v3983 = vmul.f32 %v3979, %v3934
    %v3984 = vmul.f32 %v3980, %v3939
    %v3985 = vmul.f32 %v3981, %v3944
    %v3986 = vadd.f32 %v3982, %v3957
    %v3987 = vadd.f32 %v3983, %v3962
    %v3988 = vadd.f32 %v3984, %v3967
    %v3989 = vadd.f32 %v3985, %v3972
    %3994 = vrot.lane.b32.xlu0 %v3974, 127
    %v3995 = vpop.permute.xlu0 %3994
    %3996 = vrot.lane.b32.xlu0 %v3975, 127
    %v3997 = vpop.permute.xlu0 %3996
    %3998 = vrot.lane.b32.xlu0 %v3976, 127
    %v3999 = vpop.permute.xlu0 %3998
    %4000 = vrot.lane.b32.xlu0 %v3977, 127
    %v4001 = vpop.permute.xlu0 %4000
    %v4006 = vsel %vm245, %v3995, 0.0
    %v4007 = vsel %vm245, %v3997, 0.0
    %v4008 = vsel %vm245, %v3999, 0.0
    %v4009 = vsel %vm245, %v4001, 0.0
    %4010 = vrot.lane.b32.xlu0 %v3974, 119
    %v4011 = vpop.permute.xlu0 %4010
    %4012 = vrot.lane.b32.xlu0 %v3975, 119
    %v4013 = vpop.permute.xlu0 %4012
    %4014 = vrot.lane.b32.xlu0 %v3976, 119
    %v4015 = vpop.permute.xlu0 %4014
    %4016 = vrot.lane.b32.xlu0 %v3977, 119
    %v4017 = vpop.permute.xlu0 %4016
    %v4022 = vsel %vm245, %v4011, 0.0
    %v4023 = vsel %vm245, %v4013, 0.0
    %v4024 = vsel %vm245, %v4015, 0.0
    %v4025 = vsel %vm245, %v4017, 0.0
    %4030 = vrot.lane.b32.xlu0 %v4022, 8
    %v4031 = vpop.permute.xlu0 %4030
    %4032 = vrot.lane.b32.xlu0 %v4023, 8
    %v4033 = vpop.permute.xlu0 %4032
    %4034 = vrot.lane.b32.xlu0 %v4024, 8
    %v4035 = vpop.permute.xlu0 %4034
    %4036 = vrot.lane.b32.xlu0 %v4025, 8
    %v4037 = vpop.permute.xlu0 %4036
    %v4042 = vsel %vm203, %v4006, %v4031
    %v4043 = vsel %vm203, %v4007, %v4033
    %v4044 = vsel %vm203, %v4008, %v4035
    %v4045 = vsel %vm203, %v4009, %v4037
    %4050 = vrot.lane.b32.xlu0 %v3986, 1
    %v4051 = vpop.permute.xlu0 %4050
    %4052 = vrot.lane.b32.xlu0 %v3987, 1
    %v4053 = vpop.permute.xlu0 %4052
    %4054 = vrot.lane.b32.xlu0 %v3988, 1
    %v4055 = vpop.permute.xlu0 %4054
    %4056 = vrot.lane.b32.xlu0 %v3989, 1
    %v4057 = vpop.permute.xlu0 %4056
    %v4062 = vsel %vm228, 0.0, %v4051
    %v4063 = vsel %vm228, 0.0, %v4053
    %v4064 = vsel %vm228, 0.0, %v4055
    %v4065 = vsel %vm228, 0.0, %v4057
    %4066 = vrot.lane.b32.xlu0 %v3986, 121
    %v4067 = vpop.permute.xlu0 %4066
    %4068 = vrot.lane.b32.xlu0 %v3987, 121
    %v4069 = vpop.permute.xlu0 %4068
    %4070 = vrot.lane.b32.xlu0 %v3988, 121
    %v4071 = vpop.permute.xlu0 %4070
    %4072 = vrot.lane.b32.xlu0 %v3989, 121
    %v4073 = vpop.permute.xlu0 %4072
    %v4078 = vsel %vm228, 0.0, %v4067
    %v4079 = vsel %vm228, 0.0, %v4069
    %v4080 = vsel %vm228, 0.0, %v4071
    %v4081 = vsel %vm228, 0.0, %v4073
    %4086 = vrot.lane.b32.xlu0 %v4078, 8
    %v4087 = vpop.permute.xlu0 %4086
    %4088 = vrot.lane.b32.xlu0 %v4079, 8
    %v4089 = vpop.permute.xlu0 %4088
    %4090 = vrot.lane.b32.xlu0 %v4080, 8
    %v4091 = vpop.permute.xlu0 %4090
    %4092 = vrot.lane.b32.xlu0 %v4081, 8
    %v4093 = vpop.permute.xlu0 %4092
    %v4098 = vsel %vm203, %v4062, %v4087
    %v4099 = vsel %vm203, %v4063, %v4089
    %v4100 = vsel %vm203, %v4064, %v4091
    %v4101 = vsel %vm203, %v4065, %v4093
    %v4102 = vld [vmem:[%s61] sm:$0xff]
    %v4103 = vld [vmem:[%s61 + $0x8] sm:$0xff]
    %4104 = vmatpush.msra.mxu0 %v3989
    %4105 = vmatpush.msra.mxu0 %v3988
    %4106 = vmatpush.msra.mxu0 %v3987
    %4107 = vmatpush.msra.mxu0 %v3986
    %4108 = vmatpush.msra.mxu0 %v4101
    %4109 = vmatpush.msra.mxu0 %v4100
    %4110 = vmatpush.msra.mxu0 %v4099
    %4111 = vmatpush.msra.mxu0 %v4098
    %4112 = vmatpush.msra.mxu0 %v4045
    %4113 = vmatpush.msra.mxu0 %v4044
    %4114 = vmatpush.msra.mxu0 %v4043
    %4115 = vmatpush.msra.mxu0 %v4042
    %4116 = vmatpush.msra.mxu0 %v3977
    %4117 = vmatpush.msra.mxu0 %v3976
    %4118 = vmatpush.msra.mxu0 %v3975
    %4119 = vmatpush.msra.mxu0 %v3974
    %4120 = vmatmul.f32.gmra.mxu0 %v4102
    %v4121 = vpop.f32.mrf.mxu0
    %v4122 = vadd.f32 0.0, %v4121
    %4123 = vmatmul.f32.gmra.mxu0 %v4103
    %v4124 = vpop.f32.mrf.mxu0
    %v4125 = vadd.f32 0.0, %v4124
    %4126 = vdwg.mxu0
    %v4127 = vld [vmem:[%s63] sm:$0xff]
    %4129 = vset.pattern.permute.xlu0 0
    %4130 = vperm.xlu0 %4129, %v4127
    %v4131 = vpop.permute.xlu0 %4130
    %v4133 = vadd.f32 %v4122, %v4131
    %v4134 = vadd.f32 %v4125, %v4131
    %4135 = vst.msk [vmem:[%s65] sm:$0xff] %vm427, %v4133
    %4136 = vst.msk [vmem:[%s67] sm:$0xff] %vm427, %v4134
    // Predicated region
    $region142: #{net_forward.1} parent=1 // pred_check
      _
    $region143: #{net_forward.1} parent=1 // pred_check_branch
      %4138 = sbr.rel (0) target = $region145
    $region144: #{net_forward.1} parent=1 // pred_region
      _
    $region145: #{net_forward.1} parent=1 // pred_fallthru
      _
    // Predicated region
    $region146: #{net_forward.1} parent=1 // pred_check
      _
    $region147: #{net_forward.1} parent=1 // pred_check_branch
      %4140 = sbr.rel (0) target = $region149
    $region148: #{net_forward.1} parent=1 // pred_region
      _
    $region149: #{net_forward.1} parent=1 // pred_fallthru
      _
    // Predicated region
    $region150: #{net_forward.1} parent=1 // pred_check
      _
    $region151: #{net_forward.1} parent=1 // pred_check_branch
      %4142 = sbr.rel (0) target = $region153
    $region152: #{net_forward.1} parent=1 // pred_region
      _
    $region153: #{net_forward.1} parent=1 // pred_fallthru
      _
    // Predicated region
    $region154: #{net_forward.1} parent=1 // pred_check
      _
    $region155: #{net_forward.1} parent=1 // pred_check_branch
      %4144 = sbr.rel (0) target = $region157
    $region156: #{net_forward.1} parent=1 // pred_region
      _
    $region157: #{net_forward.1} parent=1 // pred_fallthru
      _
    %4145 = vsyncpa [#allocation3], 1
    %4146 = vsyncpa [#allocation5], 1

</llo_original>
